<compile_context>
chip_gen: v6e
topology: v6e:2x2x1
jax: 0.10.0
libtpu: 0.0.40
codegen_flags: <defaults>
</compile_context>

<pallas_src>
import jax
import jax.numpy as jnp
from jax import lax
from jax.experimental import pallas as pl
from jax.experimental.pallas import tpu as pltpu

SELU_ALPHA = 1.6732632423543772
SELU_SCALE = 1.0507009873554805


def _selu(x):
    return SELU_SCALE * jnp.where(x > 0, x, SELU_ALPHA * (jnp.exp(x) - 1.0))


def make_graph_gather_kernel(n_layers, out_features, tb, n_nodes, big_positive):
    """Kernel processing `tb` graphs (tb * n_nodes node rows) per grid step."""

    def kernel(hid_ref, inp_ref, mask_ref, w0h_ref, w0i_ref, b0_ref, *rest):
        out_ref = rest[-1]
        layer_refs = [(rest[2 * i], rest[2 * i + 1]) for i in range(n_layers - 1)]

        # ---- fused (block-diagonal) attention + embedding MLPs ----
        # First layer: att consumes cat([hidden, input]); done as two partial
        # matmuls into one accumulator, so no concat is ever materialized.
        x = jnp.dot(hid_ref[...], w0h_ref[...], preferred_element_type=jnp.float32)
        x = x + jnp.dot(inp_ref[...], w0i_ref[...], preferred_element_type=jnp.float32)
        x = _selu(x + b0_ref[...])
        for w_ref, b_ref in layer_refs:
            x = jnp.dot(x, w_ref[...], preferred_element_type=jnp.float32) + b_ref[...]
            x = _selu(x)                     # SELU after every linear (MLP module)

        O = out_features
        energies = x[:, :O].reshape(tb, n_nodes, O)          # attention-MLP half
        embedding = x[:, O:2 * O].reshape(tb, n_nodes, O)    # embedding-MLP half

        # ---- masked softmax over nodes + attention-weighted sum ----
        penalty = (mask_ref[...] == 0.0).astype(jnp.float32) * big_positive  # (tb,N,1)
        energies = energies - penalty
        m = jnp.max(energies, axis=1, keepdims=True)
        p = jnp.exp(energies - m)

        num = jnp.sum(p * embedding, axis=1)                 # (tb, O)
        den = jnp.sum(p, axis=1)                             # (tb, O)
        # softmax normalization deferred to the reduced result (N x smaller),
        # reciprocal on the EUP slot.
        out_ref[...] = num * pl.reciprocal(den, approx=True)

    return kernel


def _pick_graphs_per_block(batch, n_nodes, target_rows=256):
    """Pick TB so that TB*N >= ~256 rows (fills MXU sublanes) and TB | batch."""
    tb = min(batch, max(1, target_rows // max(n_nodes, 1)))
    while batch % tb != 0:
        tb -= 1
    return tb


def graph_gather(hidden_nodes, input_nodes, node_mask, att_params, emb_params,
                 big_positive, graphs_per_block=None):
    B, N, H = hidden_nodes.shape
    F = input_nodes.shape[2]
    O = att_params[-1][0].shape[1]
    assert emb_params[-1][0].shape[1] == O
    # Block-diagonal fusion requires matching layer counts (true whenever
    # att_depth == emb_depth, as in the standard GraphGather configs).
    assert len(att_params) == len(emb_params)
    n_layers = len(att_params)

    tb = graphs_per_block or _pick_graphs_per_block(B, N)
    rows = tb * N
    f32 = jnp.float32

    # ---- fuse the two MLPs into block-diagonal weights (wrapper-side, cheap) ----
    (w_a0, b_a0), (w_e0, b_e0) = att_params[0], emb_params[0]
    # torch.cat((hidden, input), dim=2)  =>  att W0 rows [0:H] hit hidden part.
    w0_hid = jnp.concatenate([w_a0[:H, :], w_e0], axis=1).astype(f32)     # (H, a0+e0)
    w0_inp = jnp.concatenate(
        [w_a0[H:, :], jnp.zeros((F, w_e0.shape[1]), f32)], axis=1)        # (F, a0+e0)
    b0 = jnp.concatenate([b_a0, b_e0]).reshape(1, -1).astype(f32)

    fused_rest = []
    for (wa, ba), (we, be) in zip(att_params[1:], emb_params[1:]):
        ai, ao = wa.shape
        ei, eo = we.shape
        w = jnp.zeros((ai + ei, ao + eo), f32)
        w = w.at[:ai, :ao].set(wa).at[ai:, ao:].set(we)
        b = jnp.concatenate([ba, be]).reshape(1, -1).astype(f32)
        fused_rest += [w, b]

    # ---- data inputs: node dims flattened so the kernel works on 2-D tiles ----
    hid2 = hidden_nodes.reshape(B * N, H).astype(f32)
    inp2 = input_nodes.reshape(B * N, F).astype(f32)
    mask3 = node_mask.reshape(B, N, 1).astype(f32)

    data_specs = [
        pl.BlockSpec((rows, H), lambda g: (g, 0)),
        pl.BlockSpec((rows, F), lambda g: (g, 0)),
        pl.BlockSpec((tb, N, 1), lambda g: (g, 0, 0)),
    ]
    param_inputs = [w0_hid, w0_inp, b0, *fused_rest]
    param_specs = [pl.BlockSpec(p.shape, lambda g: (0, 0)) for p in param_inputs]

    kernel = make_graph_gather_kernel(n_layers, O, tb, N, big_positive)

    out = pl.pallas_call(
        kernel,
        out_shape=jax.ShapeDtypeStruct((B, O), f32),
        grid=(B // tb,),
        in_specs=data_specs + param_specs,
        out_specs=pl.BlockSpec((tb, O), lambda g: (g, 0)),
        compiler_params=pltpu.CompilerParams(
            dimension_semantics=("parallel",),   # batch axis is independent
        ),
    )(hid2, inp2, mask3, *param_inputs)
    return out


def graph_gather_ref(hidden_nodes, input_nodes, node_mask, att_params, emb_params,
                     big_positive):
    """Pure-JAX reference mirroring the PyTorch forward."""
    def mlp(x, params):
        for w, b in params:
            x = jnp.dot(x, w, precision=lax.Precision.HIGHEST) + b
            x = _selu(x)
        return x

    cat = jnp.concatenate((hidden_nodes, input_nodes), axis=2)
    energy_mask = (node_mask == 0).astype(jnp.float32) * big_positive
    energies = mlp(cat, att_params) - energy_mask[..., None]
    attention = jax.nn.softmax(energies, axis=1)
    embedding = mlp(hidden_nodes, emb_params)
    return jnp.sum(attention * embedding, axis=1)


def _xavier_uniform(key, fan_in, fan_out):
    limit = (6.0 / (fan_in + fan_out)) ** 0.5
    return jax.random.uniform(key, (fan_in, fan_out), jnp.float32, -limit, limit)


def make_mlp_params(key, in_features, hidden_sizes, out_features):
    """Weights stored as (in, out) so the kernel computes x @ W + b."""
    fs = [in_features, *hidden_sizes, out_features]
    params = []
    for fin, fout in zip(fs, fs[1:]):
        key, kw, kb = jax.random.split(key, 3)
        w = _xavier_uniform(kw, fin, fout)
        bound = 1.0 / (fin ** 0.5)
        b = jax.random.uniform(kb, (fout,), jnp.float32, -bound, bound)
        params.append((w, b))
    return key, params


if __name__ == "__main__":
    # Module hyperparameters (consistent with GraphGather.__init__)
    node_features = 8
    hidden_node_features = 16
    out_features = 32
    att_depth, att_hidden_dim = 2, 32
    emb_depth, emb_hidden_dim = 2, 32
    big_positive = 1.0e6
    B, N = 64, 8   # 64 graphs, 8 nodes each -> TB=32 graphs (256 rows) per step

    key = jax.random.PRNGKey(0)
    key, k1, k2, k3 = jax.random.split(key, 4)
    hidden_nodes = jax.random.normal(k1, (B, N, hidden_node_features), jnp.float32)
    input_nodes = jax.random.normal(k2, (B, N, node_features), jnp.float32)
    lengths = jax.random.randint(k3, (B,), 1, N + 1)
    node_mask = (jnp.arange(N)[None, :] < lengths[:, None]).astype(jnp.float32)

    key, att_params = make_mlp_params(
        key, node_features + hidden_node_features,
        [att_hidden_dim] * att_depth, out_features)
    key, emb_params = make_mlp_params(
        key, hidden_node_features,
        [emb_hidden_dim] * emb_depth, out_features)

    out = graph_gather(hidden_nodes, input_nodes, node_mask,
                       att_params, emb_params, big_positive)
    out = jax.block_until_ready(out)

    ref = graph_gather_ref(hidden_nodes, input_nodes, node_mask,
                           att_params, emb_params, big_positive)
    assert out.shape == (B, out_features)
    assert jnp.allclose(out, ref, atol=2e-3, rtol=2e-3), \
        float(jnp.max(jnp.abs(out - ref)))
    print("KERNEL_OK")
</pallas_src>

<mosaic_0001>
module attributes {stable_mosaic.version = 11 : i64} {
  func.func @kernel(%arg0: i32, %arg1: memref<256x16xf32, #tpu.memory_space<vmem>>, %arg2: memref<256x8xf32, #tpu.memory_space<vmem>>, %arg3: memref<32x8x1xf32, #tpu.memory_space<vmem>>, %arg4: memref<16x64xf32, #tpu.memory_space<vmem>>, %arg5: memref<8x64xf32, #tpu.memory_space<vmem>>, %arg6: memref<1x64xf32, #tpu.memory_space<vmem>>, %arg7: memref<64x64xf32, #tpu.memory_space<vmem>>, %arg8: memref<1x64xf32, #tpu.memory_space<vmem>>, %arg9: memref<64x64xf32, #tpu.memory_space<vmem>>, %arg10: memref<1x64xf32, #tpu.memory_space<vmem>>, %arg11: memref<32x32xf32, #tpu.memory_space<vmem>>) attributes {dimension_semantics = [#tpu.dimension_semantics<parallel>], iteration_bounds = array<i64: 2>, scalar_prefetch = 0 : i64, scratch_operands = 0 : i64, tpu.core_type = #tpu.core_type<tc>, window_params = [{transform_indices = @transform_0, window_bounds = array<i64: 256, 16>}, {transform_indices = @transform_1, window_bounds = array<i64: 256, 8>}, {transform_indices = @transform_2, window_bounds = array<i64: 32, 8, 1>}, {pipeline_mode = #tpu.pipeline_mode<synchronous>, transform_indices = @transform_3, window_bounds = array<i64: 16, 64>}, {pipeline_mode = #tpu.pipeline_mode<synchronous>, transform_indices = @transform_4, window_bounds = array<i64: 8, 64>}, {pipeline_mode = #tpu.pipeline_mode<synchronous>, transform_indices = @transform_5, window_bounds = array<i64: 1, 64>}, {pipeline_mode = #tpu.pipeline_mode<synchronous>, transform_indices = @transform_6, window_bounds = array<i64: 64, 64>}, {pipeline_mode = #tpu.pipeline_mode<synchronous>, transform_indices = @transform_7, window_bounds = array<i64: 1, 64>}, {pipeline_mode = #tpu.pipeline_mode<synchronous>, transform_indices = @transform_8, window_bounds = array<i64: 64, 64>}, {pipeline_mode = #tpu.pipeline_mode<synchronous>, transform_indices = @transform_9, window_bounds = array<i64: 1, 64>}, {transform_indices = @transform_10, window_bounds = array<i64: 32, 32>}]} {
    %c0 = arith.constant 0 : index
    %c0_0 = arith.constant 0 : index
    %0 = vector.load %arg1[%c0, %c0_0] : memref<256x16xf32, #tpu.memory_space<vmem>>, vector<256x16xf32>
    %c0_1 = arith.constant 0 : index
    %c0_2 = arith.constant 0 : index
    %1 = vector.load %arg4[%c0_1, %c0_2] : memref<16x64xf32, #tpu.memory_space<vmem>>, vector<16x64xf32>
    %cst = arith.constant dense<0.000000e+00> : vector<256x64xf32>
    %2 = tpu.matmul %0, %1, %cst {dimension_numbers = #tpu.dot_dimension_numbers<[1], [0], [0], [1], [0, 0, 1, 1], [], []>} : vector<256x16xf32>, vector<16x64xf32>, vector<256x64xf32> -> vector<256x64xf32>
    %c0_3 = arith.constant 0 : index
    %c0_4 = arith.constant 0 : index
    %3 = vector.load %arg2[%c0_3, %c0_4] : memref<256x8xf32, #tpu.memory_space<vmem>>, vector<256x8xf32>
    %c0_5 = arith.constant 0 : index
    %c0_6 = arith.constant 0 : index
    %4 = vector.load %arg5[%c0_5, %c0_6] : memref<8x64xf32, #tpu.memory_space<vmem>>, vector<8x64xf32>
    %cst_7 = arith.constant dense<0.000000e+00> : vector<256x64xf32>
    %5 = tpu.matmul %3, %4, %cst_7 {dimension_numbers = #tpu.dot_dimension_numbers<[1], [0], [0], [1], [0, 0, 1, 1], [], []>} : vector<256x8xf32>, vector<8x64xf32>, vector<256x64xf32> -> vector<256x64xf32>
    %6 = arith.addf %2, %5 : vector<256x64xf32>
    %c0_8 = arith.constant 0 : index
    %c0_9 = arith.constant 0 : index
    %7 = vector.load %arg6[%c0_8, %c0_9] : memref<1x64xf32, #tpu.memory_space<vmem>>, vector<1x64xf32>
    %8 = vector.broadcast %7 : vector<1x64xf32> to vector<256x64xf32>
    %9 = arith.addf %6, %8 : vector<256x64xf32>
    %cst_10 = arith.constant 0.000000e+00 : f32
    %10 = vector.broadcast %cst_10 : f32 to vector<256x64xf32>
    %11 = arith.cmpf ogt, %9, %10 : vector<256x64xf32>
    %12 = math.exp %9 : vector<256x64xf32>
    %cst_11 = arith.constant 1.000000e+00 : f32
    %13 = vector.broadcast %cst_11 : f32 to vector<256x64xf32>
    %14 = arith.subf %12, %13 : vector<256x64xf32>
    %cst_12 = arith.constant 1.67326319 : f32
    %15 = vector.broadcast %cst_12 : f32 to vector<256x64xf32>
    %16 = arith.mulf %15, %14 : vector<256x64xf32>
    %17 = arith.select %11, %9, %16 : vector<256x64xi1>, vector<256x64xf32>
    %cst_13 = arith.constant 1.05070102 : f32
    %18 = vector.broadcast %cst_13 : f32 to vector<256x64xf32>
    %19 = arith.mulf %18, %17 : vector<256x64xf32>
    %c0_14 = arith.constant 0 : index
    %c0_15 = arith.constant 0 : index
    %20 = vector.load %arg7[%c0_14, %c0_15] : memref<64x64xf32, #tpu.memory_space<vmem>>, vector<64x64xf32>
    %cst_16 = arith.constant dense<0.000000e+00> : vector<256x64xf32>
    %21 = tpu.matmul %19, %20, %cst_16 {dimension_numbers = #tpu.dot_dimension_numbers<[1], [0], [0], [1], [0, 0, 1, 1], [], []>} : vector<256x64xf32>, vector<64x64xf32>, vector<256x64xf32> -> vector<256x64xf32>
    %c0_17 = arith.constant 0 : index
    %c0_18 = arith.constant 0 : index
    %22 = vector.load %arg8[%c0_17, %c0_18] : memref<1x64xf32, #tpu.memory_space<vmem>>, vector<1x64xf32>
    %23 = vector.broadcast %22 : vector<1x64xf32> to vector<256x64xf32>
    %24 = arith.addf %21, %23 : vector<256x64xf32>
    %cst_19 = arith.constant 0.000000e+00 : f32
    %25 = vector.broadcast %cst_19 : f32 to vector<256x64xf32>
    %26 = arith.cmpf ogt, %24, %25 : vector<256x64xf32>
    %27 = math.exp %24 : vector<256x64xf32>
    %cst_20 = arith.constant 1.000000e+00 : f32
    %28 = vector.broadcast %cst_20 : f32 to vector<256x64xf32>
    %29 = arith.subf %27, %28 : vector<256x64xf32>
    %cst_21 = arith.constant 1.67326319 : f32
    %30 = vector.broadcast %cst_21 : f32 to vector<256x64xf32>
    %31 = arith.mulf %30, %29 : vector<256x64xf32>
    %32 = arith.select %26, %24, %31 : vector<256x64xi1>, vector<256x64xf32>
    %cst_22 = arith.constant 1.05070102 : f32
    %33 = vector.broadcast %cst_22 : f32 to vector<256x64xf32>
    %34 = arith.mulf %33, %32 : vector<256x64xf32>
    %c0_23 = arith.constant 0 : index
    %c0_24 = arith.constant 0 : index
    %35 = vector.load %arg9[%c0_23, %c0_24] : memref<64x64xf32, #tpu.memory_space<vmem>>, vector<64x64xf32>
    %cst_25 = arith.constant dense<0.000000e+00> : vector<256x64xf32>
    %36 = tpu.matmul %34, %35, %cst_25 {dimension_numbers = #tpu.dot_dimension_numbers<[1], [0], [0], [1], [0, 0, 1, 1], [], []>} : vector<256x64xf32>, vector<64x64xf32>, vector<256x64xf32> -> vector<256x64xf32>
    %c0_26 = arith.constant 0 : index
    %c0_27 = arith.constant 0 : index
    %37 = vector.load %arg10[%c0_26, %c0_27] : memref<1x64xf32, #tpu.memory_space<vmem>>, vector<1x64xf32>
    %38 = vector.broadcast %37 : vector<1x64xf32> to vector<256x64xf32>
    %39 = arith.addf %36, %38 : vector<256x64xf32>
    %cst_28 = arith.constant 0.000000e+00 : f32
    %40 = vector.broadcast %cst_28 : f32 to vector<256x64xf32>
    %41 = arith.cmpf ogt, %39, %40 : vector<256x64xf32>
    %42 = math.exp %39 : vector<256x64xf32>
    %cst_29 = arith.constant 1.000000e+00 : f32
    %43 = vector.broadcast %cst_29 : f32 to vector<256x64xf32>
    %44 = arith.subf %42, %43 : vector<256x64xf32>
    %cst_30 = arith.constant 1.67326319 : f32
    %45 = vector.broadcast %cst_30 : f32 to vector<256x64xf32>
    %46 = arith.mulf %45, %44 : vector<256x64xf32>
    %47 = arith.select %41, %39, %46 : vector<256x64xi1>, vector<256x64xf32>
    %cst_31 = arith.constant 1.05070102 : f32
    %48 = vector.broadcast %cst_31 : f32 to vector<256x64xf32>
    %49 = arith.mulf %48, %47 : vector<256x64xf32>
    %50 = vector.extract_strided_slice %49 {offsets = [0, 0], sizes = [256, 32], strides = [1, 1]} : vector<256x64xf32> to vector<256x32xf32>
    %51 = vector.shape_cast %50 : vector<256x32xf32> to vector<32x8x32xf32>
    %52 = vector.extract_strided_slice %49 {offsets = [0, 32], sizes = [256, 32], strides = [1, 1]} : vector<256x64xf32> to vector<256x32xf32>
    %53 = vector.shape_cast %52 : vector<256x32xf32> to vector<32x8x32xf32>
    %c0_32 = arith.constant 0 : index
    %c0_33 = arith.constant 0 : index
    %c0_34 = arith.constant 0 : index
    %54 = vector.load %arg3[%c0_32, %c0_33, %c0_34] : memref<32x8x1xf32, #tpu.memory_space<vmem>>, vector<32x8x1xf32>
    %cst_35 = arith.constant 0.000000e+00 : f32
    %55 = vector.broadcast %cst_35 : f32 to vector<32x8x1xf32>
    %56 = arith.cmpf oeq, %54, %55 : vector<32x8x1xf32>
    %57 = arith.extui %56 : vector<32x8x1xi1> to vector<32x8x1xi32>
    %58 = arith.sitofp %57 : vector<32x8x1xi32> to vector<32x8x1xf32>
    %cst_36 = arith.constant 1.000000e+06 : f32
    %59 = vector.broadcast %cst_36 : f32 to vector<32x8x1xf32>
    %60 = arith.mulf %58, %59 : vector<32x8x1xf32>
    %61 = vector.broadcast %60 : vector<32x8x1xf32> to vector<32x8x32xf32>
    %62 = arith.subf %51, %61 : vector<32x8x32xf32>
    %cst_37 = arith.constant dense<0xFF800000> : vector<32x32xf32>
    %63 = vector.multi_reduction <maximumf>, %62, %cst_37 [1] : vector<32x8x32xf32> to vector<32x32xf32>
    %64 = vector.shape_cast %63 : vector<32x32xf32> to vector<32x1x32xf32>
    %65 = vector.broadcast %64 : vector<32x1x32xf32> to vector<32x8x32xf32>
    %66 = arith.subf %62, %65 : vector<32x8x32xf32>
    %67 = math.exp %66 : vector<32x8x32xf32>
    %68 = arith.mulf %67, %53 : vector<32x8x32xf32>
    %cst_38 = arith.constant dense<0.000000e+00> : vector<32x32xf32>
    %69 = vector.multi_reduction <add>, %68, %cst_38 [1] : vector<32x8x32xf32> to vector<32x32xf32>
    %cst_39 = arith.constant dense<0.000000e+00> : vector<32x32xf32>
    %70 = vector.multi_reduction <add>, %67, %cst_39 [1] : vector<32x8x32xf32> to vector<32x32xf32>
    %71 = tpu.reciprocal %70 {approx = true} : vector<32x32xf32> -> vector<32x32xf32>
    %72 = arith.mulf %69, %71 : vector<32x32xf32>
    %c0_40 = arith.constant 0 : index
    %c0_41 = arith.constant 0 : index
    %73 = vector.load %arg11[%c0_40, %c0_41] : memref<32x32xf32, #tpu.memory_space<vmem>>, vector<32x32xf32>
    tpu.vector_store %arg11[%c0_40, %c0_41], %72 {strides = array<i32>} : memref<32x32xf32, #tpu.memory_space<vmem>>, vector<32x32xf32>,
    return
  }
  func.func @transform_0(%arg0: i32) -> (i32, i32) {
    %c0_i32 = arith.constant 0 : i32
    %c0_i32_0 = arith.constant 0 : i32
    return %arg0, %c0_i32 : i32, i32
  }
  func.func @transform_1(%arg0: i32) -> (i32, i32) {
    %c0_i32 = arith.constant 0 : i32
    %c0_i32_0 = arith.constant 0 : i32
    return %arg0, %c0_i32 : i32, i32
  }
  func.func @transform_2(%arg0: i32) -> (i32, i32, i32) {
    %c0_i32 = arith.constant 0 : i32
    %c0_i32_0 = arith.constant 0 : i32
    %c0_i32_1 = arith.constant 0 : i32
    return %arg0, %c0_i32, %c0_i32_0 : i32, i32, i32
  }
  func.func @transform_3(%arg0: i32) -> (i32, i32) {
    %c0_i32 = arith.constant 0 : i32
    %c0_i32_0 = arith.constant 0 : i32
    %c0_i32_1 = arith.constant 0 : i32
    return %c0_i32, %c0_i32_0 : i32, i32
  }
  func.func @transform_4(%arg0: i32) -> (i32, i32) {
    %c0_i32 = arith.constant 0 : i32
    %c0_i32_0 = arith.constant 0 : i32
    %c0_i32_1 = arith.constant 0 : i32
    return %c0_i32, %c0_i32_0 : i32, i32
  }
  func.func @transform_5(%arg0: i32) -> (i32, i32) {
    %c0_i32 = arith.constant 0 : i32
    %c0_i32_0 = arith.constant 0 : i32
    %c0_i32_1 = arith.constant 0 : i32
    return %c0_i32, %c0_i32_0 : i32, i32
  }
  func.func @transform_6(%arg0: i32) -> (i32, i32) {
    %c0_i32 = arith.constant 0 : i32
    %c0_i32_0 = arith.constant 0 : i32
    %c0_i32_1 = arith.constant 0 : i32
    return %c0_i32, %c0_i32_0 : i32, i32
  }
  func.func @transform_7(%arg0: i32) -> (i32, i32) {
    %c0_i32 = arith.constant 0 : i32
    %c0_i32_0 = arith.constant 0 : i32
    %c0_i32_1 = arith.constant 0 : i32
    return %c0_i32, %c0_i32_0 : i32, i32
  }
  func.func @transform_8(%arg0: i32) -> (i32, i32) {
    %c0_i32 = arith.constant 0 : i32
    %c0_i32_0 = arith.constant 0 : i32
    %c0_i32_1 = arith.constant 0 : i32
    return %c0_i32, %c0_i32_0 : i32, i32
  }
  func.func @transform_9(%arg0: i32) -> (i32, i32) {
    %c0_i32 = arith.constant 0 : i32
    %c0_i32_0 = arith.constant 0 : i32
    %c0_i32_1 = arith.constant 0 : i32
    return %c0_i32, %c0_i32_0 : i32, i32
  }
  func.func @transform_10(%arg0: i32) -> (i32, i32) {
    %c0_i32 = arith.constant 0 : i32
    %c0_i32_0 = arith.constant 0 : i32
    return %arg0, %c0_i32 : i32, i32
  }
}

</mosaic_0001>

<llo_original>
// kernel: tpu_custom_call.1
$region0: #{tpu_custom_call.1}
  #allocation0 [shape = 'u32[]', space=smem, size = 0x4, offset = 0x4, fixed_abs, tag = 'smem constant byte address 0x4 - core index']
  #allocation1 [shape = 'u32[144,128]{1,0:T(1,128)}', space=vmem, size = 0x12000, scoped, tag = 'internal scratch']
  %s0 = inlined_call_operand.vmem [shape: f32[512,16], index: 0, kind: input, shape index: {}]
  %s1 = inlined_call_operand.vmem [shape: f32[512,8], index: 1, kind: input, shape index: {}]
  %s2 = inlined_call_operand.vmem [shape: f32[64,8,1], index: 2, kind: input, shape index: {}]
  %s3 = inlined_call_operand.vmem [shape: f32[16,64], index: 3, kind: input, shape index: {}]
  %s4 = inlined_call_operand.vmem [shape: f32[8,64], index: 4, kind: input, shape index: {}]
  %s5 = inlined_call_operand.vmem [shape: f32[1,64], index: 5, kind: input, shape index: {}]
  %s6 = inlined_call_operand.vmem [shape: f32[64,64], index: 6, kind: input, shape index: {}]
  %s7 = inlined_call_operand.vmem [shape: f32[1,64], index: 7, kind: input, shape index: {}]
  %s8 = inlined_call_operand.vmem [shape: f32[64,64], index: 8, kind: input, shape index: {}]
  %s9 = inlined_call_operand.vmem [shape: f32[1,64], index: 9, kind: input, shape index: {}]
  %s10 = inlined_call_operand.vmem [shape: f32[64,32], index: 10, kind: output, shape index: {}]
  %s11 = sld [smem:[#allocation0]]
  $region73: #{tpu_custom_call.1} parent=0
    _
  %s13 = ssub.s32 1, %s11
  %s14 = scalar_select 0, %s13, %s11
  loop: start=0, step=1, limit=4
  $region2: #{tpu_custom_call.1} parent=0 // loop_pre_header
    _
  $region3: #{tpu_custom_call.1} parent=0 // loop_header
    %s16 = sphi 0, %s20
    %p17 = scmp.ge.s32.totalorder %s16, 4
    %s26 = sphi 0, %s28
    %s29 = sphi 0, %s26
    %s30 = sphi 0, %s29
    %s46 = sphi 0, %s30
    %s52 = sphi 0, %s54
    %s55 = sphi 0, %s52
    %s56 = sphi 0, %s55
    %s72 = sphi 0, %s56
    %s78 = sphi 0, %s80
    %s81 = sphi 0, %s78
    %s82 = sphi 0, %s81
    %s98 = sphi 0, %s82
    %s102 = sphi 0, %s102
    %s104 = sphi 0, %s102
    %s105 = sphi 0, %s104
    %s119 = sphi 0, %s105
    %s123 = sphi 0, %s123
    %s125 = sphi 0, %s123
    %s126 = sphi 0, %s125
    %s140 = sphi 0, %s126
    %s144 = sphi 0, %s144
    %s146 = sphi 0, %s144
    %s147 = sphi 0, %s146
    %s161 = sphi 0, %s147
    %s165 = sphi 0, %s165
    %s167 = sphi 0, %s165
    %s168 = sphi 0, %s167
    %s182 = sphi 0, %s168
    %s186 = sphi 0, %s186
    %s188 = sphi 0, %s186
    %s189 = sphi 0, %s188
    %s203 = sphi 0, %s189
    %s207 = sphi 0, %s207
    %s209 = sphi 0, %s207
    %s210 = sphi 0, %s209
    %s224 = sphi 0, %s210
    %s228 = sphi 0, %s228
    %s230 = sphi 0, %s228
    %s231 = sphi 0, %s230
    %s245 = sphi 0, %s231
    %s251 = sphi 0, %s253
    %s254 = sphi 0, %s251
    %s255 = sphi 0, %s254
    %s271 = sphi 0, %s255
  $region4: #{tpu_custom_call.1} parent=0 // loop_header_branch
    %19 = sbr.rel (%p17) target = $region8
  $region5: #{tpu_custom_call.1} parent=0 // loop_body
    %s21 = ssub.s32 %s16, 1
    %s22 = ssub.s32 %s16, 2
    %s23 = sadd.s32 %s16, 1
    %s24 = ssub.s32 %s16, %s23
    %p25 = scmp.eq.s32.totalorder %s24, 0
    %s27 = sadd.s32 %s26, 1
    %s28 = scalar_select %p25, %s26, %s27
    %p31 = pneg %p25
    %p32 = scmp.eq.s32.totalorder %s16, 1
    %p33 = por %p31, %p32
    %p34 = scmp.ne.s32.totalorder %s26, %s29
    %p35 = scmp.eq.s32.totalorder %s16, 0
    %p36 = por %p34, %p35
    %p37 = scmp.ne.s32.totalorder %s26, %s29
    %p38 = scmp.eq.s32.totalorder %s21, 1
    %p39 = por %p37, %p38
    %p40 = scmp.ne.s32.totalorder %s29, %s30
    %p41 = scmp.eq.s32.totalorder %s21, 0
    %p42 = por %p40, %p41
    %p43 = scmp.ne.s32.totalorder %s29, %s30
    %p44 = scmp.eq.s32.totalorder %s22, 1
    %p45 = por %p43, %p44
    %p47 = scmp.ne.s32.totalorder %s30, %s46
    %p48 = scmp.eq.s32.totalorder %s22, 0
    %p49 = por %p47, %p48
    %s50 = ssub.s32 %s16, %s23
    %p51 = scmp.eq.s32.totalorder %s50, 0
    %s53 = sadd.s32 %s52, 1
    %s54 = scalar_select %p51, %s52, %s53
    %p57 = pneg %p51
    %p58 = scmp.eq.s32.totalorder %s16, 1
    %p59 = por %p57, %p58
    %p60 = scmp.ne.s32.totalorder %s52, %s55
    %p61 = scmp.eq.s32.totalorder %s16, 0
    %p62 = por %p60, %p61
    %p63 = scmp.ne.s32.totalorder %s52, %s55
    %p64 = scmp.eq.s32.totalorder %s21, 1
    %p65 = por %p63, %p64
    %p66 = scmp.ne.s32.totalorder %s55, %s56
    %p67 = scmp.eq.s32.totalorder %s21, 0
    %p68 = por %p66, %p67
    %p69 = scmp.ne.s32.totalorder %s55, %s56
    %p70 = scmp.eq.s32.totalorder %s22, 1
    %p71 = por %p69, %p70
    %p73 = scmp.ne.s32.totalorder %s56, %s72
    %p74 = scmp.eq.s32.totalorder %s22, 0
    %p75 = por %p73, %p74
    %s76 = ssub.s32 %s16, %s23
    %p77 = scmp.eq.s32.totalorder %s76, 0
    %s79 = sadd.s32 %s78, 1
    %s80 = scalar_select %p77, %s78, %s79
    %p83 = pneg %p77
    %p84 = scmp.eq.s32.totalorder %s16, 1
    %p85 = por %p83, %p84
    %p86 = scmp.ne.s32.totalorder %s78, %s81
    %p87 = scmp.eq.s32.totalorder %s16, 0
    %p88 = por %p86, %p87
    %p89 = scmp.ne.s32.totalorder %s78, %s81
    %p90 = scmp.eq.s32.totalorder %s21, 1
    %p91 = por %p89, %p90
    %p92 = scmp.ne.s32.totalorder %s81, %s82
    %p93 = scmp.eq.s32.totalorder %s21, 0
    %p94 = por %p92, %p93
    %p95 = scmp.ne.s32.totalorder %s81, %s82
    %p96 = scmp.eq.s32.totalorder %s22, 1
    %p97 = por %p95, %p96
    %p99 = scmp.ne.s32.totalorder %s82, %s98
    %p100 = scmp.eq.s32.totalorder %s22, 0
    %p101 = por %p99, %p100
    %s103 = sadd.s32 %s102, 1
    %p106 = scmp.eq.s32.totalorder %s16, 1
    %p107 = scmp.ne.s32.totalorder %s102, %s104
    %p108 = scmp.eq.s32.totalorder %s16, 0
    %p109 = por %p107, %p108
    %p110 = scmp.ne.s32.totalorder %s102, %s104
    %p111 = scmp.eq.s32.totalorder %s21, 1
    %p112 = por %p110, %p111
    %p113 = scmp.ne.s32.totalorder %s104, %s105
    %p114 = scmp.eq.s32.totalorder %s21, 0
    %p115 = por %p113, %p114
    %p116 = scmp.ne.s32.totalorder %s104, %s105
    %p117 = scmp.eq.s32.totalorder %s22, 1
    %p118 = por %p116, %p117
    %p120 = scmp.ne.s32.totalorder %s105, %s119
    %p121 = scmp.eq.s32.totalorder %s22, 0
    %p122 = por %p120, %p121
    %s124 = sadd.s32 %s123, 1
    %p127 = scmp.eq.s32.totalorder %s16, 1
    %p128 = scmp.ne.s32.totalorder %s123, %s125
    %p129 = scmp.eq.s32.totalorder %s16, 0
    %p130 = por %p128, %p129
    %p131 = scmp.ne.s32.totalorder %s123, %s125
    %p132 = scmp.eq.s32.totalorder %s21, 1
    %p133 = por %p131, %p132
    %p134 = scmp.ne.s32.totalorder %s125, %s126
    %p135 = scmp.eq.s32.totalorder %s21, 0
    %p136 = por %p134, %p135
    %p137 = scmp.ne.s32.totalorder %s125, %s126
    %p138 = scmp.eq.s32.totalorder %s22, 1
    %p139 = por %p137, %p138
    %p141 = scmp.ne.s32.totalorder %s126, %s140
    %p142 = scmp.eq.s32.totalorder %s22, 0
    %p143 = por %p141, %p142
    %s145 = sadd.s32 %s144, 1
    %p148 = scmp.eq.s32.totalorder %s16, 1
    %p149 = scmp.ne.s32.totalorder %s144, %s146
    %p150 = scmp.eq.s32.totalorder %s16, 0
    %p151 = por %p149, %p150
    %p152 = scmp.ne.s32.totalorder %s144, %s146
    %p153 = scmp.eq.s32.totalorder %s21, 1
    %p154 = por %p152, %p153
    %p155 = scmp.ne.s32.totalorder %s146, %s147
    %p156 = scmp.eq.s32.totalorder %s21, 0
    %p157 = por %p155, %p156
    %p158 = scmp.ne.s32.totalorder %s146, %s147
    %p159 = scmp.eq.s32.totalorder %s22, 1
    %p160 = por %p158, %p159
    %p162 = scmp.ne.s32.totalorder %s147, %s161
    %p163 = scmp.eq.s32.totalorder %s22, 0
    %p164 = por %p162, %p163
    %s166 = sadd.s32 %s165, 1
    %p169 = scmp.eq.s32.totalorder %s16, 1
    %p170 = scmp.ne.s32.totalorder %s165, %s167
    %p171 = scmp.eq.s32.totalorder %s16, 0
    %p172 = por %p170, %p171
    %p173 = scmp.ne.s32.totalorder %s165, %s167
    %p174 = scmp.eq.s32.totalorder %s21, 1
    %p175 = por %p173, %p174
    %p176 = scmp.ne.s32.totalorder %s167, %s168
    %p177 = scmp.eq.s32.totalorder %s21, 0
    %p178 = por %p176, %p177
    %p179 = scmp.ne.s32.totalorder %s167, %s168
    %p180 = scmp.eq.s32.totalorder %s22, 1
    %p181 = por %p179, %p180
    %p183 = scmp.ne.s32.totalorder %s168, %s182
    %p184 = scmp.eq.s32.totalorder %s22, 0
    %p185 = por %p183, %p184
    %s187 = sadd.s32 %s186, 1
    %p190 = scmp.eq.s32.totalorder %s16, 1
    %p191 = scmp.ne.s32.totalorder %s186, %s188
    %p192 = scmp.eq.s32.totalorder %s16, 0
    %p193 = por %p191, %p192
    %p194 = scmp.ne.s32.totalorder %s186, %s188
    %p195 = scmp.eq.s32.totalorder %s21, 1
    %p196 = por %p194, %p195
    %p197 = scmp.ne.s32.totalorder %s188, %s189
    %p198 = scmp.eq.s32.totalorder %s21, 0
    %p199 = por %p197, %p198
    %p200 = scmp.ne.s32.totalorder %s188, %s189
    %p201 = scmp.eq.s32.totalorder %s22, 1
    %p202 = por %p200, %p201
    %p204 = scmp.ne.s32.totalorder %s189, %s203
    %p205 = scmp.eq.s32.totalorder %s22, 0
    %p206 = por %p204, %p205
    %s208 = sadd.s32 %s207, 1
    %p211 = scmp.eq.s32.totalorder %s16, 1
    %p212 = scmp.ne.s32.totalorder %s207, %s209
    %p213 = scmp.eq.s32.totalorder %s16, 0
    %p214 = por %p212, %p213
    %p215 = scmp.ne.s32.totalorder %s207, %s209
    %p216 = scmp.eq.s32.totalorder %s21, 1
    %p217 = por %p215, %p216
    %p218 = scmp.ne.s32.totalorder %s209, %s210
    %p219 = scmp.eq.s32.totalorder %s21, 0
    %p220 = por %p218, %p219
    %p221 = scmp.ne.s32.totalorder %s209, %s210
    %p222 = scmp.eq.s32.totalorder %s22, 1
    %p223 = por %p221, %p222
    %p225 = scmp.ne.s32.totalorder %s210, %s224
    %p226 = scmp.eq.s32.totalorder %s22, 0
    %p227 = por %p225, %p226
    %s229 = sadd.s32 %s228, 1
    %p232 = scmp.eq.s32.totalorder %s16, 1
    %p233 = scmp.ne.s32.totalorder %s228, %s230
    %p234 = scmp.eq.s32.totalorder %s16, 0
    %p235 = por %p233, %p234
    %p236 = scmp.ne.s32.totalorder %s228, %s230
    %p237 = scmp.eq.s32.totalorder %s21, 1
    %p238 = por %p236, %p237
    %p239 = scmp.ne.s32.totalorder %s230, %s231
    %p240 = scmp.eq.s32.totalorder %s21, 0
    %p241 = por %p239, %p240
    %p242 = scmp.ne.s32.totalorder %s230, %s231
    %p243 = scmp.eq.s32.totalorder %s22, 1
    %p244 = por %p242, %p243
    %p246 = scmp.ne.s32.totalorder %s231, %s245
    %p247 = scmp.eq.s32.totalorder %s22, 0
    %p248 = por %p246, %p247
    %s249 = ssub.s32 %s16, %s23
    %p250 = scmp.eq.s32.totalorder %s249, 0
    %s252 = sadd.s32 %s251, 1
    %s253 = scalar_select %p250, %s251, %s252
    %p256 = pneg %p250
    %p257 = scmp.eq.s32.totalorder %s16, 1
    %p258 = por %p256, %p257
    %p259 = scmp.ne.s32.totalorder %s251, %s254
    %p260 = scmp.eq.s32.totalorder %s16, 0
    %p261 = por %p259, %p260
    %p262 = scmp.ne.s32.totalorder %s251, %s254
    %p263 = scmp.eq.s32.totalorder %s21, 1
    %p264 = por %p262, %p263
    %p265 = scmp.ne.s32.totalorder %s254, %s255
    %p266 = scmp.eq.s32.totalorder %s21, 0
    %p267 = por %p265, %p266
    %p268 = scmp.ne.s32.totalorder %s254, %s255
    %p269 = scmp.eq.s32.totalorder %s22, 1
    %p270 = por %p268, %p269
    %p272 = scmp.ne.s32.totalorder %s255, %s271
    %p273 = scmp.eq.s32.totalorder %s22, 0
    %p274 = por %p272, %p273
    %p275 = scmp.le.s32.totalorder 1, %s16
    %p276 = scmp.lt.s32.totalorder %s16, 3
    %p277 = pnand %p275, %p276
    %p278 = pneg %p277
    // Predicated region
    $region9: #{tpu_custom_call.1} parent=5 // pred_check
      _
    $region10: #{tpu_custom_call.1} parent=5 // pred_check_branch
      %280 = sbr.rel (%p277) target = $region12
    $region11: #{tpu_custom_call.1} parent=5 // pred_region
      %s281 = ssub.s32 %s16, 1
      // Predicated region
      $region13: #{tpu_custom_call.1} parent=11 // pred_check
        %p282 = pneg %p115
      $region14: #{tpu_custom_call.1} parent=11 // pred_check_branch
        %284 = sbr.rel (%p282) target = $region16
      $region15: #{tpu_custom_call.1} parent=11 // pred_region
        _
      $region16: #{tpu_custom_call.1} parent=11 // pred_fallthru
        _
      // Predicated region
      $region17: #{tpu_custom_call.1} parent=11 // pred_check
        %p285 = pneg %p136
      $region18: #{tpu_custom_call.1} parent=11 // pred_check_branch
        %287 = sbr.rel (%p285) target = $region20
      $region19: #{tpu_custom_call.1} parent=11 // pred_region
        _
      $region20: #{tpu_custom_call.1} parent=11 // pred_fallthru
        _
      // Predicated region
      $region21: #{tpu_custom_call.1} parent=11 // pred_check
        %p288 = pneg %p157
      $region22: #{tpu_custom_call.1} parent=11 // pred_check_branch
        %290 = sbr.rel (%p288) target = $region24
      $region23: #{tpu_custom_call.1} parent=11 // pred_region
        _
      $region24: #{tpu_custom_call.1} parent=11 // pred_fallthru
        _
      // Predicated region
      $region25: #{tpu_custom_call.1} parent=11 // pred_check
        %p291 = pneg %p178
      $region26: #{tpu_custom_call.1} parent=11 // pred_check_branch
        %293 = sbr.rel (%p291) target = $region28
      $region27: #{tpu_custom_call.1} parent=11 // pred_region
        _
      $region28: #{tpu_custom_call.1} parent=11 // pred_fallthru
        _
      // Predicated region
      $region29: #{tpu_custom_call.1} parent=11 // pred_check
        %p294 = pneg %p199
      $region30: #{tpu_custom_call.1} parent=11 // pred_check_branch
        %296 = sbr.rel (%p294) target = $region32
      $region31: #{tpu_custom_call.1} parent=11 // pred_region
        _
      $region32: #{tpu_custom_call.1} parent=11 // pred_fallthru
        _
      // Predicated region
      $region33: #{tpu_custom_call.1} parent=11 // pred_check
        %p297 = pneg %p220
      $region34: #{tpu_custom_call.1} parent=11 // pred_check_branch
        %299 = sbr.rel (%p297) target = $region36
      $region35: #{tpu_custom_call.1} parent=11 // pred_region
        _
      $region36: #{tpu_custom_call.1} parent=11 // pred_fallthru
        _
      // Predicated region
      $region37: #{tpu_custom_call.1} parent=11 // pred_check
        %p300 = pneg %p241
      $region38: #{tpu_custom_call.1} parent=11 // pred_check_branch
        %302 = sbr.rel (%p300) target = $region40
      $region39: #{tpu_custom_call.1} parent=11 // pred_region
        _
      $region40: #{tpu_custom_call.1} parent=11 // pred_fallthru
        _
    $region12: #{tpu_custom_call.1} parent=5 // pred_fallthru
      _
    %p303 = scmp.lt.s32.totalorder %s16, 2
    // Predicated region
    $region41: #{tpu_custom_call.1} parent=5 // pred_check
      %p304 = pneg %p303
    $region42: #{tpu_custom_call.1} parent=5 // pred_check_branch
      %306 = sbr.rel (%p304) target = $region44
    $region43: #{tpu_custom_call.1} parent=5 // pred_region
      // Predicated region
      $region45: #{tpu_custom_call.1} parent=43 // pred_check
        %p307 = pneg %p36
      $region46: #{tpu_custom_call.1} parent=43 // pred_check_branch
        %309 = sbr.rel (%p307) target = $region48
      $region47: #{tpu_custom_call.1} parent=43 // pred_region
        %s310 = smul.u32 32, %s16
        %p311 = scmp.lt.s32.totalorder %s310, 63
        %s312 = scalar_select %p311, %s310, 63
        %s313 = smul.addr %s312, 8
        %s314 = scalar_lea.vmem %s0, %s313
        %s315 = smul.u32 32, %s16
      $region48: #{tpu_custom_call.1} parent=43 // pred_fallthru
        _
      // Predicated region
      $region49: #{tpu_custom_call.1} parent=43 // pred_check
        %p316 = pneg %p62
      $region50: #{tpu_custom_call.1} parent=43 // pred_check_branch
        %318 = sbr.rel (%p316) target = $region52
      $region51: #{tpu_custom_call.1} parent=43 // pred_region
        %s319 = smul.u32 32, %s16
        %p320 = scmp.lt.s32.totalorder %s319, 63
        %s321 = scalar_select %p320, %s319, 63
        %s322 = smul.addr %s321, 8
        %s323 = scalar_lea.vmem %s1, %s322
        %s324 = smul.u32 32, %s16
      $region52: #{tpu_custom_call.1} parent=43 // pred_fallthru
        _
      // Predicated region
      $region53: #{tpu_custom_call.1} parent=43 // pred_check
        %p325 = pneg %p88
      $region54: #{tpu_custom_call.1} parent=43 // pred_check_branch
        %327 = sbr.rel (%p325) target = $region56
      $region55: #{tpu_custom_call.1} parent=43 // pred_region
        %s328 = smul.u32 32, %s16
        %p329 = scmp.lt.s32.totalorder %s328, 63
        %s330 = scalar_select %p329, %s328, 63
        %s331 = smul.addr %s330, 8
        %s332 = scalar_lea.vmem %s2, %s331
        %s333 = smul.u32 32, %s16
      $region56: #{tpu_custom_call.1} parent=43 // pred_fallthru
        _
    $region44: #{tpu_custom_call.1} parent=5 // pred_fallthru
      _
    %p334 = scmp.le.s32.totalorder 1, %s16
    %p335 = scmp.lt.s32.totalorder %s16, 3
    %p336 = pnand %p334, %p335
    %p337 = pneg %p336
    // Predicated region
    $region57: #{tpu_custom_call.1} parent=5 // pred_check
      _
    $region58: #{tpu_custom_call.1} parent=5 // pred_check_branch
      %339 = sbr.rel (%p336) target = $region60
    $region59: #{tpu_custom_call.1} parent=5 // pred_region
      %s340 = ssub.s32 %s16, 1
      %s341 = smul.u32 32, %s21
      %p342 = scmp.lt.s32.totalorder %s341, 63
      %s343 = scalar_select %p342, %s341, 63
      %s344 = smul.addr %s343, 8
      %s345 = scalar_lea.vmem %s0, %s344
      %p346 = pneg %p42
      %p347 = pneg %p39
      %s348 = smul.u32 32, %s21
      %p349 = scmp.lt.s32.totalorder %s348, 63
      %s350 = scalar_select %p349, %s348, 63
      %s351 = smul.addr %s350, 8
      %s352 = scalar_lea.vmem %s1, %s351
      %p353 = pneg %p68
      %p354 = pneg %p65
      %s355 = smul.u32 32, %s21
      %p356 = scmp.lt.s32.totalorder %s355, 63
      %s357 = scalar_select %p356, %s355, 63
      %s358 = smul.addr %s357, 8
      %s359 = scalar_lea.vmem %s2, %s358
      %p360 = pneg %p94
      %p361 = pneg %p91
      %p362 = pneg %p115
      %p363 = pneg %p112
      %p364 = pneg %p136
      %p365 = pneg %p133
      %p366 = pneg %p157
      %p367 = pneg %p154
      %p368 = pneg %p178
      %p369 = pneg %p175
      %p370 = pneg %p199
      %p371 = pneg %p196
      %p372 = pneg %p220
      %p373 = pneg %p217
      %p374 = pneg %p241
      %p375 = pneg %p238
      %p376 = pneg %p267
      %p377 = pneg %p264
      %s378 = smul.u32 4, %s21
      %p379 = scmp.lt.s32.totalorder %s378, 7
      %s380 = scalar_select %p379, %s378, 7
      %s381 = smul.addr %s380, 8
      %s382 = scalar_lea.vmem %s10, %s381
      %s383 = smul.u32 32, %s21
      %p384 = scmp.lt.s32.totalorder %s383, 63
      %s385 = scalar_select %p384, %s383, 63
      %s386 = smul.addr %s385, 8
      %s387 = scalar_lea.vmem %s0, %s386
      %s388 = smul.u32 32, %s21
      %s389 = smul.u32 32, %s21
      %p390 = scmp.lt.s32.totalorder %s389, 63
      %s391 = scalar_select %p390, %s389, 63
      %s392 = smul.addr %s391, 8
      %s393 = scalar_lea.vmem %s1, %s392
      %s394 = smul.u32 32, %s21
      %s395 = smul.u32 32, %s21
      %p396 = scmp.lt.s32.totalorder %s395, 63
      %s397 = scalar_select %p396, %s395, 63
      %s398 = smul.addr %s397, 8
      %s399 = scalar_lea.vmem %s2, %s398
      %s400 = smul.u32 32, %s21
      %s401 = smul.u32 4, %s21
      %p402 = scmp.lt.s32.totalorder %s401, 7
      %s403 = scalar_select %p402, %s401, 7
      %s404 = smul.addr %s403, 8
      %s405 = scalar_lea.vmem %s10, %s404
      %s406 = smul.u32 4, %s21
      %v407 = vld [vmem:[%s387] sm:$0xff]
      %v408 = vld [vmem:[%s387 + $0x8] sm:$0xff]
      %v409 = vld [vmem:[%s387 + $0x10] sm:$0xff]
      %v410 = vld [vmem:[%s387 + $0x18] sm:$0xff]
      %v411 = vld [vmem:[%s387 + $0x20] sm:$0xff]
      %v412 = vld [vmem:[%s387 + $0x28] sm:$0xff]
      %v413 = vld [vmem:[%s387 + $0x30] sm:$0xff]
      %v414 = vld [vmem:[%s387 + $0x38] sm:$0xff]
      %v415 = vld [vmem:[%s387 + $0x40] sm:$0xff]
      %v416 = vld [vmem:[%s387 + $0x48] sm:$0xff]
      %v417 = vld [vmem:[%s387 + $0x50] sm:$0xff]
      %v418 = vld [vmem:[%s387 + $0x58] sm:$0xff]
      %v419 = vld [vmem:[%s387 + $0x60] sm:$0xff]
      %v420 = vld [vmem:[%s387 + $0x68] sm:$0xff]
      %v421 = vld [vmem:[%s387 + $0x70] sm:$0xff]
      %v422 = vld [vmem:[%s387 + $0x78] sm:$0xff]
      %v423 = vld [vmem:[%s387 + $0x80] sm:$0xff]
      %v424 = vld [vmem:[%s387 + $0x88] sm:$0xff]
      %v425 = vld [vmem:[%s387 + $0x90] sm:$0xff]
      %v426 = vld [vmem:[%s387 + $0x98] sm:$0xff]
      %v427 = vld [vmem:[%s387 + $0xa0] sm:$0xff]
      %v428 = vld [vmem:[%s387 + $0xa8] sm:$0xff]
      %v429 = vld [vmem:[%s387 + $0xb0] sm:$0xff]
      %v430 = vld [vmem:[%s387 + $0xb8] sm:$0xff]
      %v431 = vld [vmem:[%s387 + $0xc0] sm:$0xff]
      %v432 = vld [vmem:[%s387 + $0xc8] sm:$0xff]
      %v433 = vld [vmem:[%s387 + $0xd0] sm:$0xff]
      %v434 = vld [vmem:[%s387 + $0xd8] sm:$0xff]
      %v435 = vld [vmem:[%s387 + $0xe0] sm:$0xff]
      %v436 = vld [vmem:[%s387 + $0xe8] sm:$0xff]
      %v437 = vld [vmem:[%s387 + $0xf0] sm:$0xff]
      %v438 = vld [vmem:[%s387 + $0xf8] sm:$0xff]
      %v439 = vld [vmem:[%s3] sm:$0xff]
      %v440 = vld [vmem:[%s3 + $0x8] sm:$0xff]
      %v441 = vld [vmem:[%s393] sm:$0xff]
      %v442 = vld [vmem:[%s393 + $0x8] sm:$0xff]
      %v443 = vld [vmem:[%s393 + $0x10] sm:$0xff]
      %v444 = vld [vmem:[%s393 + $0x18] sm:$0xff]
      %v445 = vld [vmem:[%s393 + $0x20] sm:$0xff]
      %v446 = vld [vmem:[%s393 + $0x28] sm:$0xff]
      %v447 = vld [vmem:[%s393 + $0x30] sm:$0xff]
      %v448 = vld [vmem:[%s393 + $0x38] sm:$0xff]
      %v449 = vld [vmem:[%s393 + $0x40] sm:$0xff]
      %v450 = vld [vmem:[%s393 + $0x48] sm:$0xff]
      %v451 = vld [vmem:[%s393 + $0x50] sm:$0xff]
      %v452 = vld [vmem:[%s393 + $0x58] sm:$0xff]
      %v453 = vld [vmem:[%s393 + $0x60] sm:$0xff]
      %v454 = vld [vmem:[%s393 + $0x68] sm:$0xff]
      %v455 = vld [vmem:[%s393 + $0x70] sm:$0xff]
      %v456 = vld [vmem:[%s393 + $0x78] sm:$0xff]
      %v457 = vld [vmem:[%s393 + $0x80] sm:$0xff]
      %v458 = vld [vmem:[%s393 + $0x88] sm:$0xff]
      %v459 = vld [vmem:[%s393 + $0x90] sm:$0xff]
      %v460 = vld [vmem:[%s393 + $0x98] sm:$0xff]
      %v461 = vld [vmem:[%s393 + $0xa0] sm:$0xff]
      %v462 = vld [vmem:[%s393 + $0xa8] sm:$0xff]
      %v463 = vld [vmem:[%s393 + $0xb0] sm:$0xff]
      %v464 = vld [vmem:[%s393 + $0xb8] sm:$0xff]
      %v465 = vld [vmem:[%s393 + $0xc0] sm:$0xff]
      %v466 = vld [vmem:[%s393 + $0xc8] sm:$0xff]
      %v467 = vld [vmem:[%s393 + $0xd0] sm:$0xff]
      %v468 = vld [vmem:[%s393 + $0xd8] sm:$0xff]
      %v469 = vld [vmem:[%s393 + $0xe0] sm:$0xff]
      %v470 = vld [vmem:[%s393 + $0xe8] sm:$0xff]
      %v471 = vld [vmem:[%s393 + $0xf0] sm:$0xff]
      %v472 = vld [vmem:[%s393 + $0xf8] sm:$0xff]
      %v473 = vld [vmem:[%s4] sm:$0xff]
      %vm474 = vcmask 64512
      %v476 = vsel %vm474, %v441, 0
      %v479 = vsel %vm474, %v442, 0
      %v482 = vsel %vm474, %v443, 0
      %v485 = vsel %vm474, %v444, 0
      %v488 = vsel %vm474, %v445, 0
      %v491 = vsel %vm474, %v446, 0
      %v494 = vsel %vm474, %v447, 0
      %v497 = vsel %vm474, %v448, 0
      %v500 = vsel %vm474, %v449, 0
      %v503 = vsel %vm474, %v450, 0
      %v506 = vsel %vm474, %v451, 0
      %v509 = vsel %vm474, %v452, 0
      %v512 = vsel %vm474, %v453, 0
      %v515 = vsel %vm474, %v454, 0
      %v518 = vsel %vm474, %v455, 0
      %v521 = vsel %vm474, %v456, 0
      %v524 = vsel %vm474, %v457, 0
      %v527 = vsel %vm474, %v458, 0
      %v530 = vsel %vm474, %v459, 0
      %v533 = vsel %vm474, %v460, 0
      %v536 = vsel %vm474, %v461, 0
      %v539 = vsel %vm474, %v462, 0
      %v542 = vsel %vm474, %v463, 0
      %v545 = vsel %vm474, %v464, 0
      %v548 = vsel %vm474, %v465, 0
      %v551 = vsel %vm474, %v466, 0
      %v554 = vsel %vm474, %v467, 0
      %v557 = vsel %vm474, %v468, 0
      %v560 = vsel %vm474, %v469, 0
      %v563 = vsel %vm474, %v470, 0
      %v566 = vsel %vm474, %v471, 0
      %v569 = vsel %vm474, %v472, 0
      %571 = vmatprep.subr.mxu0 0.0
      %572 = vmatpush1.msra.mxu0 0.0
      %573 = vmatprep.subr.mxu0 0.0
      %574 = vmatpush1.msra.mxu0 0.0
      %575 = vmatprep.subr.mxu0 0.0
      %576 = vmatpush1.msra.mxu0 0.0
      %577 = vmatprep.subr.mxu0 0.0
      %578 = vmatpush1.msra.mxu0 0.0
      %579 = vmatprep.subr.mxu0 0.0
      %580 = vmatpush1.msra.mxu0 0.0
      %581 = vmatprep.subr.mxu0 0.0
      %582 = vmatpush1.msra.mxu0 0.0
      %583 = vmatprep.subr.mxu0 0.0
      %584 = vmatpush1.msra.mxu0 0.0
      %585 = vmatprep.subr.mxu0 0.0
      %586 = vmatpush1.msra.mxu0 0.0
      %587 = vmatprep.subr.mxu0 0.0
      %588 = vmatpush1.msra.mxu0 0.0
      %589 = vmatprep.subr.mxu0 0.0
      %590 = vmatpush1.msra.mxu0 0.0
      %591 = vmatprep.subr.mxu0 0.0
      %592 = vmatpush1.msra.mxu0 0.0
      %593 = vmatprep.subr.mxu0 0.0
      %594 = vmatpush1.msra.mxu0 0.0
      %595 = vmatprep.subr.mxu0 0.0
      %596 = vmatpush1.msra.mxu0 0.0
      %597 = vmatprep.subr.mxu0 0.0
      %598 = vmatpush1.msra.mxu0 0.0
      %599 = vmatprep.subr.mxu0 0.0
      %600 = vmatpush1.msra.mxu0 0.0
      %601 = vmatprep.subr.mxu0 0.0
      %602 = vmatpush1.msra.mxu0 %v473
      %603 = vmatprep.subr.mxu0 0.0
      %604 = vmatpush2.msra.mxu0 0.0
      %605 = vmatprep.subr.mxu0 0.0
      %606 = vmatpush2.msra.mxu0 0.0
      %607 = vmatprep.subr.mxu0 0.0
      %608 = vmatpush2.msra.mxu0 0.0
      %609 = vmatprep.subr.mxu0 0.0
      %610 = vmatpush2.msra.mxu0 0.0
      %611 = vmatprep.subr.mxu0 0.0
      %612 = vmatpush2.msra.mxu0 0.0
      %613 = vmatprep.subr.mxu0 0.0
      %614 = vmatpush2.msra.mxu0 0.0
      %615 = vmatprep.subr.mxu0 0.0
      %616 = vmatpush2.msra.mxu0 0.0
      %617 = vmatprep.subr.mxu0 0.0
      %618 = vmatpush2.msra.mxu0 0.0
      %619 = vmatprep.subr.mxu0 0.0
      %620 = vmatpush2.msra.mxu0 0.0
      %621 = vmatprep.subr.mxu0 0.0
      %622 = vmatpush2.msra.mxu0 0.0
      %623 = vmatprep.subr.mxu0 0.0
      %624 = vmatpush2.msra.mxu0 0.0
      %625 = vmatprep.subr.mxu0 0.0
      %626 = vmatpush2.msra.mxu0 0.0
      %627 = vmatprep.subr.mxu0 0.0
      %628 = vmatpush2.msra.mxu0 0.0
      %629 = vmatprep.subr.mxu0 0.0
      %630 = vmatpush2.msra.mxu0 0.0
      %631 = vmatprep.subr.mxu0 0.0
      %632 = vmatpush2.msra.mxu0 0.0
      %633 = vmatprep.subr.mxu0 0.0
      %634 = vmatpush2.msra.mxu0 0.0
      %635 = vmatprep.mubr.f32.mxu0 0.0
      %636 = vmatmul.mubr.f32.gmra.mxu0 %v476
      %v637 = vpop.f32.mrf.mxu0
      %v638 = vadd.f32 0.0, %v637
      %v639 = vpop.f32.mrf.mxu0
      %640 = vmatprep.mubr.f32.mxu0 0.0
      %641 = vmatmul.mubr.f32.gmra.mxu0 %v479
      %v642 = vpop.f32.mrf.mxu0
      %v643 = vadd.f32 0.0, %v642
      %v644 = vpop.f32.mrf.mxu0
      %645 = vmatprep.mubr.f32.mxu0 0.0
      %646 = vmatmul.mubr.f32.gmra.mxu0 %v482
      %v647 = vpop.f32.mrf.mxu0
      %v648 = vadd.f32 0.0, %v647
      %v649 = vpop.f32.mrf.mxu0
      %650 = vmatprep.mubr.f32.mxu0 0.0
      %651 = vmatmul.mubr.f32.gmra.mxu0 %v485
      %v652 = vpop.f32.mrf.mxu0
      %v653 = vadd.f32 0.0, %v652
      %v654 = vpop.f32.mrf.mxu0
      %655 = vmatprep.mubr.f32.mxu0 0.0
      %656 = vmatmul.mubr.f32.gmra.mxu0 %v488
      %v657 = vpop.f32.mrf.mxu0
      %v658 = vadd.f32 0.0, %v657
      %v659 = vpop.f32.mrf.mxu0
      %660 = vmatprep.mubr.f32.mxu0 0.0
      %661 = vmatmul.mubr.f32.gmra.mxu0 %v491
      %v662 = vpop.f32.mrf.mxu0
      %v663 = vadd.f32 0.0, %v662
      %v664 = vpop.f32.mrf.mxu0
      %665 = vmatprep.mubr.f32.mxu0 0.0
      %666 = vmatmul.mubr.f32.gmra.mxu0 %v494
      %v667 = vpop.f32.mrf.mxu0
      %v668 = vadd.f32 0.0, %v667
      %v669 = vpop.f32.mrf.mxu0
      %670 = vmatprep.mubr.f32.mxu0 0.0
      %671 = vmatmul.mubr.f32.gmra.mxu0 %v497
      %v672 = vpop.f32.mrf.mxu0
      %v673 = vadd.f32 0.0, %v672
      %v674 = vpop.f32.mrf.mxu0
      %675 = vmatprep.mubr.f32.mxu0 0.0
      %676 = vmatmul.mubr.f32.gmra.mxu0 %v500
      %v677 = vpop.f32.mrf.mxu0
      %v678 = vadd.f32 0.0, %v677
      %v679 = vpop.f32.mrf.mxu0
      %680 = vmatprep.mubr.f32.mxu0 0.0
      %681 = vmatmul.mubr.f32.gmra.mxu0 %v503
      %v682 = vpop.f32.mrf.mxu0
      %v683 = vadd.f32 0.0, %v682
      %v684 = vpop.f32.mrf.mxu0
      %685 = vmatprep.mubr.f32.mxu0 0.0
      %686 = vmatmul.mubr.f32.gmra.mxu0 %v506
      %v687 = vpop.f32.mrf.mxu0
      %v688 = vadd.f32 0.0, %v687
      %v689 = vpop.f32.mrf.mxu0
      %690 = vmatprep.mubr.f32.mxu0 0.0
      %691 = vmatmul.mubr.f32.gmra.mxu0 %v509
      %v692 = vpop.f32.mrf.mxu0
      %v693 = vadd.f32 0.0, %v692
      %v694 = vpop.f32.mrf.mxu0
      %695 = vmatprep.mubr.f32.mxu0 0.0
      %696 = vmatmul.mubr.f32.gmra.mxu0 %v512
      %v697 = vpop.f32.mrf.mxu0
      %v698 = vadd.f32 0.0, %v697
      %v699 = vpop.f32.mrf.mxu0
      %700 = vmatprep.mubr.f32.mxu0 0.0
      %701 = vmatmul.mubr.f32.gmra.mxu0 %v515
      %v702 = vpop.f32.mrf.mxu0
      %v703 = vadd.f32 0.0, %v702
      %v704 = vpop.f32.mrf.mxu0
      %705 = vmatprep.mubr.f32.mxu0 0.0
      %706 = vmatmul.mubr.f32.gmra.mxu0 %v518
      %v707 = vpop.f32.mrf.mxu0
      %v708 = vadd.f32 0.0, %v707
      %v709 = vpop.f32.mrf.mxu0
      %710 = vmatprep.mubr.f32.mxu0 0.0
      %711 = vmatmul.mubr.f32.gmra.mxu0 %v521
      %v712 = vpop.f32.mrf.mxu0
      %v713 = vadd.f32 0.0, %v712
      %v714 = vpop.f32.mrf.mxu0
      %715 = vmatprep.mubr.f32.mxu0 0.0
      %716 = vmatmul.mubr.f32.gmra.mxu0 %v524
      %v717 = vpop.f32.mrf.mxu0
      %v718 = vadd.f32 0.0, %v717
      %v719 = vpop.f32.mrf.mxu0
      %720 = vmatprep.mubr.f32.mxu0 0.0
      %721 = vmatmul.mubr.f32.gmra.mxu0 %v527
      %v722 = vpop.f32.mrf.mxu0
      %v723 = vadd.f32 0.0, %v722
      %v724 = vpop.f32.mrf.mxu0
      %725 = vmatprep.mubr.f32.mxu0 0.0
      %726 = vmatmul.mubr.f32.gmra.mxu0 %v530
      %v727 = vpop.f32.mrf.mxu0
      %v728 = vadd.f32 0.0, %v727
      %v729 = vpop.f32.mrf.mxu0
      %730 = vmatprep.mubr.f32.mxu0 0.0
      %731 = vmatmul.mubr.f32.gmra.mxu0 %v533
      %v732 = vpop.f32.mrf.mxu0
      %v733 = vadd.f32 0.0, %v732
      %v734 = vpop.f32.mrf.mxu0
      %735 = vmatprep.mubr.f32.mxu0 0.0
      %736 = vmatmul.mubr.f32.gmra.mxu0 %v536
      %v737 = vpop.f32.mrf.mxu0
      %v738 = vadd.f32 0.0, %v737
      %v739 = vpop.f32.mrf.mxu0
      %740 = vmatprep.mubr.f32.mxu0 0.0
      %741 = vmatmul.mubr.f32.gmra.mxu0 %v539
      %v742 = vpop.f32.mrf.mxu0
      %v743 = vadd.f32 0.0, %v742
      %v744 = vpop.f32.mrf.mxu0
      %745 = vmatprep.mubr.f32.mxu0 0.0
      %746 = vmatmul.mubr.f32.gmra.mxu0 %v542
      %v747 = vpop.f32.mrf.mxu0
      %v748 = vadd.f32 0.0, %v747
      %v749 = vpop.f32.mrf.mxu0
      %750 = vmatprep.mubr.f32.mxu0 0.0
      %751 = vmatmul.mubr.f32.gmra.mxu0 %v545
      %v752 = vpop.f32.mrf.mxu0
      %v753 = vadd.f32 0.0, %v752
      %v754 = vpop.f32.mrf.mxu0
      %755 = vmatprep.mubr.f32.mxu0 0.0
      %756 = vmatmul.mubr.f32.gmra.mxu0 %v548
      %v757 = vpop.f32.mrf.mxu0
      %v758 = vadd.f32 0.0, %v757
      %v759 = vpop.f32.mrf.mxu0
      %760 = vmatprep.mubr.f32.mxu0 0.0
      %761 = vmatmul.mubr.f32.gmra.mxu0 %v551
      %v762 = vpop.f32.mrf.mxu0
      %v763 = vadd.f32 0.0, %v762
      %v764 = vpop.f32.mrf.mxu0
      %765 = vmatprep.mubr.f32.mxu0 0.0
      %766 = vmatmul.mubr.f32.gmra.mxu0 %v554
      %v767 = vpop.f32.mrf.mxu0
      %v768 = vadd.f32 0.0, %v767
      %v769 = vpop.f32.mrf.mxu0
      %770 = vmatprep.mubr.f32.mxu0 0.0
      %771 = vmatmul.mubr.f32.gmra.mxu0 %v557
      %v772 = vpop.f32.mrf.mxu0
      %v773 = vadd.f32 0.0, %v772
      %v774 = vpop.f32.mrf.mxu0
      %775 = vmatprep.mubr.f32.mxu0 0.0
      %776 = vmatmul.mubr.f32.gmra.mxu0 %v560
      %v777 = vpop.f32.mrf.mxu0
      %v778 = vadd.f32 0.0, %v777
      %v779 = vpop.f32.mrf.mxu0
      %780 = vmatprep.mubr.f32.mxu0 0.0
      %781 = vmatmul.mubr.f32.gmra.mxu0 %v563
      %v782 = vpop.f32.mrf.mxu0
      %v783 = vadd.f32 0.0, %v782
      %v784 = vpop.f32.mrf.mxu0
      %785 = vmatprep.mubr.f32.mxu0 0.0
      %786 = vmatmul.mubr.f32.gmra.mxu0 %v566
      %v787 = vpop.f32.mrf.mxu0
      %v788 = vadd.f32 0.0, %v787
      %v789 = vpop.f32.mrf.mxu0
      %790 = vmatprep.mubr.f32.mxu0 0.0
      %791 = vmatmul.mubr.f32.gmra.mxu0 %v569
      %v792 = vpop.f32.mrf.mxu0
      %v793 = vadd.f32 0.0, %v792
      %v794 = vpop.f32.mrf.mxu0
      %795 = vdwg.mxu0
      %vm796 = vcmask 130048
      %v798 = vsel %vm796, %v407, 0
      %v801 = vsel %vm796, %v408, 0
      %v804 = vsel %vm796, %v409, 0
      %v807 = vsel %vm796, %v410, 0
      %v810 = vsel %vm796, %v411, 0
      %v813 = vsel %vm796, %v412, 0
      %v816 = vsel %vm796, %v413, 0
      %v819 = vsel %vm796, %v414, 0
      %v822 = vsel %vm796, %v415, 0
      %v825 = vsel %vm796, %v416, 0
      %v828 = vsel %vm796, %v417, 0
      %v831 = vsel %vm796, %v418, 0
      %v834 = vsel %vm796, %v419, 0
      %v837 = vsel %vm796, %v420, 0
      %v840 = vsel %vm796, %v421, 0
      %v843 = vsel %vm796, %v422, 0
      %v846 = vsel %vm796, %v423, 0
      %v849 = vsel %vm796, %v424, 0
      %v852 = vsel %vm796, %v425, 0
      %v855 = vsel %vm796, %v426, 0
      %v858 = vsel %vm796, %v427, 0
      %v861 = vsel %vm796, %v428, 0
      %v864 = vsel %vm796, %v429, 0
      %v867 = vsel %vm796, %v430, 0
      %v870 = vsel %vm796, %v431, 0
      %v873 = vsel %vm796, %v432, 0
      %v876 = vsel %vm796, %v433, 0
      %v879 = vsel %vm796, %v434, 0
      %v882 = vsel %vm796, %v435, 0
      %v885 = vsel %vm796, %v436, 0
      %v888 = vsel %vm796, %v437, 0
      %v891 = vsel %vm796, %v438, 0
      %893 = vmatprep.subr.mxu0 0.0
      %894 = vmatpush1.msra.mxu0 0.0
      %895 = vmatprep.subr.mxu0 0.0
      %896 = vmatpush1.msra.mxu0 0.0
      %897 = vmatprep.subr.mxu0 0.0
      %898 = vmatpush1.msra.mxu0 0.0
      %899 = vmatprep.subr.mxu0 0.0
      %900 = vmatpush1.msra.mxu0 0.0
      %901 = vmatprep.subr.mxu0 0.0
      %902 = vmatpush1.msra.mxu0 0.0
      %903 = vmatprep.subr.mxu0 0.0
      %904 = vmatpush1.msra.mxu0 0.0
      %905 = vmatprep.subr.mxu0 0.0
      %906 = vmatpush1.msra.mxu0 0.0
      %907 = vmatprep.subr.mxu0 0.0
      %908 = vmatpush1.msra.mxu0 0.0
      %909 = vmatprep.subr.mxu0 0.0
      %910 = vmatpush1.msra.mxu0 0.0
      %911 = vmatprep.subr.mxu0 0.0
      %912 = vmatpush1.msra.mxu0 0.0
      %913 = vmatprep.subr.mxu0 0.0
      %914 = vmatpush1.msra.mxu0 0.0
      %915 = vmatprep.subr.mxu0 0.0
      %916 = vmatpush1.msra.mxu0 0.0
      %917 = vmatprep.subr.mxu0 0.0
      %918 = vmatpush1.msra.mxu0 0.0
      %919 = vmatprep.subr.mxu0 0.0
      %920 = vmatpush1.msra.mxu0 0.0
      %921 = vmatprep.subr.mxu0 0.0
      %922 = vmatpush1.msra.mxu0 %v440
      %923 = vmatprep.subr.mxu0 0.0
      %924 = vmatpush1.msra.mxu0 %v439
      %925 = vmatprep.subr.mxu0 0.0
      %926 = vmatpush2.msra.mxu0 0.0
      %927 = vmatprep.subr.mxu0 0.0
      %928 = vmatpush2.msra.mxu0 0.0
      %929 = vmatprep.subr.mxu0 0.0
      %930 = vmatpush2.msra.mxu0 0.0
      %931 = vmatprep.subr.mxu0 0.0
      %932 = vmatpush2.msra.mxu0 0.0
      %933 = vmatprep.subr.mxu0 0.0
      %934 = vmatpush2.msra.mxu0 0.0
      %935 = vmatprep.subr.mxu0 0.0
      %936 = vmatpush2.msra.mxu0 0.0
      %937 = vmatprep.subr.mxu0 0.0
      %938 = vmatpush2.msra.mxu0 0.0
      %939 = vmatprep.subr.mxu0 0.0
      %940 = vmatpush2.msra.mxu0 0.0
      %941 = vmatprep.subr.mxu0 0.0
      %942 = vmatpush2.msra.mxu0 0.0
      %943 = vmatprep.subr.mxu0 0.0
      %944 = vmatpush2.msra.mxu0 0.0
      %945 = vmatprep.subr.mxu0 0.0
      %946 = vmatpush2.msra.mxu0 0.0
      %947 = vmatprep.subr.mxu0 0.0
      %948 = vmatpush2.msra.mxu0 0.0
      %949 = vmatprep.subr.mxu0 0.0
      %950 = vmatpush2.msra.mxu0 0.0
      %951 = vmatprep.subr.mxu0 0.0
      %952 = vmatpush2.msra.mxu0 0.0
      %953 = vmatprep.subr.mxu0 0.0
      %954 = vmatpush2.msra.mxu0 0.0
      %955 = vmatprep.subr.mxu0 0.0
      %956 = vmatpush2.msra.mxu0 0.0
      %957 = vmatprep.mubr.f32.mxu0 0.0
      %958 = vmatmul.mubr.f32.gmra.mxu0 %v798
      %v959 = vpop.f32.mrf.mxu0
      %v960 = vadd.f32 %v638, %v959
      %v961 = vpop.f32.mrf.mxu0
      %962 = vmatprep.mubr.f32.mxu0 0.0
      %963 = vmatmul.mubr.f32.gmra.mxu0 %v801
      %v964 = vpop.f32.mrf.mxu0
      %v965 = vadd.f32 %v643, %v964
      %v966 = vpop.f32.mrf.mxu0
      %967 = vmatprep.mubr.f32.mxu0 0.0
      %968 = vmatmul.mubr.f32.gmra.mxu0 %v804
      %v969 = vpop.f32.mrf.mxu0
      %v970 = vadd.f32 %v648, %v969
      %v971 = vpop.f32.mrf.mxu0
      %972 = vmatprep.mubr.f32.mxu0 0.0
      %973 = vmatmul.mubr.f32.gmra.mxu0 %v807
      %v974 = vpop.f32.mrf.mxu0
      %v975 = vadd.f32 %v653, %v974
      %v976 = vpop.f32.mrf.mxu0
      %977 = vmatprep.mubr.f32.mxu0 0.0
      %978 = vmatmul.mubr.f32.gmra.mxu0 %v810
      %v979 = vpop.f32.mrf.mxu0
      %v980 = vadd.f32 %v658, %v979
      %v981 = vpop.f32.mrf.mxu0
      %982 = vmatprep.mubr.f32.mxu0 0.0
      %983 = vmatmul.mubr.f32.gmra.mxu0 %v813
      %v984 = vpop.f32.mrf.mxu0
      %v985 = vadd.f32 %v663, %v984
      %v986 = vpop.f32.mrf.mxu0
      %987 = vmatprep.mubr.f32.mxu0 0.0
      %988 = vmatmul.mubr.f32.gmra.mxu0 %v816
      %v989 = vpop.f32.mrf.mxu0
      %v990 = vadd.f32 %v668, %v989
      %v991 = vpop.f32.mrf.mxu0
      %992 = vmatprep.mubr.f32.mxu0 0.0
      %993 = vmatmul.mubr.f32.gmra.mxu0 %v819
      %v994 = vpop.f32.mrf.mxu0
      %v995 = vadd.f32 %v673, %v994
      %v996 = vpop.f32.mrf.mxu0
      %997 = vmatprep.mubr.f32.mxu0 0.0
      %998 = vmatmul.mubr.f32.gmra.mxu0 %v822
      %v999 = vpop.f32.mrf.mxu0
      %v1000 = vadd.f32 %v678, %v999
      %v1001 = vpop.f32.mrf.mxu0
      %1002 = vmatprep.mubr.f32.mxu0 0.0
      %1003 = vmatmul.mubr.f32.gmra.mxu0 %v825
      %v1004 = vpop.f32.mrf.mxu0
      %v1005 = vadd.f32 %v683, %v1004
      %v1006 = vpop.f32.mrf.mxu0
      %1007 = vmatprep.mubr.f32.mxu0 0.0
      %1008 = vmatmul.mubr.f32.gmra.mxu0 %v828
      %v1009 = vpop.f32.mrf.mxu0
      %v1010 = vadd.f32 %v688, %v1009
      %v1011 = vpop.f32.mrf.mxu0
      %1012 = vmatprep.mubr.f32.mxu0 0.0
      %1013 = vmatmul.mubr.f32.gmra.mxu0 %v831
      %v1014 = vpop.f32.mrf.mxu0
      %v1015 = vadd.f32 %v693, %v1014
      %v1016 = vpop.f32.mrf.mxu0
      %1017 = vmatprep.mubr.f32.mxu0 0.0
      %1018 = vmatmul.mubr.f32.gmra.mxu0 %v834
      %v1019 = vpop.f32.mrf.mxu0
      %v1020 = vadd.f32 %v698, %v1019
      %v1021 = vpop.f32.mrf.mxu0
      %1022 = vmatprep.mubr.f32.mxu0 0.0
      %1023 = vmatmul.mubr.f32.gmra.mxu0 %v837
      %v1024 = vpop.f32.mrf.mxu0
      %v1025 = vadd.f32 %v703, %v1024
      %v1026 = vpop.f32.mrf.mxu0
      %1027 = vmatprep.mubr.f32.mxu0 0.0
      %1028 = vmatmul.mubr.f32.gmra.mxu0 %v840
      %v1029 = vpop.f32.mrf.mxu0
      %v1030 = vadd.f32 %v708, %v1029
      %v1031 = vpop.f32.mrf.mxu0
      %1032 = vmatprep.mubr.f32.mxu0 0.0
      %1033 = vmatmul.mubr.f32.gmra.mxu0 %v843
      %v1034 = vpop.f32.mrf.mxu0
      %v1035 = vadd.f32 %v713, %v1034
      %v1036 = vpop.f32.mrf.mxu0
      %1037 = vmatprep.mubr.f32.mxu0 0.0
      %1038 = vmatmul.mubr.f32.gmra.mxu0 %v846
      %v1039 = vpop.f32.mrf.mxu0
      %v1040 = vadd.f32 %v718, %v1039
      %v1041 = vpop.f32.mrf.mxu0
      %1042 = vmatprep.mubr.f32.mxu0 0.0
      %1043 = vmatmul.mubr.f32.gmra.mxu0 %v849
      %v1044 = vpop.f32.mrf.mxu0
      %v1045 = vadd.f32 %v723, %v1044
      %v1046 = vpop.f32.mrf.mxu0
      %1047 = vmatprep.mubr.f32.mxu0 0.0
      %1048 = vmatmul.mubr.f32.gmra.mxu0 %v852
      %v1049 = vpop.f32.mrf.mxu0
      %v1050 = vadd.f32 %v728, %v1049
      %v1051 = vpop.f32.mrf.mxu0
      %1052 = vmatprep.mubr.f32.mxu0 0.0
      %1053 = vmatmul.mubr.f32.gmra.mxu0 %v855
      %v1054 = vpop.f32.mrf.mxu0
      %v1055 = vadd.f32 %v733, %v1054
      %v1056 = vpop.f32.mrf.mxu0
      %1057 = vmatprep.mubr.f32.mxu0 0.0
      %1058 = vmatmul.mubr.f32.gmra.mxu0 %v858
      %v1059 = vpop.f32.mrf.mxu0
      %v1060 = vadd.f32 %v738, %v1059
      %v1061 = vpop.f32.mrf.mxu0
      %1062 = vmatprep.mubr.f32.mxu0 0.0
      %1063 = vmatmul.mubr.f32.gmra.mxu0 %v861
      %v1064 = vpop.f32.mrf.mxu0
      %v1065 = vadd.f32 %v743, %v1064
      %v1066 = vpop.f32.mrf.mxu0
      %1067 = vmatprep.mubr.f32.mxu0 0.0
      %1068 = vmatmul.mubr.f32.gmra.mxu0 %v864
      %v1069 = vpop.f32.mrf.mxu0
      %v1070 = vadd.f32 %v748, %v1069
      %v1071 = vpop.f32.mrf.mxu0
      %1072 = vmatprep.mubr.f32.mxu0 0.0
      %1073 = vmatmul.mubr.f32.gmra.mxu0 %v867
      %v1074 = vpop.f32.mrf.mxu0
      %v1075 = vadd.f32 %v753, %v1074
      %v1076 = vpop.f32.mrf.mxu0
      %1077 = vmatprep.mubr.f32.mxu0 0.0
      %1078 = vmatmul.mubr.f32.gmra.mxu0 %v870
      %v1079 = vpop.f32.mrf.mxu0
      %v1080 = vadd.f32 %v758, %v1079
      %v1081 = vpop.f32.mrf.mxu0
      %1082 = vmatprep.mubr.f32.mxu0 0.0
      %1083 = vmatmul.mubr.f32.gmra.mxu0 %v873
      %v1084 = vpop.f32.mrf.mxu0
      %v1085 = vadd.f32 %v763, %v1084
      %v1086 = vpop.f32.mrf.mxu0
      %1087 = vmatprep.mubr.f32.mxu0 0.0
      %1088 = vmatmul.mubr.f32.gmra.mxu0 %v876
      %v1089 = vpop.f32.mrf.mxu0
      %v1090 = vadd.f32 %v768, %v1089
      %v1091 = vpop.f32.mrf.mxu0
      %1092 = vmatprep.mubr.f32.mxu0 0.0
      %1093 = vmatmul.mubr.f32.gmra.mxu0 %v879
      %v1094 = vpop.f32.mrf.mxu0
      %v1095 = vadd.f32 %v773, %v1094
      %v1096 = vpop.f32.mrf.mxu0
      %1097 = vmatprep.mubr.f32.mxu0 0.0
      %1098 = vmatmul.mubr.f32.gmra.mxu0 %v882
      %v1099 = vpop.f32.mrf.mxu0
      %v1100 = vadd.f32 %v778, %v1099
      %v1101 = vpop.f32.mrf.mxu0
      %1102 = vmatprep.mubr.f32.mxu0 0.0
      %1103 = vmatmul.mubr.f32.gmra.mxu0 %v885
      %v1104 = vpop.f32.mrf.mxu0
      %v1105 = vadd.f32 %v783, %v1104
      %v1106 = vpop.f32.mrf.mxu0
      %1107 = vmatprep.mubr.f32.mxu0 0.0
      %1108 = vmatmul.mubr.f32.gmra.mxu0 %v888
      %v1109 = vpop.f32.mrf.mxu0
      %v1110 = vadd.f32 %v788, %v1109
      %v1111 = vpop.f32.mrf.mxu0
      %1112 = vmatprep.mubr.f32.mxu0 0.0
      %1113 = vmatmul.mubr.f32.gmra.mxu0 %v891
      %v1114 = vpop.f32.mrf.mxu0
      %v1115 = vadd.f32 %v793, %v1114
      %v1116 = vpop.f32.mrf.mxu0
      %1117 = vdwg.mxu0
      %v1118 = vld [vmem:[%s5] sm:$0x1]
      %v1120 = vlaneseq
      %v1121 = vshrl.u32 %v1120, 7
      %v1122 = vsub.s32 0, %v1121
      %v1123 = vrot.slane %v1118, %v1122
      %v1125 = vadd.f32 %v960, %v1123
      %v1126 = vadd.f32 %v965, %v1123
      %v1127 = vadd.f32 %v970, %v1123
      %v1128 = vadd.f32 %v975, %v1123
      %v1129 = vadd.f32 %v980, %v1123
      %v1130 = vadd.f32 %v985, %v1123
      %v1131 = vadd.f32 %v990, %v1123
      %v1132 = vadd.f32 %v995, %v1123
      %v1133 = vadd.f32 %v1000, %v1123
      %v1134 = vadd.f32 %v1005, %v1123
      %v1135 = vadd.f32 %v1010, %v1123
      %v1136 = vadd.f32 %v1015, %v1123
      %v1137 = vadd.f32 %v1020, %v1123
      %v1138 = vadd.f32 %v1025, %v1123
      %v1139 = vadd.f32 %v1030, %v1123
      %v1140 = vadd.f32 %v1035, %v1123
      %v1141 = vadd.f32 %v1040, %v1123
      %v1142 = vadd.f32 %v1045, %v1123
      %v1143 = vadd.f32 %v1050, %v1123
      %v1144 = vadd.f32 %v1055, %v1123
      %v1145 = vadd.f32 %v1060, %v1123
      %v1146 = vadd.f32 %v1065, %v1123
      %v1147 = vadd.f32 %v1070, %v1123
      %v1148 = vadd.f32 %v1075, %v1123
      %v1149 = vadd.f32 %v1080, %v1123
      %v1150 = vadd.f32 %v1085, %v1123
      %v1151 = vadd.f32 %v1090, %v1123
      %v1152 = vadd.f32 %v1095, %v1123
      %v1153 = vadd.f32 %v1100, %v1123
      %v1154 = vadd.f32 %v1105, %v1123
      %v1155 = vadd.f32 %v1110, %v1123
      %v1156 = vadd.f32 %v1115, %v1123
      %vm1157 = vcmp.gt.f32.partialorder %v1125, 0.0
      %vm1158 = vcmp.gt.f32.partialorder %v1126, 0.0
      %vm1159 = vcmp.gt.f32.partialorder %v1127, 0.0
      %vm1160 = vcmp.gt.f32.partialorder %v1128, 0.0
      %vm1161 = vcmp.gt.f32.partialorder %v1129, 0.0
      %vm1162 = vcmp.gt.f32.partialorder %v1130, 0.0
      %vm1163 = vcmp.gt.f32.partialorder %v1131, 0.0
      %vm1164 = vcmp.gt.f32.partialorder %v1132, 0.0
      %vm1165 = vcmp.gt.f32.partialorder %v1133, 0.0
      %vm1166 = vcmp.gt.f32.partialorder %v1134, 0.0
      %vm1167 = vcmp.gt.f32.partialorder %v1135, 0.0
      %vm1168 = vcmp.gt.f32.partialorder %v1136, 0.0
      %vm1169 = vcmp.gt.f32.partialorder %v1137, 0.0
      %vm1170 = vcmp.gt.f32.partialorder %v1138, 0.0
      %vm1171 = vcmp.gt.f32.partialorder %v1139, 0.0
      %vm1172 = vcmp.gt.f32.partialorder %v1140, 0.0
      %vm1173 = vcmp.gt.f32.partialorder %v1141, 0.0
      %vm1174 = vcmp.gt.f32.partialorder %v1142, 0.0
      %vm1175 = vcmp.gt.f32.partialorder %v1143, 0.0
      %vm1176 = vcmp.gt.f32.partialorder %v1144, 0.0
      %vm1177 = vcmp.gt.f32.partialorder %v1145, 0.0
      %vm1178 = vcmp.gt.f32.partialorder %v1146, 0.0
      %vm1179 = vcmp.gt.f32.partialorder %v1147, 0.0
      %vm1180 = vcmp.gt.f32.partialorder %v1148, 0.0
      %vm1181 = vcmp.gt.f32.partialorder %v1149, 0.0
      %vm1182 = vcmp.gt.f32.partialorder %v1150, 0.0
      %vm1183 = vcmp.gt.f32.partialorder %v1151, 0.0
      %vm1184 = vcmp.gt.f32.partialorder %v1152, 0.0
      %vm1185 = vcmp.gt.f32.partialorder %v1153, 0.0
      %vm1186 = vcmp.gt.f32.partialorder %v1154, 0.0
      %vm1187 = vcmp.gt.f32.partialorder %v1155, 0.0
      %vm1188 = vcmp.gt.f32.partialorder %v1156, 0.0
      %v1189 = vmul.f32 %v1125, 1.442695
      %v1190 = vpow.pop %v1189
      %v1191 = vmul.f32 %v1126, 1.442695
      %v1192 = vpow.pop %v1191
      %v1193 = vmul.f32 %v1127, 1.442695
      %v1194 = vpow.pop %v1193
      %v1195 = vmul.f32 %v1128, 1.442695
      %v1196 = vpow.pop %v1195
      %v1197 = vmul.f32 %v1129, 1.442695
      %v1198 = vpow.pop %v1197
      %v1199 = vmul.f32 %v1130, 1.442695
      %v1200 = vpow.pop %v1199
      %v1201 = vmul.f32 %v1131, 1.442695
      %v1202 = vpow.pop %v1201
      %v1203 = vmul.f32 %v1132, 1.442695
      %v1204 = vpow.pop %v1203
      %v1205 = vmul.f32 %v1133, 1.442695
      %v1206 = vpow.pop %v1205
      %v1207 = vmul.f32 %v1134, 1.442695
      %v1208 = vpow.pop %v1207
      %v1209 = vmul.f32 %v1135, 1.442695
      %v1210 = vpow.pop %v1209
      %v1211 = vmul.f32 %v1136, 1.442695
      %v1212 = vpow.pop %v1211
      %v1213 = vmul.f32 %v1137, 1.442695
      %v1214 = vpow.pop %v1213
      %v1215 = vmul.f32 %v1138, 1.442695
      %v1216 = vpow.pop %v1215
      %v1217 = vmul.f32 %v1139, 1.442695
      %v1218 = vpow.pop %v1217
      %v1219 = vmul.f32 %v1140, 1.442695
      %v1220 = vpow.pop %v1219
      %v1221 = vmul.f32 %v1141, 1.442695
      %v1222 = vpow.pop %v1221
      %v1223 = vmul.f32 %v1142, 1.442695
      %v1224 = vpow.pop %v1223
      %v1225 = vmul.f32 %v1143, 1.442695
      %v1226 = vpow.pop %v1225
      %v1227 = vmul.f32 %v1144, 1.442695
      %v1228 = vpow.pop %v1227
      %v1229 = vmul.f32 %v1145, 1.442695
      %v1230 = vpow.pop %v1229
      %v1231 = vmul.f32 %v1146, 1.442695
      %v1232 = vpow.pop %v1231
      %v1233 = vmul.f32 %v1147, 1.442695
      %v1234 = vpow.pop %v1233
      %v1235 = vmul.f32 %v1148, 1.442695
      %v1236 = vpow.pop %v1235
      %v1237 = vmul.f32 %v1149, 1.442695
      %v1238 = vpow.pop %v1237
      %v1239 = vmul.f32 %v1150, 1.442695
      %v1240 = vpow.pop %v1239
      %v1241 = vmul.f32 %v1151, 1.442695
      %v1242 = vpow.pop %v1241
      %v1243 = vmul.f32 %v1152, 1.442695
      %v1244 = vpow.pop %v1243
      %v1245 = vmul.f32 %v1153, 1.442695
      %v1246 = vpow.pop %v1245
      %v1247 = vmul.f32 %v1154, 1.442695
      %v1248 = vpow.pop %v1247
      %v1249 = vmul.f32 %v1155, 1.442695
      %v1250 = vpow.pop %v1249
      %v1251 = vmul.f32 %v1156, 1.442695
      %v1252 = vpow.pop %v1251
      %v1253 = vsub.f32 %v1190, 1.0
      %v1254 = vsub.f32 %v1192, 1.0
      %v1255 = vsub.f32 %v1194, 1.0
      %v1256 = vsub.f32 %v1196, 1.0
      %v1257 = vsub.f32 %v1198, 1.0
      %v1258 = vsub.f32 %v1200, 1.0
      %v1259 = vsub.f32 %v1202, 1.0
      %v1260 = vsub.f32 %v1204, 1.0
      %v1261 = vsub.f32 %v1206, 1.0
      %v1262 = vsub.f32 %v1208, 1.0
      %v1263 = vsub.f32 %v1210, 1.0
      %v1264 = vsub.f32 %v1212, 1.0
      %v1265 = vsub.f32 %v1214, 1.0
      %v1266 = vsub.f32 %v1216, 1.0
      %v1267 = vsub.f32 %v1218, 1.0
      %v1268 = vsub.f32 %v1220, 1.0
      %v1269 = vsub.f32 %v1222, 1.0
      %v1270 = vsub.f32 %v1224, 1.0
      %v1271 = vsub.f32 %v1226, 1.0
      %v1272 = vsub.f32 %v1228, 1.0
      %v1273 = vsub.f32 %v1230, 1.0
      %v1274 = vsub.f32 %v1232, 1.0
      %v1275 = vsub.f32 %v1234, 1.0
      %v1276 = vsub.f32 %v1236, 1.0
      %v1277 = vsub.f32 %v1238, 1.0
      %v1278 = vsub.f32 %v1240, 1.0
      %v1279 = vsub.f32 %v1242, 1.0
      %v1280 = vsub.f32 %v1244, 1.0
      %v1281 = vsub.f32 %v1246, 1.0
      %v1282 = vsub.f32 %v1248, 1.0
      %v1283 = vsub.f32 %v1250, 1.0
      %v1284 = vsub.f32 %v1252, 1.0
      %v1285 = vmul.f32 %v1253, 1.6732632
      %v1286 = vmul.f32 %v1254, 1.6732632
      %v1287 = vmul.f32 %v1255, 1.6732632
      %v1288 = vmul.f32 %v1256, 1.6732632
      %v1289 = vmul.f32 %v1257, 1.6732632
      %v1290 = vmul.f32 %v1258, 1.6732632
      %v1291 = vmul.f32 %v1259, 1.6732632
      %v1292 = vmul.f32 %v1260, 1.6732632
      %v1293 = vmul.f32 %v1261, 1.6732632
      %v1294 = vmul.f32 %v1262, 1.6732632
      %v1295 = vmul.f32 %v1263, 1.6732632
      %v1296 = vmul.f32 %v1264, 1.6732632
      %v1297 = vmul.f32 %v1265, 1.6732632
      %v1298 = vmul.f32 %v1266, 1.6732632
      %v1299 = vmul.f32 %v1267, 1.6732632
      %v1300 = vmul.f32 %v1268, 1.6732632
      %v1301 = vmul.f32 %v1269, 1.6732632
      %v1302 = vmul.f32 %v1270, 1.6732632
      %v1303 = vmul.f32 %v1271, 1.6732632
      %v1304 = vmul.f32 %v1272, 1.6732632
      %v1305 = vmul.f32 %v1273, 1.6732632
      %v1306 = vmul.f32 %v1274, 1.6732632
      %v1307 = vmul.f32 %v1275, 1.6732632
      %v1308 = vmul.f32 %v1276, 1.6732632
      %v1309 = vmul.f32 %v1277, 1.6732632
      %v1310 = vmul.f32 %v1278, 1.6732632
      %v1311 = vmul.f32 %v1279, 1.6732632
      %v1312 = vmul.f32 %v1280, 1.6732632
      %v1313 = vmul.f32 %v1281, 1.6732632
      %v1314 = vmul.f32 %v1282, 1.6732632
      %v1315 = vmul.f32 %v1283, 1.6732632
      %v1316 = vmul.f32 %v1284, 1.6732632
      %v1317 = vsel %vm1157, %v1125, %v1285
      %v1318 = vsel %vm1158, %v1126, %v1286
      %v1319 = vsel %vm1159, %v1127, %v1287
      %v1320 = vsel %vm1160, %v1128, %v1288
      %v1321 = vsel %vm1161, %v1129, %v1289
      %v1322 = vsel %vm1162, %v1130, %v1290
      %v1323 = vsel %vm1163, %v1131, %v1291
      %v1324 = vsel %vm1164, %v1132, %v1292
      %v1325 = vsel %vm1165, %v1133, %v1293
      %v1326 = vsel %vm1166, %v1134, %v1294
      %v1327 = vsel %vm1167, %v1135, %v1295
      %v1328 = vsel %vm1168, %v1136, %v1296
      %v1329 = vsel %vm1169, %v1137, %v1297
      %v1330 = vsel %vm1170, %v1138, %v1298
      %v1331 = vsel %vm1171, %v1139, %v1299
      %v1332 = vsel %vm1172, %v1140, %v1300
      %v1333 = vsel %vm1173, %v1141, %v1301
      %v1334 = vsel %vm1174, %v1142, %v1302
      %v1335 = vsel %vm1175, %v1143, %v1303
      %v1336 = vsel %vm1176, %v1144, %v1304
      %v1337 = vsel %vm1177, %v1145, %v1305
      %v1338 = vsel %vm1178, %v1146, %v1306
      %v1339 = vsel %vm1179, %v1147, %v1307
      %v1340 = vsel %vm1180, %v1148, %v1308
      %v1341 = vsel %vm1181, %v1149, %v1309
      %v1342 = vsel %vm1182, %v1150, %v1310
      %v1343 = vsel %vm1183, %v1151, %v1311
      %v1344 = vsel %vm1184, %v1152, %v1312
      %v1345 = vsel %vm1185, %v1153, %v1313
      %v1346 = vsel %vm1186, %v1154, %v1314
      %v1347 = vsel %vm1187, %v1155, %v1315
      %v1348 = vsel %vm1188, %v1156, %v1316
      %v1349 = vmul.f32 %v1317, 1.050701
      %v1350 = vmul.f32 %v1318, 1.050701
      %v1351 = vmul.f32 %v1319, 1.050701
      %v1352 = vmul.f32 %v1320, 1.050701
      %v1353 = vmul.f32 %v1321, 1.050701
      %v1354 = vmul.f32 %v1322, 1.050701
      %v1355 = vmul.f32 %v1323, 1.050701
      %v1356 = vmul.f32 %v1324, 1.050701
      %v1357 = vmul.f32 %v1325, 1.050701
      %v1358 = vmul.f32 %v1326, 1.050701
      %v1359 = vmul.f32 %v1327, 1.050701
      %v1360 = vmul.f32 %v1328, 1.050701
      %v1361 = vmul.f32 %v1329, 1.050701
      %v1362 = vmul.f32 %v1330, 1.050701
      %v1363 = vmul.f32 %v1331, 1.050701
      %v1364 = vmul.f32 %v1332, 1.050701
      %v1365 = vmul.f32 %v1333, 1.050701
      %v1366 = vmul.f32 %v1334, 1.050701
      %v1367 = vmul.f32 %v1335, 1.050701
      %v1368 = vmul.f32 %v1336, 1.050701
      %v1369 = vmul.f32 %v1337, 1.050701
      %v1370 = vmul.f32 %v1338, 1.050701
      %v1371 = vmul.f32 %v1339, 1.050701
      %v1372 = vmul.f32 %v1340, 1.050701
      %v1373 = vmul.f32 %v1341, 1.050701
      %v1374 = vmul.f32 %v1342, 1.050701
      %v1375 = vmul.f32 %v1343, 1.050701
      %v1376 = vmul.f32 %v1344, 1.050701
      %v1377 = vmul.f32 %v1345, 1.050701
      %v1378 = vmul.f32 %v1346, 1.050701
      %v1379 = vmul.f32 %v1347, 1.050701
      %v1380 = vmul.f32 %v1348, 1.050701
      %v1381 = vld [vmem:[%s6] sm:$0xff]
      %v1382 = vld [vmem:[%s6 + $0x8] sm:$0xff]
      %v1383 = vld [vmem:[%s6 + $0x10] sm:$0xff]
      %v1384 = vld [vmem:[%s6 + $0x18] sm:$0xff]
      %v1385 = vld [vmem:[%s6 + $0x20] sm:$0xff]
      %v1386 = vld [vmem:[%s6 + $0x28] sm:$0xff]
      %v1387 = vld [vmem:[%s6 + $0x30] sm:$0xff]
      %v1388 = vld [vmem:[%s6 + $0x38] sm:$0xff]
      %v1389 = vld [vmem:[%s7] sm:$0x1]
      %v1391 = vlaneseq
      %v1392 = vshrl.u32 %v1391, 7
      %v1393 = vsub.s32 0, %v1392
      %v1394 = vrot.slane %v1389, %v1393
      %vm1396 = vcmask 523264
      %v1398 = vsel %vm1396, %v1349, 0
      %v1401 = vsel %vm1396, %v1350, 0
      %v1404 = vsel %vm1396, %v1351, 0
      %v1407 = vsel %vm1396, %v1352, 0
      %v1410 = vsel %vm1396, %v1353, 0
      %v1413 = vsel %vm1396, %v1354, 0
      %v1416 = vsel %vm1396, %v1355, 0
      %v1419 = vsel %vm1396, %v1356, 0
      %v1422 = vsel %vm1396, %v1357, 0
      %v1425 = vsel %vm1396, %v1358, 0
      %v1428 = vsel %vm1396, %v1359, 0
      %v1431 = vsel %vm1396, %v1360, 0
      %v1434 = vsel %vm1396, %v1361, 0
      %v1437 = vsel %vm1396, %v1362, 0
      %v1440 = vsel %vm1396, %v1363, 0
      %v1443 = vsel %vm1396, %v1364, 0
      %v1446 = vsel %vm1396, %v1365, 0
      %v1449 = vsel %vm1396, %v1366, 0
      %v1452 = vsel %vm1396, %v1367, 0
      %v1455 = vsel %vm1396, %v1368, 0
      %v1458 = vsel %vm1396, %v1369, 0
      %v1461 = vsel %vm1396, %v1370, 0
      %v1464 = vsel %vm1396, %v1371, 0
      %v1467 = vsel %vm1396, %v1372, 0
      %v1470 = vsel %vm1396, %v1373, 0
      %v1473 = vsel %vm1396, %v1374, 0
      %v1476 = vsel %vm1396, %v1375, 0
      %v1479 = vsel %vm1396, %v1376, 0
      %v1482 = vsel %vm1396, %v1377, 0
      %v1485 = vsel %vm1396, %v1378, 0
      %v1488 = vsel %vm1396, %v1379, 0
      %v1491 = vsel %vm1396, %v1380, 0
      %1493 = vmatprep.subr.mxu0 0.0
      %1494 = vmatpush1.msra.mxu0 0.0
      %1495 = vmatprep.subr.mxu0 0.0
      %1496 = vmatpush1.msra.mxu0 0.0
      %1497 = vmatprep.subr.mxu0 0.0
      %1498 = vmatpush1.msra.mxu0 0.0
      %1499 = vmatprep.subr.mxu0 0.0
      %1500 = vmatpush1.msra.mxu0 0.0
      %1501 = vmatprep.subr.mxu0 0.0
      %1502 = vmatpush1.msra.mxu0 0.0
      %1503 = vmatprep.subr.mxu0 0.0
      %1504 = vmatpush1.msra.mxu0 0.0
      %1505 = vmatprep.subr.mxu0 0.0
      %1506 = vmatpush1.msra.mxu0 0.0
      %1507 = vmatprep.subr.mxu0 0.0
      %1508 = vmatpush1.msra.mxu0 0.0
      %1509 = vmatprep.subr.mxu0 0.0
      %1510 = vmatpush1.msra.mxu0 %v1388
      %1511 = vmatprep.subr.mxu0 0.0
      %1512 = vmatpush1.msra.mxu0 %v1387
      %1513 = vmatprep.subr.mxu0 0.0
      %1514 = vmatpush1.msra.mxu0 %v1386
      %1515 = vmatprep.subr.mxu0 0.0
      %1516 = vmatpush1.msra.mxu0 %v1385
      %1517 = vmatprep.subr.mxu0 0.0
      %1518 = vmatpush1.msra.mxu0 %v1384
      %1519 = vmatprep.subr.mxu0 0.0
      %1520 = vmatpush1.msra.mxu0 %v1383
      %1521 = vmatprep.subr.mxu0 0.0
      %1522 = vmatpush1.msra.mxu0 %v1382
      %1523 = vmatprep.subr.mxu0 0.0
      %1524 = vmatpush1.msra.mxu0 %v1381
      %1525 = vmatprep.subr.mxu0 0.0
      %1526 = vmatpush2.msra.mxu0 0.0
      %1527 = vmatprep.subr.mxu0 0.0
      %1528 = vmatpush2.msra.mxu0 0.0
      %1529 = vmatprep.subr.mxu0 0.0
      %1530 = vmatpush2.msra.mxu0 0.0
      %1531 = vmatprep.subr.mxu0 0.0
      %1532 = vmatpush2.msra.mxu0 0.0
      %1533 = vmatprep.subr.mxu0 0.0
      %1534 = vmatpush2.msra.mxu0 0.0
      %1535 = vmatprep.subr.mxu0 0.0
      %1536 = vmatpush2.msra.mxu0 0.0
      %1537 = vmatprep.subr.mxu0 0.0
      %1538 = vmatpush2.msra.mxu0 0.0
      %1539 = vmatprep.subr.mxu0 0.0
      %1540 = vmatpush2.msra.mxu0 0.0
      %1541 = vmatprep.subr.mxu0 0.0
      %1542 = vmatpush2.msra.mxu0 0.0
      %1543 = vmatprep.subr.mxu0 0.0
      %1544 = vmatpush2.msra.mxu0 0.0
      %1545 = vmatprep.subr.mxu0 0.0
      %1546 = vmatpush2.msra.mxu0 0.0
      %1547 = vmatprep.subr.mxu0 0.0
      %1548 = vmatpush2.msra.mxu0 0.0
      %1549 = vmatprep.subr.mxu0 0.0
      %1550 = vmatpush2.msra.mxu0 0.0
      %1551 = vmatprep.subr.mxu0 0.0
      %1552 = vmatpush2.msra.mxu0 0.0
      %1553 = vmatprep.subr.mxu0 0.0
      %1554 = vmatpush2.msra.mxu0 0.0
      %1555 = vmatprep.subr.mxu0 0.0
      %1556 = vmatpush2.msra.mxu0 0.0
      %1557 = vmatprep.mubr.f32.mxu0 0.0
      %1558 = vmatmul.mubr.f32.gmra.mxu0 %v1398
      %v1559 = vpop.f32.mrf.mxu0
      %v1560 = vadd.f32 %v1394, %v1559
      %v1561 = vpop.f32.mrf.mxu0
      %1562 = vmatprep.mubr.f32.mxu0 0.0
      %1563 = vmatmul.mubr.f32.gmra.mxu0 %v1401
      %v1564 = vpop.f32.mrf.mxu0
      %v1565 = vadd.f32 %v1394, %v1564
      %v1566 = vpop.f32.mrf.mxu0
      %1567 = vmatprep.mubr.f32.mxu0 0.0
      %1568 = vmatmul.mubr.f32.gmra.mxu0 %v1404
      %v1569 = vpop.f32.mrf.mxu0
      %v1570 = vadd.f32 %v1394, %v1569
      %v1571 = vpop.f32.mrf.mxu0
      %1572 = vmatprep.mubr.f32.mxu0 0.0
      %1573 = vmatmul.mubr.f32.gmra.mxu0 %v1407
      %v1574 = vpop.f32.mrf.mxu0
      %v1575 = vadd.f32 %v1394, %v1574
      %v1576 = vpop.f32.mrf.mxu0
      %1577 = vmatprep.mubr.f32.mxu0 0.0
      %1578 = vmatmul.mubr.f32.gmra.mxu0 %v1410
      %v1579 = vpop.f32.mrf.mxu0
      %v1580 = vadd.f32 %v1394, %v1579
      %v1581 = vpop.f32.mrf.mxu0
      %1582 = vmatprep.mubr.f32.mxu0 0.0
      %1583 = vmatmul.mubr.f32.gmra.mxu0 %v1413
      %v1584 = vpop.f32.mrf.mxu0
      %v1585 = vadd.f32 %v1394, %v1584
      %v1586 = vpop.f32.mrf.mxu0
      %1587 = vmatprep.mubr.f32.mxu0 0.0
      %1588 = vmatmul.mubr.f32.gmra.mxu0 %v1416
      %v1589 = vpop.f32.mrf.mxu0
      %v1590 = vadd.f32 %v1394, %v1589
      %v1591 = vpop.f32.mrf.mxu0
      %1592 = vmatprep.mubr.f32.mxu0 0.0
      %1593 = vmatmul.mubr.f32.gmra.mxu0 %v1419
      %v1594 = vpop.f32.mrf.mxu0
      %v1595 = vadd.f32 %v1394, %v1594
      %v1596 = vpop.f32.mrf.mxu0
      %1597 = vmatprep.mubr.f32.mxu0 0.0
      %1598 = vmatmul.mubr.f32.gmra.mxu0 %v1422
      %v1599 = vpop.f32.mrf.mxu0
      %v1600 = vadd.f32 %v1394, %v1599
      %v1601 = vpop.f32.mrf.mxu0
      %1602 = vmatprep.mubr.f32.mxu0 0.0
      %1603 = vmatmul.mubr.f32.gmra.mxu0 %v1425
      %v1604 = vpop.f32.mrf.mxu0
      %v1605 = vadd.f32 %v1394, %v1604
      %v1606 = vpop.f32.mrf.mxu0
      %1607 = vmatprep.mubr.f32.mxu0 0.0
      %1608 = vmatmul.mubr.f32.gmra.mxu0 %v1428
      %v1609 = vpop.f32.mrf.mxu0
      %v1610 = vadd.f32 %v1394, %v1609
      %v1611 = vpop.f32.mrf.mxu0
      %1612 = vmatprep.mubr.f32.mxu0 0.0
      %1613 = vmatmul.mubr.f32.gmra.mxu0 %v1431
      %v1614 = vpop.f32.mrf.mxu0
      %v1615 = vadd.f32 %v1394, %v1614
      %v1616 = vpop.f32.mrf.mxu0
      %1617 = vmatprep.mubr.f32.mxu0 0.0
      %1618 = vmatmul.mubr.f32.gmra.mxu0 %v1434
      %v1619 = vpop.f32.mrf.mxu0
      %v1620 = vadd.f32 %v1394, %v1619
      %v1621 = vpop.f32.mrf.mxu0
      %1622 = vmatprep.mubr.f32.mxu0 0.0
      %1623 = vmatmul.mubr.f32.gmra.mxu0 %v1437
      %v1624 = vpop.f32.mrf.mxu0
      %v1625 = vadd.f32 %v1394, %v1624
      %v1626 = vpop.f32.mrf.mxu0
      %1627 = vmatprep.mubr.f32.mxu0 0.0
      %1628 = vmatmul.mubr.f32.gmra.mxu0 %v1440
      %v1629 = vpop.f32.mrf.mxu0
      %v1630 = vadd.f32 %v1394, %v1629
      %v1631 = vpop.f32.mrf.mxu0
      %1632 = vmatprep.mubr.f32.mxu0 0.0
      %1633 = vmatmul.mubr.f32.gmra.mxu0 %v1443
      %v1634 = vpop.f32.mrf.mxu0
      %v1635 = vadd.f32 %v1394, %v1634
      %v1636 = vpop.f32.mrf.mxu0
      %1637 = vmatprep.mubr.f32.mxu0 0.0
      %1638 = vmatmul.mubr.f32.gmra.mxu0 %v1446
      %v1639 = vpop.f32.mrf.mxu0
      %v1640 = vadd.f32 %v1394, %v1639
      %v1641 = vpop.f32.mrf.mxu0
      %1642 = vmatprep.mubr.f32.mxu0 0.0
      %1643 = vmatmul.mubr.f32.gmra.mxu0 %v1449
      %v1644 = vpop.f32.mrf.mxu0
      %v1645 = vadd.f32 %v1394, %v1644
      %v1646 = vpop.f32.mrf.mxu0
      %1647 = vmatprep.mubr.f32.mxu0 0.0
      %1648 = vmatmul.mubr.f32.gmra.mxu0 %v1452
      %v1649 = vpop.f32.mrf.mxu0
      %v1650 = vadd.f32 %v1394, %v1649
      %v1651 = vpop.f32.mrf.mxu0
      %1652 = vmatprep.mubr.f32.mxu0 0.0
      %1653 = vmatmul.mubr.f32.gmra.mxu0 %v1455
      %v1654 = vpop.f32.mrf.mxu0
      %v1655 = vadd.f32 %v1394, %v1654
      %v1656 = vpop.f32.mrf.mxu0
      %1657 = vmatprep.mubr.f32.mxu0 0.0
      %1658 = vmatmul.mubr.f32.gmra.mxu0 %v1458
      %v1659 = vpop.f32.mrf.mxu0
      %v1660 = vadd.f32 %v1394, %v1659
      %v1661 = vpop.f32.mrf.mxu0
      %1662 = vmatprep.mubr.f32.mxu0 0.0
      %1663 = vmatmul.mubr.f32.gmra.mxu0 %v1461
      %v1664 = vpop.f32.mrf.mxu0
      %v1665 = vadd.f32 %v1394, %v1664
      %v1666 = vpop.f32.mrf.mxu0
      %1667 = vmatprep.mubr.f32.mxu0 0.0
      %1668 = vmatmul.mubr.f32.gmra.mxu0 %v1464
      %v1669 = vpop.f32.mrf.mxu0
      %v1670 = vadd.f32 %v1394, %v1669
      %v1671 = vpop.f32.mrf.mxu0
      %1672 = vmatprep.mubr.f32.mxu0 0.0
      %1673 = vmatmul.mubr.f32.gmra.mxu0 %v1467
      %v1674 = vpop.f32.mrf.mxu0
      %v1675 = vadd.f32 %v1394, %v1674
      %v1676 = vpop.f32.mrf.mxu0
      %1677 = vmatprep.mubr.f32.mxu0 0.0
      %1678 = vmatmul.mubr.f32.gmra.mxu0 %v1470
      %v1679 = vpop.f32.mrf.mxu0
      %v1680 = vadd.f32 %v1394, %v1679
      %v1681 = vpop.f32.mrf.mxu0
      %1682 = vmatprep.mubr.f32.mxu0 0.0
      %1683 = vmatmul.mubr.f32.gmra.mxu0 %v1473
      %v1684 = vpop.f32.mrf.mxu0
      %v1685 = vadd.f32 %v1394, %v1684
      %v1686 = vpop.f32.mrf.mxu0
      %1687 = vmatprep.mubr.f32.mxu0 0.0
      %1688 = vmatmul.mubr.f32.gmra.mxu0 %v1476
      %v1689 = vpop.f32.mrf.mxu0
      %v1690 = vadd.f32 %v1394, %v1689
      %v1691 = vpop.f32.mrf.mxu0
      %1692 = vmatprep.mubr.f32.mxu0 0.0
      %1693 = vmatmul.mubr.f32.gmra.mxu0 %v1479
      %v1694 = vpop.f32.mrf.mxu0
      %v1695 = vadd.f32 %v1394, %v1694
      %v1696 = vpop.f32.mrf.mxu0
      %1697 = vmatprep.mubr.f32.mxu0 0.0
      %1698 = vmatmul.mubr.f32.gmra.mxu0 %v1482
      %v1699 = vpop.f32.mrf.mxu0
      %v1700 = vadd.f32 %v1394, %v1699
      %v1701 = vpop.f32.mrf.mxu0
      %1702 = vmatprep.mubr.f32.mxu0 0.0
      %1703 = vmatmul.mubr.f32.gmra.mxu0 %v1485
      %v1704 = vpop.f32.mrf.mxu0
      %v1705 = vadd.f32 %v1394, %v1704
      %v1706 = vpop.f32.mrf.mxu0
      %1707 = vmatprep.mubr.f32.mxu0 0.0
      %1708 = vmatmul.mubr.f32.gmra.mxu0 %v1488
      %v1709 = vpop.f32.mrf.mxu0
      %v1710 = vadd.f32 %v1394, %v1709
      %v1711 = vpop.f32.mrf.mxu0
      %1712 = vmatprep.mubr.f32.mxu0 0.0
      %1713 = vmatmul.mubr.f32.gmra.mxu0 %v1491
      %v1714 = vpop.f32.mrf.mxu0
      %v1715 = vadd.f32 %v1394, %v1714
      %v1716 = vpop.f32.mrf.mxu0
      %1717 = vdwg.mxu0
      %vm1718 = vcmp.gt.f32.partialorder %v1560, 0.0
      %vm1719 = vcmp.gt.f32.partialorder %v1565, 0.0
      %vm1720 = vcmp.gt.f32.partialorder %v1570, 0.0
      %vm1721 = vcmp.gt.f32.partialorder %v1575, 0.0
      %vm1722 = vcmp.gt.f32.partialorder %v1580, 0.0
      %vm1723 = vcmp.gt.f32.partialorder %v1585, 0.0
      %vm1724 = vcmp.gt.f32.partialorder %v1590, 0.0
      %vm1725 = vcmp.gt.f32.partialorder %v1595, 0.0
      %vm1726 = vcmp.gt.f32.partialorder %v1600, 0.0
      %vm1727 = vcmp.gt.f32.partialorder %v1605, 0.0
      %vm1728 = vcmp.gt.f32.partialorder %v1610, 0.0
      %vm1729 = vcmp.gt.f32.partialorder %v1615, 0.0
      %vm1730 = vcmp.gt.f32.partialorder %v1620, 0.0
      %vm1731 = vcmp.gt.f32.partialorder %v1625, 0.0
      %vm1732 = vcmp.gt.f32.partialorder %v1630, 0.0
      %vm1733 = vcmp.gt.f32.partialorder %v1635, 0.0
      %vm1734 = vcmp.gt.f32.partialorder %v1640, 0.0
      %vm1735 = vcmp.gt.f32.partialorder %v1645, 0.0
      %vm1736 = vcmp.gt.f32.partialorder %v1650, 0.0
      %vm1737 = vcmp.gt.f32.partialorder %v1655, 0.0
      %vm1738 = vcmp.gt.f32.partialorder %v1660, 0.0
      %vm1739 = vcmp.gt.f32.partialorder %v1665, 0.0
      %vm1740 = vcmp.gt.f32.partialorder %v1670, 0.0
      %vm1741 = vcmp.gt.f32.partialorder %v1675, 0.0
      %vm1742 = vcmp.gt.f32.partialorder %v1680, 0.0
      %vm1743 = vcmp.gt.f32.partialorder %v1685, 0.0
      %vm1744 = vcmp.gt.f32.partialorder %v1690, 0.0
      %vm1745 = vcmp.gt.f32.partialorder %v1695, 0.0
      %vm1746 = vcmp.gt.f32.partialorder %v1700, 0.0
      %vm1747 = vcmp.gt.f32.partialorder %v1705, 0.0
      %vm1748 = vcmp.gt.f32.partialorder %v1710, 0.0
      %vm1749 = vcmp.gt.f32.partialorder %v1715, 0.0
      %v1750 = vmul.f32 %v1560, 1.442695
      %v1751 = vpow.pop %v1750
      %v1752 = vmul.f32 %v1565, 1.442695
      %v1753 = vpow.pop %v1752
      %v1754 = vmul.f32 %v1570, 1.442695
      %v1755 = vpow.pop %v1754
      %v1756 = vmul.f32 %v1575, 1.442695
      %v1757 = vpow.pop %v1756
      %v1758 = vmul.f32 %v1580, 1.442695
      %v1759 = vpow.pop %v1758
      %v1760 = vmul.f32 %v1585, 1.442695
      %v1761 = vpow.pop %v1760
      %v1762 = vmul.f32 %v1590, 1.442695
      %v1763 = vpow.pop %v1762
      %v1764 = vmul.f32 %v1595, 1.442695
      %v1765 = vpow.pop %v1764
      %v1766 = vmul.f32 %v1600, 1.442695
      %v1767 = vpow.pop %v1766
      %v1768 = vmul.f32 %v1605, 1.442695
      %v1769 = vpow.pop %v1768
      %v1770 = vmul.f32 %v1610, 1.442695
      %v1771 = vpow.pop %v1770
      %v1772 = vmul.f32 %v1615, 1.442695
      %v1773 = vpow.pop %v1772
      %v1774 = vmul.f32 %v1620, 1.442695
      %v1775 = vpow.pop %v1774
      %v1776 = vmul.f32 %v1625, 1.442695
      %v1777 = vpow.pop %v1776
      %v1778 = vmul.f32 %v1630, 1.442695
      %v1779 = vpow.pop %v1778
      %v1780 = vmul.f32 %v1635, 1.442695
      %v1781 = vpow.pop %v1780
      %v1782 = vmul.f32 %v1640, 1.442695
      %v1783 = vpow.pop %v1782
      %v1784 = vmul.f32 %v1645, 1.442695
      %v1785 = vpow.pop %v1784
      %v1786 = vmul.f32 %v1650, 1.442695
      %v1787 = vpow.pop %v1786
      %v1788 = vmul.f32 %v1655, 1.442695
      %v1789 = vpow.pop %v1788
      %v1790 = vmul.f32 %v1660, 1.442695
      %v1791 = vpow.pop %v1790
      %v1792 = vmul.f32 %v1665, 1.442695
      %v1793 = vpow.pop %v1792
      %v1794 = vmul.f32 %v1670, 1.442695
      %v1795 = vpow.pop %v1794
      %v1796 = vmul.f32 %v1675, 1.442695
      %v1797 = vpow.pop %v1796
      %v1798 = vmul.f32 %v1680, 1.442695
      %v1799 = vpow.pop %v1798
      %v1800 = vmul.f32 %v1685, 1.442695
      %v1801 = vpow.pop %v1800
      %v1802 = vmul.f32 %v1690, 1.442695
      %v1803 = vpow.pop %v1802
      %v1804 = vmul.f32 %v1695, 1.442695
      %v1805 = vpow.pop %v1804
      %v1806 = vmul.f32 %v1700, 1.442695
      %v1807 = vpow.pop %v1806
      %v1808 = vmul.f32 %v1705, 1.442695
      %v1809 = vpow.pop %v1808
      %v1810 = vmul.f32 %v1710, 1.442695
      %v1811 = vpow.pop %v1810
      %v1812 = vmul.f32 %v1715, 1.442695
      %v1813 = vpow.pop %v1812
      %v1814 = vsub.f32 %v1751, 1.0
      %v1815 = vsub.f32 %v1753, 1.0
      %v1816 = vsub.f32 %v1755, 1.0
      %v1817 = vsub.f32 %v1757, 1.0
      %v1818 = vsub.f32 %v1759, 1.0
      %v1819 = vsub.f32 %v1761, 1.0
      %v1820 = vsub.f32 %v1763, 1.0
      %v1821 = vsub.f32 %v1765, 1.0
      %v1822 = vsub.f32 %v1767, 1.0
      %v1823 = vsub.f32 %v1769, 1.0
      %v1824 = vsub.f32 %v1771, 1.0
      %v1825 = vsub.f32 %v1773, 1.0
      %v1826 = vsub.f32 %v1775, 1.0
      %v1827 = vsub.f32 %v1777, 1.0
      %v1828 = vsub.f32 %v1779, 1.0
      %v1829 = vsub.f32 %v1781, 1.0
      %v1830 = vsub.f32 %v1783, 1.0
      %v1831 = vsub.f32 %v1785, 1.0
      %v1832 = vsub.f32 %v1787, 1.0
      %v1833 = vsub.f32 %v1789, 1.0
      %v1834 = vsub.f32 %v1791, 1.0
      %v1835 = vsub.f32 %v1793, 1.0
      %v1836 = vsub.f32 %v1795, 1.0
      %v1837 = vsub.f32 %v1797, 1.0
      %v1838 = vsub.f32 %v1799, 1.0
      %v1839 = vsub.f32 %v1801, 1.0
      %v1840 = vsub.f32 %v1803, 1.0
      %v1841 = vsub.f32 %v1805, 1.0
      %v1842 = vsub.f32 %v1807, 1.0
      %v1843 = vsub.f32 %v1809, 1.0
      %v1844 = vsub.f32 %v1811, 1.0
      %v1845 = vsub.f32 %v1813, 1.0
      %v1846 = vmul.f32 %v1814, 1.6732632
      %v1847 = vmul.f32 %v1815, 1.6732632
      %v1848 = vmul.f32 %v1816, 1.6732632
      %v1849 = vmul.f32 %v1817, 1.6732632
      %v1850 = vmul.f32 %v1818, 1.6732632
      %v1851 = vmul.f32 %v1819, 1.6732632
      %v1852 = vmul.f32 %v1820, 1.6732632
      %v1853 = vmul.f32 %v1821, 1.6732632
      %v1854 = vmul.f32 %v1822, 1.6732632
      %v1855 = vmul.f32 %v1823, 1.6732632
      %v1856 = vmul.f32 %v1824, 1.6732632
      %v1857 = vmul.f32 %v1825, 1.6732632
      %v1858 = vmul.f32 %v1826, 1.6732632
      %v1859 = vmul.f32 %v1827, 1.6732632
      %v1860 = vmul.f32 %v1828, 1.6732632
      %v1861 = vmul.f32 %v1829, 1.6732632
      %v1862 = vmul.f32 %v1830, 1.6732632
      %v1863 = vmul.f32 %v1831, 1.6732632
      %v1864 = vmul.f32 %v1832, 1.6732632
      %v1865 = vmul.f32 %v1833, 1.6732632
      %v1866 = vmul.f32 %v1834, 1.6732632
      %v1867 = vmul.f32 %v1835, 1.6732632
      %v1868 = vmul.f32 %v1836, 1.6732632
      %v1869 = vmul.f32 %v1837, 1.6732632
      %v1870 = vmul.f32 %v1838, 1.6732632
      %v1871 = vmul.f32 %v1839, 1.6732632
      %v1872 = vmul.f32 %v1840, 1.6732632
      %v1873 = vmul.f32 %v1841, 1.6732632
      %v1874 = vmul.f32 %v1842, 1.6732632
      %v1875 = vmul.f32 %v1843, 1.6732632
      %v1876 = vmul.f32 %v1844, 1.6732632
      %v1877 = vmul.f32 %v1845, 1.6732632
      %v1878 = vsel %vm1718, %v1560, %v1846
      %v1879 = vsel %vm1719, %v1565, %v1847
      %v1880 = vsel %vm1720, %v1570, %v1848
      %v1881 = vsel %vm1721, %v1575, %v1849
      %v1882 = vsel %vm1722, %v1580, %v1850
      %v1883 = vsel %vm1723, %v1585, %v1851
      %v1884 = vsel %vm1724, %v1590, %v1852
      %v1885 = vsel %vm1725, %v1595, %v1853
      %v1886 = vsel %vm1726, %v1600, %v1854
      %v1887 = vsel %vm1727, %v1605, %v1855
      %v1888 = vsel %vm1728, %v1610, %v1856
      %v1889 = vsel %vm1729, %v1615, %v1857
      %v1890 = vsel %vm1730, %v1620, %v1858
      %v1891 = vsel %vm1731, %v1625, %v1859
      %v1892 = vsel %vm1732, %v1630, %v1860
      %v1893 = vsel %vm1733, %v1635, %v1861
      %v1894 = vsel %vm1734, %v1640, %v1862
      %v1895 = vsel %vm1735, %v1645, %v1863
      %v1896 = vsel %vm1736, %v1650, %v1864
      %v1897 = vsel %vm1737, %v1655, %v1865
      %v1898 = vsel %vm1738, %v1660, %v1866
      %v1899 = vsel %vm1739, %v1665, %v1867
      %v1900 = vsel %vm1740, %v1670, %v1868
      %v1901 = vsel %vm1741, %v1675, %v1869
      %v1902 = vsel %vm1742, %v1680, %v1870
      %v1903 = vsel %vm1743, %v1685, %v1871
      %v1904 = vsel %vm1744, %v1690, %v1872
      %v1905 = vsel %vm1745, %v1695, %v1873
      %v1906 = vsel %vm1746, %v1700, %v1874
      %v1907 = vsel %vm1747, %v1705, %v1875
      %v1908 = vsel %vm1748, %v1710, %v1876
      %v1909 = vsel %vm1749, %v1715, %v1877
      %v1910 = vmul.f32 %v1878, 1.050701
      %v1911 = vmul.f32 %v1879, 1.050701
      %v1912 = vmul.f32 %v1880, 1.050701
      %v1913 = vmul.f32 %v1881, 1.050701
      %v1914 = vmul.f32 %v1882, 1.050701
      %v1915 = vmul.f32 %v1883, 1.050701
      %v1916 = vmul.f32 %v1884, 1.050701
      %v1917 = vmul.f32 %v1885, 1.050701
      %v1918 = vmul.f32 %v1886, 1.050701
      %v1919 = vmul.f32 %v1887, 1.050701
      %v1920 = vmul.f32 %v1888, 1.050701
      %v1921 = vmul.f32 %v1889, 1.050701
      %v1922 = vmul.f32 %v1890, 1.050701
      %v1923 = vmul.f32 %v1891, 1.050701
      %v1924 = vmul.f32 %v1892, 1.050701
      %v1925 = vmul.f32 %v1893, 1.050701
      %v1926 = vmul.f32 %v1894, 1.050701
      %v1927 = vmul.f32 %v1895, 1.050701
      %v1928 = vmul.f32 %v1896, 1.050701
      %v1929 = vmul.f32 %v1897, 1.050701
      %v1930 = vmul.f32 %v1898, 1.050701
      %v1931 = vmul.f32 %v1899, 1.050701
      %v1932 = vmul.f32 %v1900, 1.050701
      %v1933 = vmul.f32 %v1901, 1.050701
      %v1934 = vmul.f32 %v1902, 1.050701
      %v1935 = vmul.f32 %v1903, 1.050701
      %v1936 = vmul.f32 %v1904, 1.050701
      %v1937 = vmul.f32 %v1905, 1.050701
      %v1938 = vmul.f32 %v1906, 1.050701
      %v1939 = vmul.f32 %v1907, 1.050701
      %v1940 = vmul.f32 %v1908, 1.050701
      %v1941 = vmul.f32 %v1909, 1.050701
      %v1942 = vld [vmem:[%s8] sm:$0xff]
      %v1943 = vld [vmem:[%s8 + $0x8] sm:$0xff]
      %v1944 = vld [vmem:[%s8 + $0x10] sm:$0xff]
      %v1945 = vld [vmem:[%s8 + $0x18] sm:$0xff]
      %v1946 = vld [vmem:[%s8 + $0x20] sm:$0xff]
      %v1947 = vld [vmem:[%s8 + $0x28] sm:$0xff]
      %v1948 = vld [vmem:[%s8 + $0x30] sm:$0xff]
      %v1949 = vld [vmem:[%s8 + $0x38] sm:$0xff]
      %v1950 = vld [vmem:[%s9] sm:$0x1]
      %v1952 = vlaneseq
      %v1953 = vshrl.u32 %v1952, 7
      %v1954 = vsub.s32 0, %v1953
      %v1955 = vrot.slane %v1950, %v1954
      %v1958 = vsel %vm1396, %v1910, 0
      %v1961 = vsel %vm1396, %v1911, 0
      %v1964 = vsel %vm1396, %v1912, 0
      %v1967 = vsel %vm1396, %v1913, 0
      %v1970 = vsel %vm1396, %v1914, 0
      %v1973 = vsel %vm1396, %v1915, 0
      %v1976 = vsel %vm1396, %v1916, 0
      %v1979 = vsel %vm1396, %v1917, 0
      %v1982 = vsel %vm1396, %v1918, 0
      %v1985 = vsel %vm1396, %v1919, 0
      %v1988 = vsel %vm1396, %v1920, 0
      %v1991 = vsel %vm1396, %v1921, 0
      %v1994 = vsel %vm1396, %v1922, 0
      %v1997 = vsel %vm1396, %v1923, 0
      %v2000 = vsel %vm1396, %v1924, 0
      %v2003 = vsel %vm1396, %v1925, 0
      %v2006 = vsel %vm1396, %v1926, 0
      %v2009 = vsel %vm1396, %v1927, 0
      %v2012 = vsel %vm1396, %v1928, 0
      %v2015 = vsel %vm1396, %v1929, 0
      %v2018 = vsel %vm1396, %v1930, 0
      %v2021 = vsel %vm1396, %v1931, 0
      %v2024 = vsel %vm1396, %v1932, 0
      %v2027 = vsel %vm1396, %v1933, 0
      %v2030 = vsel %vm1396, %v1934, 0
      %v2033 = vsel %vm1396, %v1935, 0
      %v2036 = vsel %vm1396, %v1936, 0
      %v2039 = vsel %vm1396, %v1937, 0
      %v2042 = vsel %vm1396, %v1938, 0
      %v2045 = vsel %vm1396, %v1939, 0
      %v2048 = vsel %vm1396, %v1940, 0
      %v2051 = vsel %vm1396, %v1941, 0
      %2053 = vmatprep.subr.mxu0 0.0
      %2054 = vmatpush1.msra.mxu0 0.0
      %2055 = vmatprep.subr.mxu0 0.0
      %2056 = vmatpush1.msra.mxu0 0.0
      %2057 = vmatprep.subr.mxu0 0.0
      %2058 = vmatpush1.msra.mxu0 0.0
      %2059 = vmatprep.subr.mxu0 0.0
      %2060 = vmatpush1.msra.mxu0 0.0
      %2061 = vmatprep.subr.mxu0 0.0
      %2062 = vmatpush1.msra.mxu0 0.0
      %2063 = vmatprep.subr.mxu0 0.0
      %2064 = vmatpush1.msra.mxu0 0.0
      %2065 = vmatprep.subr.mxu0 0.0
      %2066 = vmatpush1.msra.mxu0 0.0
      %2067 = vmatprep.subr.mxu0 0.0
      %2068 = vmatpush1.msra.mxu0 0.0
      %2069 = vmatprep.subr.mxu0 0.0
      %2070 = vmatpush1.msra.mxu0 %v1949
      %2071 = vmatprep.subr.mxu0 0.0
      %2072 = vmatpush1.msra.mxu0 %v1948
      %2073 = vmatprep.subr.mxu0 0.0
      %2074 = vmatpush1.msra.mxu0 %v1947
      %2075 = vmatprep.subr.mxu0 0.0
      %2076 = vmatpush1.msra.mxu0 %v1946
      %2077 = vmatprep.subr.mxu0 0.0
      %2078 = vmatpush1.msra.mxu0 %v1945
      %2079 = vmatprep.subr.mxu0 0.0
      %2080 = vmatpush1.msra.mxu0 %v1944
      %2081 = vmatprep.subr.mxu0 0.0
      %2082 = vmatpush1.msra.mxu0 %v1943
      %2083 = vmatprep.subr.mxu0 0.0
      %2084 = vmatpush1.msra.mxu0 %v1942
      %2085 = vmatprep.subr.mxu0 0.0
      %2086 = vmatpush2.msra.mxu0 0.0
      %2087 = vmatprep.subr.mxu0 0.0
      %2088 = vmatpush2.msra.mxu0 0.0
      %2089 = vmatprep.subr.mxu0 0.0
      %2090 = vmatpush2.msra.mxu0 0.0
      %2091 = vmatprep.subr.mxu0 0.0
      %2092 = vmatpush2.msra.mxu0 0.0
      %2093 = vmatprep.subr.mxu0 0.0
      %2094 = vmatpush2.msra.mxu0 0.0
      %2095 = vmatprep.subr.mxu0 0.0
      %2096 = vmatpush2.msra.mxu0 0.0
      %2097 = vmatprep.subr.mxu0 0.0
      %2098 = vmatpush2.msra.mxu0 0.0
      %2099 = vmatprep.subr.mxu0 0.0
      %2100 = vmatpush2.msra.mxu0 0.0
      %2101 = vmatprep.subr.mxu0 0.0
      %2102 = vmatpush2.msra.mxu0 0.0
      %2103 = vmatprep.subr.mxu0 0.0
      %2104 = vmatpush2.msra.mxu0 0.0
      %2105 = vmatprep.subr.mxu0 0.0
      %2106 = vmatpush2.msra.mxu0 0.0
      %2107 = vmatprep.subr.mxu0 0.0
      %2108 = vmatpush2.msra.mxu0 0.0
      %2109 = vmatprep.subr.mxu0 0.0
      %2110 = vmatpush2.msra.mxu0 0.0
      %2111 = vmatprep.subr.mxu0 0.0
      %2112 = vmatpush2.msra.mxu0 0.0
      %2113 = vmatprep.subr.mxu0 0.0
      %2114 = vmatpush2.msra.mxu0 0.0
      %2115 = vmatprep.subr.mxu0 0.0
      %2116 = vmatpush2.msra.mxu0 0.0
      %2117 = vmatprep.mubr.f32.mxu0 0.0
      %2118 = vmatmul.mubr.f32.gmra.mxu0 %v1958
      %v2119 = vpop.f32.mrf.mxu0
      %v2120 = vadd.f32 %v1955, %v2119
      %v2121 = vpop.f32.mrf.mxu0
      %2122 = vmatprep.mubr.f32.mxu0 0.0
      %2123 = vmatmul.mubr.f32.gmra.mxu0 %v1961
      %v2124 = vpop.f32.mrf.mxu0
      %v2125 = vadd.f32 %v1955, %v2124
      %v2126 = vpop.f32.mrf.mxu0
      %2127 = vmatprep.mubr.f32.mxu0 0.0
      %2128 = vmatmul.mubr.f32.gmra.mxu0 %v1964
      %v2129 = vpop.f32.mrf.mxu0
      %v2130 = vadd.f32 %v1955, %v2129
      %v2131 = vpop.f32.mrf.mxu0
      %2132 = vmatprep.mubr.f32.mxu0 0.0
      %2133 = vmatmul.mubr.f32.gmra.mxu0 %v1967
      %v2134 = vpop.f32.mrf.mxu0
      %v2135 = vadd.f32 %v1955, %v2134
      %v2136 = vpop.f32.mrf.mxu0
      %2137 = vmatprep.mubr.f32.mxu0 0.0
      %2138 = vmatmul.mubr.f32.gmra.mxu0 %v1970
      %v2139 = vpop.f32.mrf.mxu0
      %v2140 = vadd.f32 %v1955, %v2139
      %v2141 = vpop.f32.mrf.mxu0
      %2142 = vmatprep.mubr.f32.mxu0 0.0
      %2143 = vmatmul.mubr.f32.gmra.mxu0 %v1973
      %v2144 = vpop.f32.mrf.mxu0
      %v2145 = vadd.f32 %v1955, %v2144
      %v2146 = vpop.f32.mrf.mxu0
      %2147 = vmatprep.mubr.f32.mxu0 0.0
      %2148 = vmatmul.mubr.f32.gmra.mxu0 %v1976
      %v2149 = vpop.f32.mrf.mxu0
      %v2150 = vadd.f32 %v1955, %v2149
      %v2151 = vpop.f32.mrf.mxu0
      %2152 = vmatprep.mubr.f32.mxu0 0.0
      %2153 = vmatmul.mubr.f32.gmra.mxu0 %v1979
      %v2154 = vpop.f32.mrf.mxu0
      %v2155 = vadd.f32 %v1955, %v2154
      %v2156 = vpop.f32.mrf.mxu0
      %2157 = vmatprep.mubr.f32.mxu0 0.0
      %2158 = vmatmul.mubr.f32.gmra.mxu0 %v1982
      %v2159 = vpop.f32.mrf.mxu0
      %v2160 = vadd.f32 %v1955, %v2159
      %v2161 = vpop.f32.mrf.mxu0
      %2162 = vmatprep.mubr.f32.mxu0 0.0
      %2163 = vmatmul.mubr.f32.gmra.mxu0 %v1985
      %v2164 = vpop.f32.mrf.mxu0
      %v2165 = vadd.f32 %v1955, %v2164
      %v2166 = vpop.f32.mrf.mxu0
      %2167 = vmatprep.mubr.f32.mxu0 0.0
      %2168 = vmatmul.mubr.f32.gmra.mxu0 %v1988
      %v2169 = vpop.f32.mrf.mxu0
      %v2170 = vadd.f32 %v1955, %v2169
      %v2171 = vpop.f32.mrf.mxu0
      %2172 = vmatprep.mubr.f32.mxu0 0.0
      %2173 = vmatmul.mubr.f32.gmra.mxu0 %v1991
      %v2174 = vpop.f32.mrf.mxu0
      %v2175 = vadd.f32 %v1955, %v2174
      %v2176 = vpop.f32.mrf.mxu0
      %2177 = vmatprep.mubr.f32.mxu0 0.0
      %2178 = vmatmul.mubr.f32.gmra.mxu0 %v1994
      %v2179 = vpop.f32.mrf.mxu0
      %v2180 = vadd.f32 %v1955, %v2179
      %v2181 = vpop.f32.mrf.mxu0
      %2182 = vmatprep.mubr.f32.mxu0 0.0
      %2183 = vmatmul.mubr.f32.gmra.mxu0 %v1997
      %v2184 = vpop.f32.mrf.mxu0
      %v2185 = vadd.f32 %v1955, %v2184
      %v2186 = vpop.f32.mrf.mxu0
      %2187 = vmatprep.mubr.f32.mxu0 0.0
      %2188 = vmatmul.mubr.f32.gmra.mxu0 %v2000
      %v2189 = vpop.f32.mrf.mxu0
      %v2190 = vadd.f32 %v1955, %v2189
      %v2191 = vpop.f32.mrf.mxu0
      %2192 = vmatprep.mubr.f32.mxu0 0.0
      %2193 = vmatmul.mubr.f32.gmra.mxu0 %v2003
      %v2194 = vpop.f32.mrf.mxu0
      %v2195 = vadd.f32 %v1955, %v2194
      %v2196 = vpop.f32.mrf.mxu0
      %2197 = vmatprep.mubr.f32.mxu0 0.0
      %2198 = vmatmul.mubr.f32.gmra.mxu0 %v2006
      %v2199 = vpop.f32.mrf.mxu0
      %v2200 = vadd.f32 %v1955, %v2199
      %v2201 = vpop.f32.mrf.mxu0
      %2202 = vmatprep.mubr.f32.mxu0 0.0
      %2203 = vmatmul.mubr.f32.gmra.mxu0 %v2009
      %v2204 = vpop.f32.mrf.mxu0
      %v2205 = vadd.f32 %v1955, %v2204
      %v2206 = vpop.f32.mrf.mxu0
      %2207 = vmatprep.mubr.f32.mxu0 0.0
      %2208 = vmatmul.mubr.f32.gmra.mxu0 %v2012
      %v2209 = vpop.f32.mrf.mxu0
      %v2210 = vadd.f32 %v1955, %v2209
      %v2211 = vpop.f32.mrf.mxu0
      %2212 = vmatprep.mubr.f32.mxu0 0.0
      %2213 = vmatmul.mubr.f32.gmra.mxu0 %v2015
      %v2214 = vpop.f32.mrf.mxu0
      %v2215 = vadd.f32 %v1955, %v2214
      %v2216 = vpop.f32.mrf.mxu0
      %2217 = vmatprep.mubr.f32.mxu0 0.0
      %2218 = vmatmul.mubr.f32.gmra.mxu0 %v2018
      %v2219 = vpop.f32.mrf.mxu0
      %v2220 = vadd.f32 %v1955, %v2219
      %v2221 = vpop.f32.mrf.mxu0
      %2222 = vmatprep.mubr.f32.mxu0 0.0
      %2223 = vmatmul.mubr.f32.gmra.mxu0 %v2021
      %v2224 = vpop.f32.mrf.mxu0
      %v2225 = vadd.f32 %v1955, %v2224
      %v2226 = vpop.f32.mrf.mxu0
      %2227 = vmatprep.mubr.f32.mxu0 0.0
      %2228 = vmatmul.mubr.f32.gmra.mxu0 %v2024
      %v2229 = vpop.f32.mrf.mxu0
      %v2230 = vadd.f32 %v1955, %v2229
      %v2231 = vpop.f32.mrf.mxu0
      %2232 = vmatprep.mubr.f32.mxu0 0.0
      %2233 = vmatmul.mubr.f32.gmra.mxu0 %v2027
      %v2234 = vpop.f32.mrf.mxu0
      %v2235 = vadd.f32 %v1955, %v2234
      %v2236 = vpop.f32.mrf.mxu0
      %2237 = vmatprep.mubr.f32.mxu0 0.0
      %2238 = vmatmul.mubr.f32.gmra.mxu0 %v2030
      %v2239 = vpop.f32.mrf.mxu0
      %v2240 = vadd.f32 %v1955, %v2239
      %v2241 = vpop.f32.mrf.mxu0
      %2242 = vmatprep.mubr.f32.mxu0 0.0
      %2243 = vmatmul.mubr.f32.gmra.mxu0 %v2033
      %v2244 = vpop.f32.mrf.mxu0
      %v2245 = vadd.f32 %v1955, %v2244
      %v2246 = vpop.f32.mrf.mxu0
      %2247 = vmatprep.mubr.f32.mxu0 0.0
      %2248 = vmatmul.mubr.f32.gmra.mxu0 %v2036
      %v2249 = vpop.f32.mrf.mxu0
      %v2250 = vadd.f32 %v1955, %v2249
      %v2251 = vpop.f32.mrf.mxu0
      %2252 = vmatprep.mubr.f32.mxu0 0.0
      %2253 = vmatmul.mubr.f32.gmra.mxu0 %v2039
      %v2254 = vpop.f32.mrf.mxu0
      %v2255 = vadd.f32 %v1955, %v2254
      %v2256 = vpop.f32.mrf.mxu0
      %2257 = vmatprep.mubr.f32.mxu0 0.0
      %2258 = vmatmul.mubr.f32.gmra.mxu0 %v2042
      %v2259 = vpop.f32.mrf.mxu0
      %v2260 = vadd.f32 %v1955, %v2259
      %v2261 = vpop.f32.mrf.mxu0
      %2262 = vmatprep.mubr.f32.mxu0 0.0
      %2263 = vmatmul.mubr.f32.gmra.mxu0 %v2045
      %v2264 = vpop.f32.mrf.mxu0
      %v2265 = vadd.f32 %v1955, %v2264
      %v2266 = vpop.f32.mrf.mxu0
      %2267 = vmatprep.mubr.f32.mxu0 0.0
      %2268 = vmatmul.mubr.f32.gmra.mxu0 %v2048
      %v2269 = vpop.f32.mrf.mxu0
      %v2270 = vadd.f32 %v1955, %v2269
      %v2271 = vpop.f32.mrf.mxu0
      %2272 = vmatprep.mubr.f32.mxu0 0.0
      %2273 = vmatmul.mubr.f32.gmra.mxu0 %v2051
      %v2274 = vpop.f32.mrf.mxu0
      %v2275 = vadd.f32 %v1955, %v2274
      %v2276 = vpop.f32.mrf.mxu0
      %2277 = vdwg.mxu0
      %vm2278 = vcmp.gt.f32.partialorder %v2120, 0.0
      %vm2279 = vcmp.gt.f32.partialorder %v2125, 0.0
      %vm2280 = vcmp.gt.f32.partialorder %v2130, 0.0
      %vm2281 = vcmp.gt.f32.partialorder %v2135, 0.0
      %vm2282 = vcmp.gt.f32.partialorder %v2140, 0.0
      %vm2283 = vcmp.gt.f32.partialorder %v2145, 0.0
      %vm2284 = vcmp.gt.f32.partialorder %v2150, 0.0
      %vm2285 = vcmp.gt.f32.partialorder %v2155, 0.0
      %vm2286 = vcmp.gt.f32.partialorder %v2160, 0.0
      %vm2287 = vcmp.gt.f32.partialorder %v2165, 0.0
      %vm2288 = vcmp.gt.f32.partialorder %v2170, 0.0
      %vm2289 = vcmp.gt.f32.partialorder %v2175, 0.0
      %vm2290 = vcmp.gt.f32.partialorder %v2180, 0.0
      %vm2291 = vcmp.gt.f32.partialorder %v2185, 0.0
      %vm2292 = vcmp.gt.f32.partialorder %v2190, 0.0
      %vm2293 = vcmp.gt.f32.partialorder %v2195, 0.0
      %vm2294 = vcmp.gt.f32.partialorder %v2200, 0.0
      %vm2295 = vcmp.gt.f32.partialorder %v2205, 0.0
      %vm2296 = vcmp.gt.f32.partialorder %v2210, 0.0
      %vm2297 = vcmp.gt.f32.partialorder %v2215, 0.0
      %vm2298 = vcmp.gt.f32.partialorder %v2220, 0.0
      %vm2299 = vcmp.gt.f32.partialorder %v2225, 0.0
      %vm2300 = vcmp.gt.f32.partialorder %v2230, 0.0
      %vm2301 = vcmp.gt.f32.partialorder %v2235, 0.0
      %vm2302 = vcmp.gt.f32.partialorder %v2240, 0.0
      %vm2303 = vcmp.gt.f32.partialorder %v2245, 0.0
      %vm2304 = vcmp.gt.f32.partialorder %v2250, 0.0
      %vm2305 = vcmp.gt.f32.partialorder %v2255, 0.0
      %vm2306 = vcmp.gt.f32.partialorder %v2260, 0.0
      %vm2307 = vcmp.gt.f32.partialorder %v2265, 0.0
      %vm2308 = vcmp.gt.f32.partialorder %v2270, 0.0
      %vm2309 = vcmp.gt.f32.partialorder %v2275, 0.0
      %v2310 = vmul.f32 %v2120, 1.442695
      %v2311 = vpow.pop %v2310
      %v2312 = vmul.f32 %v2125, 1.442695
      %v2313 = vpow.pop %v2312
      %v2314 = vmul.f32 %v2130, 1.442695
      %v2315 = vpow.pop %v2314
      %v2316 = vmul.f32 %v2135, 1.442695
      %v2317 = vpow.pop %v2316
      %v2318 = vmul.f32 %v2140, 1.442695
      %v2319 = vpow.pop %v2318
      %v2320 = vmul.f32 %v2145, 1.442695
      %v2321 = vpow.pop %v2320
      %v2322 = vmul.f32 %v2150, 1.442695
      %v2323 = vpow.pop %v2322
      %v2324 = vmul.f32 %v2155, 1.442695
      %v2325 = vpow.pop %v2324
      %v2326 = vmul.f32 %v2160, 1.442695
      %v2327 = vpow.pop %v2326
      %v2328 = vmul.f32 %v2165, 1.442695
      %v2329 = vpow.pop %v2328
      %v2330 = vmul.f32 %v2170, 1.442695
      %v2331 = vpow.pop %v2330
      %v2332 = vmul.f32 %v2175, 1.442695
      %v2333 = vpow.pop %v2332
      %v2334 = vmul.f32 %v2180, 1.442695
      %v2335 = vpow.pop %v2334
      %v2336 = vmul.f32 %v2185, 1.442695
      %v2337 = vpow.pop %v2336
      %v2338 = vmul.f32 %v2190, 1.442695
      %v2339 = vpow.pop %v2338
      %v2340 = vmul.f32 %v2195, 1.442695
      %v2341 = vpow.pop %v2340
      %v2342 = vmul.f32 %v2200, 1.442695
      %v2343 = vpow.pop %v2342
      %v2344 = vmul.f32 %v2205, 1.442695
      %v2345 = vpow.pop %v2344
      %v2346 = vmul.f32 %v2210, 1.442695
      %v2347 = vpow.pop %v2346
      %v2348 = vmul.f32 %v2215, 1.442695
      %v2349 = vpow.pop %v2348
      %v2350 = vmul.f32 %v2220, 1.442695
      %v2351 = vpow.pop %v2350
      %v2352 = vmul.f32 %v2225, 1.442695
      %v2353 = vpow.pop %v2352
      %v2354 = vmul.f32 %v2230, 1.442695
      %v2355 = vpow.pop %v2354
      %v2356 = vmul.f32 %v2235, 1.442695
      %v2357 = vpow.pop %v2356
      %v2358 = vmul.f32 %v2240, 1.442695
      %v2359 = vpow.pop %v2358
      %v2360 = vmul.f32 %v2245, 1.442695
      %v2361 = vpow.pop %v2360
      %v2362 = vmul.f32 %v2250, 1.442695
      %v2363 = vpow.pop %v2362
      %v2364 = vmul.f32 %v2255, 1.442695
      %v2365 = vpow.pop %v2364
      %v2366 = vmul.f32 %v2260, 1.442695
      %v2367 = vpow.pop %v2366
      %v2368 = vmul.f32 %v2265, 1.442695
      %v2369 = vpow.pop %v2368
      %v2370 = vmul.f32 %v2270, 1.442695
      %v2371 = vpow.pop %v2370
      %v2372 = vmul.f32 %v2275, 1.442695
      %v2373 = vpow.pop %v2372
      %v2374 = vsub.f32 %v2311, 1.0
      %v2375 = vsub.f32 %v2313, 1.0
      %v2376 = vsub.f32 %v2315, 1.0
      %v2377 = vsub.f32 %v2317, 1.0
      %v2378 = vsub.f32 %v2319, 1.0
      %v2379 = vsub.f32 %v2321, 1.0
      %v2380 = vsub.f32 %v2323, 1.0
      %v2381 = vsub.f32 %v2325, 1.0
      %v2382 = vsub.f32 %v2327, 1.0
      %v2383 = vsub.f32 %v2329, 1.0
      %v2384 = vsub.f32 %v2331, 1.0
      %v2385 = vsub.f32 %v2333, 1.0
      %v2386 = vsub.f32 %v2335, 1.0
      %v2387 = vsub.f32 %v2337, 1.0
      %v2388 = vsub.f32 %v2339, 1.0
      %v2389 = vsub.f32 %v2341, 1.0
      %v2390 = vsub.f32 %v2343, 1.0
      %v2391 = vsub.f32 %v2345, 1.0
      %v2392 = vsub.f32 %v2347, 1.0
      %v2393 = vsub.f32 %v2349, 1.0
      %v2394 = vsub.f32 %v2351, 1.0
      %v2395 = vsub.f32 %v2353, 1.0
      %v2396 = vsub.f32 %v2355, 1.0
      %v2397 = vsub.f32 %v2357, 1.0
      %v2398 = vsub.f32 %v2359, 1.0
      %v2399 = vsub.f32 %v2361, 1.0
      %v2400 = vsub.f32 %v2363, 1.0
      %v2401 = vsub.f32 %v2365, 1.0
      %v2402 = vsub.f32 %v2367, 1.0
      %v2403 = vsub.f32 %v2369, 1.0
      %v2404 = vsub.f32 %v2371, 1.0
      %v2405 = vsub.f32 %v2373, 1.0
      %v2406 = vmul.f32 %v2374, 1.6732632
      %v2407 = vmul.f32 %v2375, 1.6732632
      %v2408 = vmul.f32 %v2376, 1.6732632
      %v2409 = vmul.f32 %v2377, 1.6732632
      %v2410 = vmul.f32 %v2378, 1.6732632
      %v2411 = vmul.f32 %v2379, 1.6732632
      %v2412 = vmul.f32 %v2380, 1.6732632
      %v2413 = vmul.f32 %v2381, 1.6732632
      %v2414 = vmul.f32 %v2382, 1.6732632
      %v2415 = vmul.f32 %v2383, 1.6732632
      %v2416 = vmul.f32 %v2384, 1.6732632
      %v2417 = vmul.f32 %v2385, 1.6732632
      %v2418 = vmul.f32 %v2386, 1.6732632
      %v2419 = vmul.f32 %v2387, 1.6732632
      %v2420 = vmul.f32 %v2388, 1.6732632
      %v2421 = vmul.f32 %v2389, 1.6732632
      %v2422 = vmul.f32 %v2390, 1.6732632
      %v2423 = vmul.f32 %v2391, 1.6732632
      %v2424 = vmul.f32 %v2392, 1.6732632
      %v2425 = vmul.f32 %v2393, 1.6732632
      %v2426 = vmul.f32 %v2394, 1.6732632
      %v2427 = vmul.f32 %v2395, 1.6732632
      %v2428 = vmul.f32 %v2396, 1.6732632
      %v2429 = vmul.f32 %v2397, 1.6732632
      %v2430 = vmul.f32 %v2398, 1.6732632
      %v2431 = vmul.f32 %v2399, 1.6732632
      %v2432 = vmul.f32 %v2400, 1.6732632
      %v2433 = vmul.f32 %v2401, 1.6732632
      %v2434 = vmul.f32 %v2402, 1.6732632
      %v2435 = vmul.f32 %v2403, 1.6732632
      %v2436 = vmul.f32 %v2404, 1.6732632
      %v2437 = vmul.f32 %v2405, 1.6732632
      %v2438 = vsel %vm2278, %v2120, %v2406
      %v2439 = vsel %vm2279, %v2125, %v2407
      %v2440 = vsel %vm2280, %v2130, %v2408
      %v2441 = vsel %vm2281, %v2135, %v2409
      %v2442 = vsel %vm2282, %v2140, %v2410
      %v2443 = vsel %vm2283, %v2145, %v2411
      %v2444 = vsel %vm2284, %v2150, %v2412
      %v2445 = vsel %vm2285, %v2155, %v2413
      %v2446 = vsel %vm2286, %v2160, %v2414
      %v2447 = vsel %vm2287, %v2165, %v2415
      %v2448 = vsel %vm2288, %v2170, %v2416
      %v2449 = vsel %vm2289, %v2175, %v2417
      %v2450 = vsel %vm2290, %v2180, %v2418
      %v2451 = vsel %vm2291, %v2185, %v2419
      %v2452 = vsel %vm2292, %v2190, %v2420
      %v2453 = vsel %vm2293, %v2195, %v2421
      %v2454 = vsel %vm2294, %v2200, %v2422
      %v2455 = vsel %vm2295, %v2205, %v2423
      %v2456 = vsel %vm2296, %v2210, %v2424
      %v2457 = vsel %vm2297, %v2215, %v2425
      %v2458 = vsel %vm2298, %v2220, %v2426
      %v2459 = vsel %vm2299, %v2225, %v2427
      %v2460 = vsel %vm2300, %v2230, %v2428
      %v2461 = vsel %vm2301, %v2235, %v2429
      %v2462 = vsel %vm2302, %v2240, %v2430
      %v2463 = vsel %vm2303, %v2245, %v2431
      %v2464 = vsel %vm2304, %v2250, %v2432
      %v2465 = vsel %vm2305, %v2255, %v2433
      %v2466 = vsel %vm2306, %v2260, %v2434
      %v2467 = vsel %vm2307, %v2265, %v2435
      %v2468 = vsel %vm2308, %v2270, %v2436
      %v2469 = vsel %vm2309, %v2275, %v2437
      %v2470 = vmul.f32 %v2438, 1.050701
      %v2471 = vmul.f32 %v2439, 1.050701
      %v2472 = vmul.f32 %v2440, 1.050701
      %v2473 = vmul.f32 %v2441, 1.050701
      %v2474 = vmul.f32 %v2442, 1.050701
      %v2475 = vmul.f32 %v2443, 1.050701
      %v2476 = vmul.f32 %v2444, 1.050701
      %v2477 = vmul.f32 %v2445, 1.050701
      %v2478 = vmul.f32 %v2446, 1.050701
      %v2479 = vmul.f32 %v2447, 1.050701
      %v2480 = vmul.f32 %v2448, 1.050701
      %v2481 = vmul.f32 %v2449, 1.050701
      %v2482 = vmul.f32 %v2450, 1.050701
      %v2483 = vmul.f32 %v2451, 1.050701
      %v2484 = vmul.f32 %v2452, 1.050701
      %v2485 = vmul.f32 %v2453, 1.050701
      %v2486 = vmul.f32 %v2454, 1.050701
      %v2487 = vmul.f32 %v2455, 1.050701
      %v2488 = vmul.f32 %v2456, 1.050701
      %v2489 = vmul.f32 %v2457, 1.050701
      %v2490 = vmul.f32 %v2458, 1.050701
      %v2491 = vmul.f32 %v2459, 1.050701
      %v2492 = vmul.f32 %v2460, 1.050701
      %v2493 = vmul.f32 %v2461, 1.050701
      %v2494 = vmul.f32 %v2462, 1.050701
      %v2495 = vmul.f32 %v2463, 1.050701
      %v2496 = vmul.f32 %v2464, 1.050701
      %v2497 = vmul.f32 %v2465, 1.050701
      %v2498 = vmul.f32 %v2466, 1.050701
      %v2499 = vmul.f32 %v2467, 1.050701
      %v2500 = vmul.f32 %v2468, 1.050701
      %v2501 = vmul.f32 %v2469, 1.050701
      %v2502 = vld [vmem:[%s399] sm:$0xff]
      %v2503 = vld [vmem:[%s399 + $0x8] sm:$0xff]
      %v2504 = vld [vmem:[%s399 + $0x10] sm:$0xff]
      %v2505 = vld [vmem:[%s399 + $0x18] sm:$0xff]
      %v2506 = vld [vmem:[%s399 + $0x20] sm:$0xff]
      %v2507 = vld [vmem:[%s399 + $0x28] sm:$0xff]
      %v2508 = vld [vmem:[%s399 + $0x30] sm:$0xff]
      %v2509 = vld [vmem:[%s399 + $0x38] sm:$0xff]
      %v2510 = vld [vmem:[%s399 + $0x40] sm:$0xff]
      %v2511 = vld [vmem:[%s399 + $0x48] sm:$0xff]
      %v2512 = vld [vmem:[%s399 + $0x50] sm:$0xff]
      %v2513 = vld [vmem:[%s399 + $0x58] sm:$0xff]
      %v2514 = vld [vmem:[%s399 + $0x60] sm:$0xff]
      %v2515 = vld [vmem:[%s399 + $0x68] sm:$0xff]
      %v2516 = vld [vmem:[%s399 + $0x70] sm:$0xff]
      %v2517 = vld [vmem:[%s399 + $0x78] sm:$0xff]
      %v2518 = vld [vmem:[%s399 + $0x80] sm:$0xff]
      %v2519 = vld [vmem:[%s399 + $0x88] sm:$0xff]
      %v2520 = vld [vmem:[%s399 + $0x90] sm:$0xff]
      %v2521 = vld [vmem:[%s399 + $0x98] sm:$0xff]
      %v2522 = vld [vmem:[%s399 + $0xa0] sm:$0xff]
      %v2523 = vld [vmem:[%s399 + $0xa8] sm:$0xff]
      %v2524 = vld [vmem:[%s399 + $0xb0] sm:$0xff]
      %v2525 = vld [vmem:[%s399 + $0xb8] sm:$0xff]
      %v2526 = vld [vmem:[%s399 + $0xc0] sm:$0xff]
      %v2527 = vld [vmem:[%s399 + $0xc8] sm:$0xff]
      %v2528 = vld [vmem:[%s399 + $0xd0] sm:$0xff]
      %v2529 = vld [vmem:[%s399 + $0xd8] sm:$0xff]
      %v2530 = vld [vmem:[%s399 + $0xe0] sm:$0xff]
      %v2531 = vld [vmem:[%s399 + $0xe8] sm:$0xff]
      %v2532 = vld [vmem:[%s399 + $0xf0] sm:$0xff]
      %v2533 = vld [vmem:[%s399 + $0xf8] sm:$0xff]
      %vm2534 = vcmp.eq.f32.partialorder %v2502, 0.0
      %vm2535 = vcmp.eq.f32.partialorder %v2503, 0.0
      %vm2536 = vcmp.eq.f32.partialorder %v2504, 0.0
      %vm2537 = vcmp.eq.f32.partialorder %v2505, 0.0
      %vm2538 = vcmp.eq.f32.partialorder %v2506, 0.0
      %vm2539 = vcmp.eq.f32.partialorder %v2507, 0.0
      %vm2540 = vcmp.eq.f32.partialorder %v2508, 0.0
      %vm2541 = vcmp.eq.f32.partialorder %v2509, 0.0
      %vm2542 = vcmp.eq.f32.partialorder %v2510, 0.0
      %vm2543 = vcmp.eq.f32.partialorder %v2511, 0.0
      %vm2544 = vcmp.eq.f32.partialorder %v2512, 0.0
      %vm2545 = vcmp.eq.f32.partialorder %v2513, 0.0
      %vm2546 = vcmp.eq.f32.partialorder %v2514, 0.0
      %vm2547 = vcmp.eq.f32.partialorder %v2515, 0.0
      %vm2548 = vcmp.eq.f32.partialorder %v2516, 0.0
      %vm2549 = vcmp.eq.f32.partialorder %v2517, 0.0
      %vm2550 = vcmp.eq.f32.partialorder %v2518, 0.0
      %vm2551 = vcmp.eq.f32.partialorder %v2519, 0.0
      %vm2552 = vcmp.eq.f32.partialorder %v2520, 0.0
      %vm2553 = vcmp.eq.f32.partialorder %v2521, 0.0
      %vm2554 = vcmp.eq.f32.partialorder %v2522, 0.0
      %vm2555 = vcmp.eq.f32.partialorder %v2523, 0.0
      %vm2556 = vcmp.eq.f32.partialorder %v2524, 0.0
      %vm2557 = vcmp.eq.f32.partialorder %v2525, 0.0
      %vm2558 = vcmp.eq.f32.partialorder %v2526, 0.0
      %vm2559 = vcmp.eq.f32.partialorder %v2527, 0.0
      %vm2560 = vcmp.eq.f32.partialorder %v2528, 0.0
      %vm2561 = vcmp.eq.f32.partialorder %v2529, 0.0
      %vm2562 = vcmp.eq.f32.partialorder %v2530, 0.0
      %vm2563 = vcmp.eq.f32.partialorder %v2531, 0.0
      %vm2564 = vcmp.eq.f32.partialorder %v2532, 0.0
      %vm2565 = vcmp.eq.f32.partialorder %v2533, 0.0
      %v2566 = vsel %vm2534, 1, 0
      %v2567 = vsel %vm2535, 1, 0
      %v2568 = vsel %vm2536, 1, 0
      %v2569 = vsel %vm2537, 1, 0
      %v2570 = vsel %vm2538, 1, 0
      %v2571 = vsel %vm2539, 1, 0
      %v2572 = vsel %vm2540, 1, 0
      %v2573 = vsel %vm2541, 1, 0
      %v2574 = vsel %vm2542, 1, 0
      %v2575 = vsel %vm2543, 1, 0
      %v2576 = vsel %vm2544, 1, 0
      %v2577 = vsel %vm2545, 1, 0
      %v2578 = vsel %vm2546, 1, 0
      %v2579 = vsel %vm2547, 1, 0
      %v2580 = vsel %vm2548, 1, 0
      %v2581 = vsel %vm2549, 1, 0
      %v2582 = vsel %vm2550, 1, 0
      %v2583 = vsel %vm2551, 1, 0
      %v2584 = vsel %vm2552, 1, 0
      %v2585 = vsel %vm2553, 1, 0
      %v2586 = vsel %vm2554, 1, 0
      %v2587 = vsel %vm2555, 1, 0
      %v2588 = vsel %vm2556, 1, 0
      %v2589 = vsel %vm2557, 1, 0
      %v2590 = vsel %vm2558, 1, 0
      %v2591 = vsel %vm2559, 1, 0
      %v2592 = vsel %vm2560, 1, 0
      %v2593 = vsel %vm2561, 1, 0
      %v2594 = vsel %vm2562, 1, 0
      %v2595 = vsel %vm2563, 1, 0
      %v2596 = vsel %vm2564, 1, 0
      %v2597 = vsel %vm2565, 1, 0
      %v2598 = vcvt.s32.f32 %v2566
      %v2599 = vcvt.s32.f32 %v2567
      %v2600 = vcvt.s32.f32 %v2568
      %v2601 = vcvt.s32.f32 %v2569
      %v2602 = vcvt.s32.f32 %v2570
      %v2603 = vcvt.s32.f32 %v2571
      %v2604 = vcvt.s32.f32 %v2572
      %v2605 = vcvt.s32.f32 %v2573
      %v2606 = vcvt.s32.f32 %v2574
      %v2607 = vcvt.s32.f32 %v2575
      %v2608 = vcvt.s32.f32 %v2576
      %v2609 = vcvt.s32.f32 %v2577
      %v2610 = vcvt.s32.f32 %v2578
      %v2611 = vcvt.s32.f32 %v2579
      %v2612 = vcvt.s32.f32 %v2580
      %v2613 = vcvt.s32.f32 %v2581
      %v2614 = vcvt.s32.f32 %v2582
      %v2615 = vcvt.s32.f32 %v2583
      %v2616 = vcvt.s32.f32 %v2584
      %v2617 = vcvt.s32.f32 %v2585
      %v2618 = vcvt.s32.f32 %v2586
      %v2619 = vcvt.s32.f32 %v2587
      %v2620 = vcvt.s32.f32 %v2588
      %v2621 = vcvt.s32.f32 %v2589
      %v2622 = vcvt.s32.f32 %v2590
      %v2623 = vcvt.s32.f32 %v2591
      %v2624 = vcvt.s32.f32 %v2592
      %v2625 = vcvt.s32.f32 %v2593
      %v2626 = vcvt.s32.f32 %v2594
      %v2627 = vcvt.s32.f32 %v2595
      %v2628 = vcvt.s32.f32 %v2596
      %v2629 = vcvt.s32.f32 %v2597
      %v2630 = vmul.f32 %v2598, 1000000.0
      %v2631 = vmul.f32 %v2599, 1000000.0
      %v2632 = vmul.f32 %v2600, 1000000.0
      %v2633 = vmul.f32 %v2601, 1000000.0
      %v2634 = vmul.f32 %v2602, 1000000.0
      %v2635 = vmul.f32 %v2603, 1000000.0
      %v2636 = vmul.f32 %v2604, 1000000.0
      %v2637 = vmul.f32 %v2605, 1000000.0
      %v2638 = vmul.f32 %v2606, 1000000.0
      %v2639 = vmul.f32 %v2607, 1000000.0
      %v2640 = vmul.f32 %v2608, 1000000.0
      %v2641 = vmul.f32 %v2609, 1000000.0
      %v2642 = vmul.f32 %v2610, 1000000.0
      %v2643 = vmul.f32 %v2611, 1000000.0
      %v2644 = vmul.f32 %v2612, 1000000.0
      %v2645 = vmul.f32 %v2613, 1000000.0
      %v2646 = vmul.f32 %v2614, 1000000.0
      %v2647 = vmul.f32 %v2615, 1000000.0
      %v2648 = vmul.f32 %v2616, 1000000.0
      %v2649 = vmul.f32 %v2617, 1000000.0
      %v2650 = vmul.f32 %v2618, 1000000.0
      %v2651 = vmul.f32 %v2619, 1000000.0
      %v2652 = vmul.f32 %v2620, 1000000.0
      %v2653 = vmul.f32 %v2621, 1000000.0
      %v2654 = vmul.f32 %v2622, 1000000.0
      %v2655 = vmul.f32 %v2623, 1000000.0
      %v2656 = vmul.f32 %v2624, 1000000.0
      %v2657 = vmul.f32 %v2625, 1000000.0
      %v2658 = vmul.f32 %v2626, 1000000.0
      %v2659 = vmul.f32 %v2627, 1000000.0
      %v2660 = vmul.f32 %v2628, 1000000.0
      %v2661 = vmul.f32 %v2629, 1000000.0
      %2663 = vset.pattern.permute.xlu0 0
      %2664 = vperm.xlu0 %2663, %v2630
      %v2665 = vpop.permute.xlu0 %2664
      %2668 = vset.pattern.permute.xlu0 0
      %2669 = vperm.xlu0 %2668, %v2631
      %v2670 = vpop.permute.xlu0 %2669
      %2673 = vset.pattern.permute.xlu0 0
      %2674 = vperm.xlu0 %2673, %v2632
      %v2675 = vpop.permute.xlu0 %2674
      %2678 = vset.pattern.permute.xlu0 0
      %2679 = vperm.xlu0 %2678, %v2633
      %v2680 = vpop.permute.xlu0 %2679
      %2683 = vset.pattern.permute.xlu0 0
      %2684 = vperm.xlu0 %2683, %v2634
      %v2685 = vpop.permute.xlu0 %2684
      %2688 = vset.pattern.permute.xlu0 0
      %2689 = vperm.xlu0 %2688, %v2635
      %v2690 = vpop.permute.xlu0 %2689
      %2693 = vset.pattern.permute.xlu0 0
      %2694 = vperm.xlu0 %2693, %v2636
      %v2695 = vpop.permute.xlu0 %2694
      %2698 = vset.pattern.permute.xlu0 0
      %2699 = vperm.xlu0 %2698, %v2637
      %v2700 = vpop.permute.xlu0 %2699
      %2703 = vset.pattern.permute.xlu0 0
      %2704 = vperm.xlu0 %2703, %v2638
      %v2705 = vpop.permute.xlu0 %2704
      %2708 = vset.pattern.permute.xlu0 0
      %2709 = vperm.xlu0 %2708, %v2639
      %v2710 = vpop.permute.xlu0 %2709
      %2713 = vset.pattern.permute.xlu0 0
      %2714 = vperm.xlu0 %2713, %v2640
      %v2715 = vpop.permute.xlu0 %2714
      %2718 = vset.pattern.permute.xlu0 0
      %2719 = vperm.xlu0 %2718, %v2641
      %v2720 = vpop.permute.xlu0 %2719
      %2723 = vset.pattern.permute.xlu0 0
      %2724 = vperm.xlu0 %2723, %v2642
      %v2725 = vpop.permute.xlu0 %2724
      %2728 = vset.pattern.permute.xlu0 0
      %2729 = vperm.xlu0 %2728, %v2643
      %v2730 = vpop.permute.xlu0 %2729
      %2733 = vset.pattern.permute.xlu0 0
      %2734 = vperm.xlu0 %2733, %v2644
      %v2735 = vpop.permute.xlu0 %2734
      %2738 = vset.pattern.permute.xlu0 0
      %2739 = vperm.xlu0 %2738, %v2645
      %v2740 = vpop.permute.xlu0 %2739
      %2743 = vset.pattern.permute.xlu0 0
      %2744 = vperm.xlu0 %2743, %v2646
      %v2745 = vpop.permute.xlu0 %2744
      %2748 = vset.pattern.permute.xlu0 0
      %2749 = vperm.xlu0 %2748, %v2647
      %v2750 = vpop.permute.xlu0 %2749
      %2753 = vset.pattern.permute.xlu0 0
      %2754 = vperm.xlu0 %2753, %v2648
      %v2755 = vpop.permute.xlu0 %2754
      %2758 = vset.pattern.permute.xlu0 0
      %2759 = vperm.xlu0 %2758, %v2649
      %v2760 = vpop.permute.xlu0 %2759
      %2763 = vset.pattern.permute.xlu0 0
      %2764 = vperm.xlu0 %2763, %v2650
      %v2765 = vpop.permute.xlu0 %2764
      %2768 = vset.pattern.permute.xlu0 0
      %2769 = vperm.xlu0 %2768, %v2651
      %v2770 = vpop.permute.xlu0 %2769
      %2773 = vset.pattern.permute.xlu0 0
      %2774 = vperm.xlu0 %2773, %v2652
      %v2775 = vpop.permute.xlu0 %2774
      %2778 = vset.pattern.permute.xlu0 0
      %2779 = vperm.xlu0 %2778, %v2653
      %v2780 = vpop.permute.xlu0 %2779
      %2783 = vset.pattern.permute.xlu0 0
      %2784 = vperm.xlu0 %2783, %v2654
      %v2785 = vpop.permute.xlu0 %2784
      %2788 = vset.pattern.permute.xlu0 0
      %2789 = vperm.xlu0 %2788, %v2655
      %v2790 = vpop.permute.xlu0 %2789
      %2793 = vset.pattern.permute.xlu0 0
      %2794 = vperm.xlu0 %2793, %v2656
      %v2795 = vpop.permute.xlu0 %2794
      %2798 = vset.pattern.permute.xlu0 0
      %2799 = vperm.xlu0 %2798, %v2657
      %v2800 = vpop.permute.xlu0 %2799
      %2803 = vset.pattern.permute.xlu0 0
      %2804 = vperm.xlu0 %2803, %v2658
      %v2805 = vpop.permute.xlu0 %2804
      %2808 = vset.pattern.permute.xlu0 0
      %2809 = vperm.xlu0 %2808, %v2659
      %v2810 = vpop.permute.xlu0 %2809
      %2813 = vset.pattern.permute.xlu0 0
      %2814 = vperm.xlu0 %2813, %v2660
      %v2815 = vpop.permute.xlu0 %2814
      %2818 = vset.pattern.permute.xlu0 0
      %2819 = vperm.xlu0 %2818, %v2661
      %v2820 = vpop.permute.xlu0 %2819
      %v2822 = vsub.f32 %v2470, %v2665
      %v2823 = vsub.f32 %v2471, %v2670
      %v2824 = vsub.f32 %v2472, %v2675
      %v2825 = vsub.f32 %v2473, %v2680
      %v2826 = vsub.f32 %v2474, %v2685
      %v2827 = vsub.f32 %v2475, %v2690
      %v2828 = vsub.f32 %v2476, %v2695
      %v2829 = vsub.f32 %v2477, %v2700
      %v2830 = vsub.f32 %v2478, %v2705
      %v2831 = vsub.f32 %v2479, %v2710
      %v2832 = vsub.f32 %v2480, %v2715
      %v2833 = vsub.f32 %v2481, %v2720
      %v2834 = vsub.f32 %v2482, %v2725
      %v2835 = vsub.f32 %v2483, %v2730
      %v2836 = vsub.f32 %v2484, %v2735
      %v2837 = vsub.f32 %v2485, %v2740
      %v2838 = vsub.f32 %v2486, %v2745
      %v2839 = vsub.f32 %v2487, %v2750
      %v2840 = vsub.f32 %v2488, %v2755
      %v2841 = vsub.f32 %v2489, %v2760
      %v2842 = vsub.f32 %v2490, %v2765
      %v2843 = vsub.f32 %v2491, %v2770
      %v2844 = vsub.f32 %v2492, %v2775
      %v2845 = vsub.f32 %v2493, %v2780
      %v2846 = vsub.f32 %v2494, %v2785
      %v2847 = vsub.f32 %v2495, %v2790
      %v2848 = vsub.f32 %v2496, %v2795
      %v2849 = vsub.f32 %v2497, %v2800
      %v2850 = vsub.f32 %v2498, %v2805
      %v2851 = vsub.f32 %v2499, %v2810
      %v2852 = vsub.f32 %v2500, %v2815
      %v2853 = vsub.f32 %v2501, %v2820
      %vm2854 = vcmask 261120
      %v2855 = vsel %vm2854, %v2822, -inf
      %v2856 = vrot.slane %v2855, 4
      %v2857 = vmax.f32 %v2855, %v2856
      %v2858 = vrot.slane %v2857, 2
      %v2859 = vmax.f32 %v2857, %v2858
      %v2860 = vrot.slane %v2859, 1
      %v2861 = vmax.f32 %v2859, %v2860
      %v2862 = vsel %vm2854, %v2823, -inf
      %v2863 = vrot.slane %v2862, 4
      %v2864 = vmax.f32 %v2862, %v2863
      %v2865 = vrot.slane %v2864, 2
      %v2866 = vmax.f32 %v2864, %v2865
      %v2867 = vrot.slane %v2866, 1
      %v2868 = vmax.f32 %v2866, %v2867
      %v2869 = vsel %vm2854, %v2824, -inf
      %v2870 = vrot.slane %v2869, 4
      %v2871 = vmax.f32 %v2869, %v2870
      %v2872 = vrot.slane %v2871, 2
      %v2873 = vmax.f32 %v2871, %v2872
      %v2874 = vrot.slane %v2873, 1
      %v2875 = vmax.f32 %v2873, %v2874
      %v2876 = vsel %vm2854, %v2825, -inf
      %v2877 = vrot.slane %v2876, 4
      %v2878 = vmax.f32 %v2876, %v2877
      %v2879 = vrot.slane %v2878, 2
      %v2880 = vmax.f32 %v2878, %v2879
      %v2881 = vrot.slane %v2880, 1
      %v2882 = vmax.f32 %v2880, %v2881
      %v2883 = vsel %vm2854, %v2826, -inf
      %v2884 = vrot.slane %v2883, 4
      %v2885 = vmax.f32 %v2883, %v2884
      %v2886 = vrot.slane %v2885, 2
      %v2887 = vmax.f32 %v2885, %v2886
      %v2888 = vrot.slane %v2887, 1
      %v2889 = vmax.f32 %v2887, %v2888
      %v2890 = vsel %vm2854, %v2827, -inf
      %v2891 = vrot.slane %v2890, 4
      %v2892 = vmax.f32 %v2890, %v2891
      %v2893 = vrot.slane %v2892, 2
      %v2894 = vmax.f32 %v2892, %v2893
      %v2895 = vrot.slane %v2894, 1
      %v2896 = vmax.f32 %v2894, %v2895
      %v2897 = vsel %vm2854, %v2828, -inf
      %v2898 = vrot.slane %v2897, 4
      %v2899 = vmax.f32 %v2897, %v2898
      %v2900 = vrot.slane %v2899, 2
      %v2901 = vmax.f32 %v2899, %v2900
      %v2902 = vrot.slane %v2901, 1
      %v2903 = vmax.f32 %v2901, %v2902
      %v2904 = vsel %vm2854, %v2829, -inf
      %v2905 = vrot.slane %v2904, 4
      %v2906 = vmax.f32 %v2904, %v2905
      %v2907 = vrot.slane %v2906, 2
      %v2908 = vmax.f32 %v2906, %v2907
      %v2909 = vrot.slane %v2908, 1
      %v2910 = vmax.f32 %v2908, %v2909
      %v2911 = vsel %vm2854, %v2830, -inf
      %v2912 = vrot.slane %v2911, 4
      %v2913 = vmax.f32 %v2911, %v2912
      %v2914 = vrot.slane %v2913, 2
      %v2915 = vmax.f32 %v2913, %v2914
      %v2916 = vrot.slane %v2915, 1
      %v2917 = vmax.f32 %v2915, %v2916
      %v2918 = vsel %vm2854, %v2831, -inf
      %v2919 = vrot.slane %v2918, 4
      %v2920 = vmax.f32 %v2918, %v2919
      %v2921 = vrot.slane %v2920, 2
      %v2922 = vmax.f32 %v2920, %v2921
      %v2923 = vrot.slane %v2922, 1
      %v2924 = vmax.f32 %v2922, %v2923
      %v2925 = vsel %vm2854, %v2832, -inf
      %v2926 = vrot.slane %v2925, 4
      %v2927 = vmax.f32 %v2925, %v2926
      %v2928 = vrot.slane %v2927, 2
      %v2929 = vmax.f32 %v2927, %v2928
      %v2930 = vrot.slane %v2929, 1
      %v2931 = vmax.f32 %v2929, %v2930
      %v2932 = vsel %vm2854, %v2833, -inf
      %v2933 = vrot.slane %v2932, 4
      %v2934 = vmax.f32 %v2932, %v2933
      %v2935 = vrot.slane %v2934, 2
      %v2936 = vmax.f32 %v2934, %v2935
      %v2937 = vrot.slane %v2936, 1
      %v2938 = vmax.f32 %v2936, %v2937
      %v2939 = vsel %vm2854, %v2834, -inf
      %v2940 = vrot.slane %v2939, 4
      %v2941 = vmax.f32 %v2939, %v2940
      %v2942 = vrot.slane %v2941, 2
      %v2943 = vmax.f32 %v2941, %v2942
      %v2944 = vrot.slane %v2943, 1
      %v2945 = vmax.f32 %v2943, %v2944
      %v2946 = vsel %vm2854, %v2835, -inf
      %v2947 = vrot.slane %v2946, 4
      %v2948 = vmax.f32 %v2946, %v2947
      %v2949 = vrot.slane %v2948, 2
      %v2950 = vmax.f32 %v2948, %v2949
      %v2951 = vrot.slane %v2950, 1
      %v2952 = vmax.f32 %v2950, %v2951
      %v2953 = vsel %vm2854, %v2836, -inf
      %v2954 = vrot.slane %v2953, 4
      %v2955 = vmax.f32 %v2953, %v2954
      %v2956 = vrot.slane %v2955, 2
      %v2957 = vmax.f32 %v2955, %v2956
      %v2958 = vrot.slane %v2957, 1
      %v2959 = vmax.f32 %v2957, %v2958
      %v2960 = vsel %vm2854, %v2837, -inf
      %v2961 = vrot.slane %v2960, 4
      %v2962 = vmax.f32 %v2960, %v2961
      %v2963 = vrot.slane %v2962, 2
      %v2964 = vmax.f32 %v2962, %v2963
      %v2965 = vrot.slane %v2964, 1
      %v2966 = vmax.f32 %v2964, %v2965
      %v2967 = vsel %vm2854, %v2838, -inf
      %v2968 = vrot.slane %v2967, 4
      %v2969 = vmax.f32 %v2967, %v2968
      %v2970 = vrot.slane %v2969, 2
      %v2971 = vmax.f32 %v2969, %v2970
      %v2972 = vrot.slane %v2971, 1
      %v2973 = vmax.f32 %v2971, %v2972
      %v2974 = vsel %vm2854, %v2839, -inf
      %v2975 = vrot.slane %v2974, 4
      %v2976 = vmax.f32 %v2974, %v2975
      %v2977 = vrot.slane %v2976, 2
      %v2978 = vmax.f32 %v2976, %v2977
      %v2979 = vrot.slane %v2978, 1
      %v2980 = vmax.f32 %v2978, %v2979
      %v2981 = vsel %vm2854, %v2840, -inf
      %v2982 = vrot.slane %v2981, 4
      %v2983 = vmax.f32 %v2981, %v2982
      %v2984 = vrot.slane %v2983, 2
      %v2985 = vmax.f32 %v2983, %v2984
      %v2986 = vrot.slane %v2985, 1
      %v2987 = vmax.f32 %v2985, %v2986
      %v2988 = vsel %vm2854, %v2841, -inf
      %v2989 = vrot.slane %v2988, 4
      %v2990 = vmax.f32 %v2988, %v2989
      %v2991 = vrot.slane %v2990, 2
      %v2992 = vmax.f32 %v2990, %v2991
      %v2993 = vrot.slane %v2992, 1
      %v2994 = vmax.f32 %v2992, %v2993
      %v2995 = vsel %vm2854, %v2842, -inf
      %v2996 = vrot.slane %v2995, 4
      %v2997 = vmax.f32 %v2995, %v2996
      %v2998 = vrot.slane %v2997, 2
      %v2999 = vmax.f32 %v2997, %v2998
      %v3000 = vrot.slane %v2999, 1
      %v3001 = vmax.f32 %v2999, %v3000
      %v3002 = vsel %vm2854, %v2843, -inf
      %v3003 = vrot.slane %v3002, 4
      %v3004 = vmax.f32 %v3002, %v3003
      %v3005 = vrot.slane %v3004, 2
      %v3006 = vmax.f32 %v3004, %v3005
      %v3007 = vrot.slane %v3006, 1
      %v3008 = vmax.f32 %v3006, %v3007
      %v3009 = vsel %vm2854, %v2844, -inf
      %v3010 = vrot.slane %v3009, 4
      %v3011 = vmax.f32 %v3009, %v3010
      %v3012 = vrot.slane %v3011, 2
      %v3013 = vmax.f32 %v3011, %v3012
      %v3014 = vrot.slane %v3013, 1
      %v3015 = vmax.f32 %v3013, %v3014
      %v3016 = vsel %vm2854, %v2845, -inf
      %v3017 = vrot.slane %v3016, 4
      %v3018 = vmax.f32 %v3016, %v3017
      %v3019 = vrot.slane %v3018, 2
      %v3020 = vmax.f32 %v3018, %v3019
      %v3021 = vrot.slane %v3020, 1
      %v3022 = vmax.f32 %v3020, %v3021
      %v3023 = vsel %vm2854, %v2846, -inf
      %v3024 = vrot.slane %v3023, 4
      %v3025 = vmax.f32 %v3023, %v3024
      %v3026 = vrot.slane %v3025, 2
      %v3027 = vmax.f32 %v3025, %v3026
      %v3028 = vrot.slane %v3027, 1
      %v3029 = vmax.f32 %v3027, %v3028
      %v3030 = vsel %vm2854, %v2847, -inf
      %v3031 = vrot.slane %v3030, 4
      %v3032 = vmax.f32 %v3030, %v3031
      %v3033 = vrot.slane %v3032, 2
      %v3034 = vmax.f32 %v3032, %v3033
      %v3035 = vrot.slane %v3034, 1
      %v3036 = vmax.f32 %v3034, %v3035
      %v3037 = vsel %vm2854, %v2848, -inf
      %v3038 = vrot.slane %v3037, 4
      %v3039 = vmax.f32 %v3037, %v3038
      %v3040 = vrot.slane %v3039, 2
      %v3041 = vmax.f32 %v3039, %v3040
      %v3042 = vrot.slane %v3041, 1
      %v3043 = vmax.f32 %v3041, %v3042
      %v3044 = vsel %vm2854, %v2849, -inf
      %v3045 = vrot.slane %v3044, 4
      %v3046 = vmax.f32 %v3044, %v3045
      %v3047 = vrot.slane %v3046, 2
      %v3048 = vmax.f32 %v3046, %v3047
      %v3049 = vrot.slane %v3048, 1
      %v3050 = vmax.f32 %v3048, %v3049
      %v3051 = vsel %vm2854, %v2850, -inf
      %v3052 = vrot.slane %v3051, 4
      %v3053 = vmax.f32 %v3051, %v3052
      %v3054 = vrot.slane %v3053, 2
      %v3055 = vmax.f32 %v3053, %v3054
      %v3056 = vrot.slane %v3055, 1
      %v3057 = vmax.f32 %v3055, %v3056
      %v3058 = vsel %vm2854, %v2851, -inf
      %v3059 = vrot.slane %v3058, 4
      %v3060 = vmax.f32 %v3058, %v3059
      %v3061 = vrot.slane %v3060, 2
      %v3062 = vmax.f32 %v3060, %v3061
      %v3063 = vrot.slane %v3062, 1
      %v3064 = vmax.f32 %v3062, %v3063
      %v3065 = vsel %vm2854, %v2852, -inf
      %v3066 = vrot.slane %v3065, 4
      %v3067 = vmax.f32 %v3065, %v3066
      %v3068 = vrot.slane %v3067, 2
      %v3069 = vmax.f32 %v3067, %v3068
      %v3070 = vrot.slane %v3069, 1
      %v3071 = vmax.f32 %v3069, %v3070
      %v3072 = vsel %vm2854, %v2853, -inf
      %v3073 = vrot.slane %v3072, 4
      %v3074 = vmax.f32 %v3072, %v3073
      %v3075 = vrot.slane %v3074, 2
      %v3076 = vmax.f32 %v3074, %v3075
      %v3077 = vrot.slane %v3076, 1
      %v3078 = vmax.f32 %v3076, %v3077
      %v3079 = vsub.f32 %v2822, %v2861
      %v3080 = vsub.f32 %v2823, %v2868
      %v3081 = vsub.f32 %v2824, %v2875
      %v3082 = vsub.f32 %v2825, %v2882
      %v3083 = vsub.f32 %v2826, %v2889
      %v3084 = vsub.f32 %v2827, %v2896
      %v3085 = vsub.f32 %v2828, %v2903
      %v3086 = vsub.f32 %v2829, %v2910
      %v3087 = vsub.f32 %v2830, %v2917
      %v3088 = vsub.f32 %v2831, %v2924
      %v3089 = vsub.f32 %v2832, %v2931
      %v3090 = vsub.f32 %v2833, %v2938
      %v3091 = vsub.f32 %v2834, %v2945
      %v3092 = vsub.f32 %v2835, %v2952
      %v3093 = vsub.f32 %v2836, %v2959
      %v3094 = vsub.f32 %v2837, %v2966
      %v3095 = vsub.f32 %v2838, %v2973
      %v3096 = vsub.f32 %v2839, %v2980
      %v3097 = vsub.f32 %v2840, %v2987
      %v3098 = vsub.f32 %v2841, %v2994
      %v3099 = vsub.f32 %v2842, %v3001
      %v3100 = vsub.f32 %v2843, %v3008
      %v3101 = vsub.f32 %v2844, %v3015
      %v3102 = vsub.f32 %v2845, %v3022
      %v3103 = vsub.f32 %v2846, %v3029
      %v3104 = vsub.f32 %v2847, %v3036
      %v3105 = vsub.f32 %v2848, %v3043
      %v3106 = vsub.f32 %v2849, %v3050
      %v3107 = vsub.f32 %v2850, %v3057
      %v3108 = vsub.f32 %v2851, %v3064
      %v3109 = vsub.f32 %v2852, %v3071
      %v3110 = vsub.f32 %v2853, %v3078
      %v3111 = vmul.f32 %v3079, 1.442695
      %v3112 = vpow.pop %v3111
      %v3113 = vmul.f32 %v3080, 1.442695
      %v3114 = vpow.pop %v3113
      %v3115 = vmul.f32 %v3081, 1.442695
      %v3116 = vpow.pop %v3115
      %v3117 = vmul.f32 %v3082, 1.442695
      %v3118 = vpow.pop %v3117
      %v3119 = vmul.f32 %v3083, 1.442695
      %v3120 = vpow.pop %v3119
      %v3121 = vmul.f32 %v3084, 1.442695
      %v3122 = vpow.pop %v3121
      %v3123 = vmul.f32 %v3085, 1.442695
      %v3124 = vpow.pop %v3123
      %v3125 = vmul.f32 %v3086, 1.442695
      %v3126 = vpow.pop %v3125
      %v3127 = vmul.f32 %v3087, 1.442695
      %v3128 = vpow.pop %v3127
      %v3129 = vmul.f32 %v3088, 1.442695
      %v3130 = vpow.pop %v3129
      %v3131 = vmul.f32 %v3089, 1.442695
      %v3132 = vpow.pop %v3131
      %v3133 = vmul.f32 %v3090, 1.442695
      %v3134 = vpow.pop %v3133
      %v3135 = vmul.f32 %v3091, 1.442695
      %v3136 = vpow.pop %v3135
      %v3137 = vmul.f32 %v3092, 1.442695
      %v3138 = vpow.pop %v3137
      %v3139 = vmul.f32 %v3093, 1.442695
      %v3140 = vpow.pop %v3139
      %v3141 = vmul.f32 %v3094, 1.442695
      %v3142 = vpow.pop %v3141
      %v3143 = vmul.f32 %v3095, 1.442695
      %v3144 = vpow.pop %v3143
      %v3145 = vmul.f32 %v3096, 1.442695
      %v3146 = vpow.pop %v3145
      %v3147 = vmul.f32 %v3097, 1.442695
      %v3148 = vpow.pop %v3147
      %v3149 = vmul.f32 %v3098, 1.442695
      %v3150 = vpow.pop %v3149
      %v3151 = vmul.f32 %v3099, 1.442695
      %v3152 = vpow.pop %v3151
      %v3153 = vmul.f32 %v3100, 1.442695
      %v3154 = vpow.pop %v3153
      %v3155 = vmul.f32 %v3101, 1.442695
      %v3156 = vpow.pop %v3155
      %v3157 = vmul.f32 %v3102, 1.442695
      %v3158 = vpow.pop %v3157
      %v3159 = vmul.f32 %v3103, 1.442695
      %v3160 = vpow.pop %v3159
      %v3161 = vmul.f32 %v3104, 1.442695
      %v3162 = vpow.pop %v3161
      %v3163 = vmul.f32 %v3105, 1.442695
      %v3164 = vpow.pop %v3163
      %v3165 = vmul.f32 %v3106, 1.442695
      %v3166 = vpow.pop %v3165
      %v3167 = vmul.f32 %v3107, 1.442695
      %v3168 = vpow.pop %v3167
      %v3169 = vmul.f32 %v3108, 1.442695
      %v3170 = vpow.pop %v3169
      %v3171 = vmul.f32 %v3109, 1.442695
      %v3172 = vpow.pop %v3171
      %v3173 = vmul.f32 %v3110, 1.442695
      %v3174 = vpow.pop %v3173
      %3207 = vrot.lane.b32.xlu0 %v2470, 96
      %v3208 = vpop.permute.xlu0 %3207
      %3209 = vrot.lane.b32.xlu0 %v2471, 96
      %v3210 = vpop.permute.xlu0 %3209
      %3211 = vrot.lane.b32.xlu0 %v2472, 96
      %v3212 = vpop.permute.xlu0 %3211
      %3213 = vrot.lane.b32.xlu0 %v2473, 96
      %v3214 = vpop.permute.xlu0 %3213
      %3215 = vrot.lane.b32.xlu0 %v2474, 96
      %v3216 = vpop.permute.xlu0 %3215
      %3217 = vrot.lane.b32.xlu0 %v2475, 96
      %v3218 = vpop.permute.xlu0 %3217
      %3219 = vrot.lane.b32.xlu0 %v2476, 96
      %v3220 = vpop.permute.xlu0 %3219
      %3221 = vrot.lane.b32.xlu0 %v2477, 96
      %v3222 = vpop.permute.xlu0 %3221
      %3223 = vrot.lane.b32.xlu0 %v2478, 96
      %v3224 = vpop.permute.xlu0 %3223
      %3225 = vrot.lane.b32.xlu0 %v2479, 96
      %v3226 = vpop.permute.xlu0 %3225
      %3227 = vrot.lane.b32.xlu0 %v2480, 96
      %v3228 = vpop.permute.xlu0 %3227
      %3229 = vrot.lane.b32.xlu0 %v2481, 96
      %v3230 = vpop.permute.xlu0 %3229
      %3231 = vrot.lane.b32.xlu0 %v2482, 96
      %v3232 = vpop.permute.xlu0 %3231
      %3233 = vrot.lane.b32.xlu0 %v2483, 96
      %v3234 = vpop.permute.xlu0 %3233
      %3235 = vrot.lane.b32.xlu0 %v2484, 96
      %v3236 = vpop.permute.xlu0 %3235
      %3237 = vrot.lane.b32.xlu0 %v2485, 96
      %v3238 = vpop.permute.xlu0 %3237
      %3239 = vrot.lane.b32.xlu0 %v2486, 96
      %v3240 = vpop.permute.xlu0 %3239
      %3241 = vrot.lane.b32.xlu0 %v2487, 96
      %v3242 = vpop.permute.xlu0 %3241
      %3243 = vrot.lane.b32.xlu0 %v2488, 96
      %v3244 = vpop.permute.xlu0 %3243
      %3245 = vrot.lane.b32.xlu0 %v2489, 96
      %v3246 = vpop.permute.xlu0 %3245
      %3247 = vrot.lane.b32.xlu0 %v2490, 96
      %v3248 = vpop.permute.xlu0 %3247
      %3249 = vrot.lane.b32.xlu0 %v2491, 96
      %v3250 = vpop.permute.xlu0 %3249
      %3251 = vrot.lane.b32.xlu0 %v2492, 96
      %v3252 = vpop.permute.xlu0 %3251
      %3253 = vrot.lane.b32.xlu0 %v2493, 96
      %v3254 = vpop.permute.xlu0 %3253
      %3255 = vrot.lane.b32.xlu0 %v2494, 96
      %v3256 = vpop.permute.xlu0 %3255
      %3257 = vrot.lane.b32.xlu0 %v2495, 96
      %v3258 = vpop.permute.xlu0 %3257
      %3259 = vrot.lane.b32.xlu0 %v2496, 96
      %v3260 = vpop.permute.xlu0 %3259
      %3261 = vrot.lane.b32.xlu0 %v2497, 96
      %v3262 = vpop.permute.xlu0 %3261
      %3263 = vrot.lane.b32.xlu0 %v2498, 96
      %v3264 = vpop.permute.xlu0 %3263
      %3265 = vrot.lane.b32.xlu0 %v2499, 96
      %v3266 = vpop.permute.xlu0 %3265
      %3267 = vrot.lane.b32.xlu0 %v2500, 96
      %v3268 = vpop.permute.xlu0 %3267
      %3269 = vrot.lane.b32.xlu0 %v2501, 96
      %v3270 = vpop.permute.xlu0 %3269
      %v3303 = vmul.f32 %v3112, %v3208
      %v3304 = vmul.f32 %v3114, %v3210
      %v3305 = vmul.f32 %v3116, %v3212
      %v3306 = vmul.f32 %v3118, %v3214
      %v3307 = vmul.f32 %v3120, %v3216
      %v3308 = vmul.f32 %v3122, %v3218
      %v3309 = vmul.f32 %v3124, %v3220
      %v3310 = vmul.f32 %v3126, %v3222
      %v3311 = vmul.f32 %v3128, %v3224
      %v3312 = vmul.f32 %v3130, %v3226
      %v3313 = vmul.f32 %v3132, %v3228
      %v3314 = vmul.f32 %v3134, %v3230
      %v3315 = vmul.f32 %v3136, %v3232
      %v3316 = vmul.f32 %v3138, %v3234
      %v3317 = vmul.f32 %v3140, %v3236
      %v3318 = vmul.f32 %v3142, %v3238
      %v3319 = vmul.f32 %v3144, %v3240
      %v3320 = vmul.f32 %v3146, %v3242
      %v3321 = vmul.f32 %v3148, %v3244
      %v3322 = vmul.f32 %v3150, %v3246
      %v3323 = vmul.f32 %v3152, %v3248
      %v3324 = vmul.f32 %v3154, %v3250
      %v3325 = vmul.f32 %v3156, %v3252
      %v3326 = vmul.f32 %v3158, %v3254
      %v3327 = vmul.f32 %v3160, %v3256
      %v3328 = vmul.f32 %v3162, %v3258
      %v3329 = vmul.f32 %v3164, %v3260
      %v3330 = vmul.f32 %v3166, %v3262
      %v3331 = vmul.f32 %v3168, %v3264
      %v3332 = vmul.f32 %v3170, %v3266
      %v3333 = vmul.f32 %v3172, %v3268
      %v3334 = vmul.f32 %v3174, %v3270
      %v3335 = vsel %vm2854, %v3303, 0.0
      %v3336 = vrot.slane %v3335, 4
      %v3337 = vadd.f32 %v3335, %v3336
      %v3338 = vrot.slane %v3337, 2
      %v3339 = vadd.f32 %v3337, %v3338
      %v3340 = vrot.slane %v3339, 1
      %v3341 = vadd.f32 %v3339, %v3340
      %v3342 = vsel %vm2854, %v3304, 0.0
      %v3343 = vrot.slane %v3342, 4
      %v3344 = vadd.f32 %v3342, %v3343
      %v3345 = vrot.slane %v3344, 2
      %v3346 = vadd.f32 %v3344, %v3345
      %v3347 = vrot.slane %v3346, 1
      %v3348 = vadd.f32 %v3346, %v3347
      %v3349 = vsel %vm2854, %v3305, 0.0
      %v3350 = vrot.slane %v3349, 4
      %v3351 = vadd.f32 %v3349, %v3350
      %v3352 = vrot.slane %v3351, 2
      %v3353 = vadd.f32 %v3351, %v3352
      %v3354 = vrot.slane %v3353, 1
      %v3355 = vadd.f32 %v3353, %v3354
      %v3356 = vsel %vm2854, %v3306, 0.0
      %v3357 = vrot.slane %v3356, 4
      %v3358 = vadd.f32 %v3356, %v3357
      %v3359 = vrot.slane %v3358, 2
      %v3360 = vadd.f32 %v3358, %v3359
      %v3361 = vrot.slane %v3360, 1
      %v3362 = vadd.f32 %v3360, %v3361
      %v3363 = vsel %vm2854, %v3307, 0.0
      %v3364 = vrot.slane %v3363, 4
      %v3365 = vadd.f32 %v3363, %v3364
      %v3366 = vrot.slane %v3365, 2
      %v3367 = vadd.f32 %v3365, %v3366
      %v3368 = vrot.slane %v3367, 1
      %v3369 = vadd.f32 %v3367, %v3368
      %v3370 = vsel %vm2854, %v3308, 0.0
      %v3371 = vrot.slane %v3370, 4
      %v3372 = vadd.f32 %v3370, %v3371
      %v3373 = vrot.slane %v3372, 2
      %v3374 = vadd.f32 %v3372, %v3373
      %v3375 = vrot.slane %v3374, 1
      %v3376 = vadd.f32 %v3374, %v3375
      %v3377 = vsel %vm2854, %v3309, 0.0
      %v3378 = vrot.slane %v3377, 4
      %v3379 = vadd.f32 %v3377, %v3378
      %v3380 = vrot.slane %v3379, 2
      %v3381 = vadd.f32 %v3379, %v3380
      %v3382 = vrot.slane %v3381, 1
      %v3383 = vadd.f32 %v3381, %v3382
      %v3384 = vsel %vm2854, %v3310, 0.0
      %v3385 = vrot.slane %v3384, 4
      %v3386 = vadd.f32 %v3384, %v3385
      %v3387 = vrot.slane %v3386, 2
      %v3388 = vadd.f32 %v3386, %v3387
      %v3389 = vrot.slane %v3388, 1
      %v3390 = vadd.f32 %v3388, %v3389
      %v3391 = vsel %vm2854, %v3311, 0.0
      %v3392 = vrot.slane %v3391, 4
      %v3393 = vadd.f32 %v3391, %v3392
      %v3394 = vrot.slane %v3393, 2
      %v3395 = vadd.f32 %v3393, %v3394
      %v3396 = vrot.slane %v3395, 1
      %v3397 = vadd.f32 %v3395, %v3396
      %v3398 = vsel %vm2854, %v3312, 0.0
      %v3399 = vrot.slane %v3398, 4
      %v3400 = vadd.f32 %v3398, %v3399
      %v3401 = vrot.slane %v3400, 2
      %v3402 = vadd.f32 %v3400, %v3401
      %v3403 = vrot.slane %v3402, 1
      %v3404 = vadd.f32 %v3402, %v3403
      %v3405 = vsel %vm2854, %v3313, 0.0
      %v3406 = vrot.slane %v3405, 4
      %v3407 = vadd.f32 %v3405, %v3406
      %v3408 = vrot.slane %v3407, 2
      %v3409 = vadd.f32 %v3407, %v3408
      %v3410 = vrot.slane %v3409, 1
      %v3411 = vadd.f32 %v3409, %v3410
      %v3412 = vsel %vm2854, %v3314, 0.0
      %v3413 = vrot.slane %v3412, 4
      %v3414 = vadd.f32 %v3412, %v3413
      %v3415 = vrot.slane %v3414, 2
      %v3416 = vadd.f32 %v3414, %v3415
      %v3417 = vrot.slane %v3416, 1
      %v3418 = vadd.f32 %v3416, %v3417
      %v3419 = vsel %vm2854, %v3315, 0.0
      %v3420 = vrot.slane %v3419, 4
      %v3421 = vadd.f32 %v3419, %v3420
      %v3422 = vrot.slane %v3421, 2
      %v3423 = vadd.f32 %v3421, %v3422
      %v3424 = vrot.slane %v3423, 1
      %v3425 = vadd.f32 %v3423, %v3424
      %v3426 = vsel %vm2854, %v3316, 0.0
      %v3427 = vrot.slane %v3426, 4
      %v3428 = vadd.f32 %v3426, %v3427
      %v3429 = vrot.slane %v3428, 2
      %v3430 = vadd.f32 %v3428, %v3429
      %v3431 = vrot.slane %v3430, 1
      %v3432 = vadd.f32 %v3430, %v3431
      %v3433 = vsel %vm2854, %v3317, 0.0
      %v3434 = vrot.slane %v3433, 4
      %v3435 = vadd.f32 %v3433, %v3434
      %v3436 = vrot.slane %v3435, 2
      %v3437 = vadd.f32 %v3435, %v3436
      %v3438 = vrot.slane %v3437, 1
      %v3439 = vadd.f32 %v3437, %v3438
      %v3440 = vsel %vm2854, %v3318, 0.0
      %v3441 = vrot.slane %v3440, 4
      %v3442 = vadd.f32 %v3440, %v3441
      %v3443 = vrot.slane %v3442, 2
      %v3444 = vadd.f32 %v3442, %v3443
      %v3445 = vrot.slane %v3444, 1
      %v3446 = vadd.f32 %v3444, %v3445
      %v3447 = vsel %vm2854, %v3319, 0.0
      %v3448 = vrot.slane %v3447, 4
      %v3449 = vadd.f32 %v3447, %v3448
      %v3450 = vrot.slane %v3449, 2
      %v3451 = vadd.f32 %v3449, %v3450
      %v3452 = vrot.slane %v3451, 1
      %v3453 = vadd.f32 %v3451, %v3452
      %v3454 = vsel %vm2854, %v3320, 0.0
      %v3455 = vrot.slane %v3454, 4
      %v3456 = vadd.f32 %v3454, %v3455
      %v3457 = vrot.slane %v3456, 2
      %v3458 = vadd.f32 %v3456, %v3457
      %v3459 = vrot.slane %v3458, 1
      %v3460 = vadd.f32 %v3458, %v3459
      %v3461 = vsel %vm2854, %v3321, 0.0
      %v3462 = vrot.slane %v3461, 4
      %v3463 = vadd.f32 %v3461, %v3462
      %v3464 = vrot.slane %v3463, 2
      %v3465 = vadd.f32 %v3463, %v3464
      %v3466 = vrot.slane %v3465, 1
      %v3467 = vadd.f32 %v3465, %v3466
      %v3468 = vsel %vm2854, %v3322, 0.0
      %v3469 = vrot.slane %v3468, 4
      %v3470 = vadd.f32 %v3468, %v3469
      %v3471 = vrot.slane %v3470, 2
      %v3472 = vadd.f32 %v3470, %v3471
      %v3473 = vrot.slane %v3472, 1
      %v3474 = vadd.f32 %v3472, %v3473
      %v3475 = vsel %vm2854, %v3323, 0.0
      %v3476 = vrot.slane %v3475, 4
      %v3477 = vadd.f32 %v3475, %v3476
      %v3478 = vrot.slane %v3477, 2
      %v3479 = vadd.f32 %v3477, %v3478
      %v3480 = vrot.slane %v3479, 1
      %v3481 = vadd.f32 %v3479, %v3480
      %v3482 = vsel %vm2854, %v3324, 0.0
      %v3483 = vrot.slane %v3482, 4
      %v3484 = vadd.f32 %v3482, %v3483
      %v3485 = vrot.slane %v3484, 2
      %v3486 = vadd.f32 %v3484, %v3485
      %v3487 = vrot.slane %v3486, 1
      %v3488 = vadd.f32 %v3486, %v3487
      %v3489 = vsel %vm2854, %v3325, 0.0
      %v3490 = vrot.slane %v3489, 4
      %v3491 = vadd.f32 %v3489, %v3490
      %v3492 = vrot.slane %v3491, 2
      %v3493 = vadd.f32 %v3491, %v3492
      %v3494 = vrot.slane %v3493, 1
      %v3495 = vadd.f32 %v3493, %v3494
      %v3496 = vsel %vm2854, %v3326, 0.0
      %v3497 = vrot.slane %v3496, 4
      %v3498 = vadd.f32 %v3496, %v3497
      %v3499 = vrot.slane %v3498, 2
      %v3500 = vadd.f32 %v3498, %v3499
      %v3501 = vrot.slane %v3500, 1
      %v3502 = vadd.f32 %v3500, %v3501
      %v3503 = vsel %vm2854, %v3327, 0.0
      %v3504 = vrot.slane %v3503, 4
      %v3505 = vadd.f32 %v3503, %v3504
      %v3506 = vrot.slane %v3505, 2
      %v3507 = vadd.f32 %v3505, %v3506
      %v3508 = vrot.slane %v3507, 1
      %v3509 = vadd.f32 %v3507, %v3508
      %v3510 = vsel %vm2854, %v3328, 0.0
      %v3511 = vrot.slane %v3510, 4
      %v3512 = vadd.f32 %v3510, %v3511
      %v3513 = vrot.slane %v3512, 2
      %v3514 = vadd.f32 %v3512, %v3513
      %v3515 = vrot.slane %v3514, 1
      %v3516 = vadd.f32 %v3514, %v3515
      %v3517 = vsel %vm2854, %v3329, 0.0
      %v3518 = vrot.slane %v3517, 4
      %v3519 = vadd.f32 %v3517, %v3518
      %v3520 = vrot.slane %v3519, 2
      %v3521 = vadd.f32 %v3519, %v3520
      %v3522 = vrot.slane %v3521, 1
      %v3523 = vadd.f32 %v3521, %v3522
      %v3524 = vsel %vm2854, %v3330, 0.0
      %v3525 = vrot.slane %v3524, 4
      %v3526 = vadd.f32 %v3524, %v3525
      %v3527 = vrot.slane %v3526, 2
      %v3528 = vadd.f32 %v3526, %v3527
      %v3529 = vrot.slane %v3528, 1
      %v3530 = vadd.f32 %v3528, %v3529
      %v3531 = vsel %vm2854, %v3331, 0.0
      %v3532 = vrot.slane %v3531, 4
      %v3533 = vadd.f32 %v3531, %v3532
      %v3534 = vrot.slane %v3533, 2
      %v3535 = vadd.f32 %v3533, %v3534
      %v3536 = vrot.slane %v3535, 1
      %v3537 = vadd.f32 %v3535, %v3536
      %v3538 = vsel %vm2854, %v3332, 0.0
      %v3539 = vrot.slane %v3538, 4
      %v3540 = vadd.f32 %v3538, %v3539
      %v3541 = vrot.slane %v3540, 2
      %v3542 = vadd.f32 %v3540, %v3541
      %v3543 = vrot.slane %v3542, 1
      %v3544 = vadd.f32 %v3542, %v3543
      %v3545 = vsel %vm2854, %v3333, 0.0
      %v3546 = vrot.slane %v3545, 4
      %v3547 = vadd.f32 %v3545, %v3546
      %v3548 = vrot.slane %v3547, 2
      %v3549 = vadd.f32 %v3547, %v3548
      %v3550 = vrot.slane %v3549, 1
      %v3551 = vadd.f32 %v3549, %v3550
      %v3552 = vsel %vm2854, %v3334, 0.0
      %v3553 = vrot.slane %v3552, 4
      %v3554 = vadd.f32 %v3552, %v3553
      %v3555 = vrot.slane %v3554, 2
      %v3556 = vadd.f32 %v3554, %v3555
      %v3557 = vrot.slane %v3556, 1
      %v3558 = vadd.f32 %v3556, %v3557
      %v3559 = vsel %vm2854, %v3112, 0.0
      %v3560 = vrot.slane %v3559, 4
      %v3561 = vadd.f32 %v3559, %v3560
      %v3562 = vrot.slane %v3561, 2
      %v3563 = vadd.f32 %v3561, %v3562
      %v3564 = vrot.slane %v3563, 1
      %v3565 = vadd.f32 %v3563, %v3564
      %v3566 = vsel %vm2854, %v3114, 0.0
      %v3567 = vrot.slane %v3566, 4
      %v3568 = vadd.f32 %v3566, %v3567
      %v3569 = vrot.slane %v3568, 2
      %v3570 = vadd.f32 %v3568, %v3569
      %v3571 = vrot.slane %v3570, 1
      %v3572 = vadd.f32 %v3570, %v3571
      %v3573 = vsel %vm2854, %v3116, 0.0
      %v3574 = vrot.slane %v3573, 4
      %v3575 = vadd.f32 %v3573, %v3574
      %v3576 = vrot.slane %v3575, 2
      %v3577 = vadd.f32 %v3575, %v3576
      %v3578 = vrot.slane %v3577, 1
      %v3579 = vadd.f32 %v3577, %v3578
      %v3580 = vsel %vm2854, %v3118, 0.0
      %v3581 = vrot.slane %v3580, 4
      %v3582 = vadd.f32 %v3580, %v3581
      %v3583 = vrot.slane %v3582, 2
      %v3584 = vadd.f32 %v3582, %v3583
      %v3585 = vrot.slane %v3584, 1
      %v3586 = vadd.f32 %v3584, %v3585
      %v3587 = vsel %vm2854, %v3120, 0.0
      %v3588 = vrot.slane %v3587, 4
      %v3589 = vadd.f32 %v3587, %v3588
      %v3590 = vrot.slane %v3589, 2
      %v3591 = vadd.f32 %v3589, %v3590
      %v3592 = vrot.slane %v3591, 1
      %v3593 = vadd.f32 %v3591, %v3592
      %v3594 = vsel %vm2854, %v3122, 0.0
      %v3595 = vrot.slane %v3594, 4
      %v3596 = vadd.f32 %v3594, %v3595
      %v3597 = vrot.slane %v3596, 2
      %v3598 = vadd.f32 %v3596, %v3597
      %v3599 = vrot.slane %v3598, 1
      %v3600 = vadd.f32 %v3598, %v3599
      %v3601 = vsel %vm2854, %v3124, 0.0
      %v3602 = vrot.slane %v3601, 4
      %v3603 = vadd.f32 %v3601, %v3602
      %v3604 = vrot.slane %v3603, 2
      %v3605 = vadd.f32 %v3603, %v3604
      %v3606 = vrot.slane %v3605, 1
      %v3607 = vadd.f32 %v3605, %v3606
      %v3608 = vsel %vm2854, %v3126, 0.0
      %v3609 = vrot.slane %v3608, 4
      %v3610 = vadd.f32 %v3608, %v3609
      %v3611 = vrot.slane %v3610, 2
      %v3612 = vadd.f32 %v3610, %v3611
      %v3613 = vrot.slane %v3612, 1
      %v3614 = vadd.f32 %v3612, %v3613
      %v3615 = vsel %vm2854, %v3128, 0.0
      %v3616 = vrot.slane %v3615, 4
      %v3617 = vadd.f32 %v3615, %v3616
      %v3618 = vrot.slane %v3617, 2
      %v3619 = vadd.f32 %v3617, %v3618
      %v3620 = vrot.slane %v3619, 1
      %v3621 = vadd.f32 %v3619, %v3620
      %v3622 = vsel %vm2854, %v3130, 0.0
      %v3623 = vrot.slane %v3622, 4
      %v3624 = vadd.f32 %v3622, %v3623
      %v3625 = vrot.slane %v3624, 2
      %v3626 = vadd.f32 %v3624, %v3625
      %v3627 = vrot.slane %v3626, 1
      %v3628 = vadd.f32 %v3626, %v3627
      %v3629 = vsel %vm2854, %v3132, 0.0
      %v3630 = vrot.slane %v3629, 4
      %v3631 = vadd.f32 %v3629, %v3630
      %v3632 = vrot.slane %v3631, 2
      %v3633 = vadd.f32 %v3631, %v3632
      %v3634 = vrot.slane %v3633, 1
      %v3635 = vadd.f32 %v3633, %v3634
      %v3636 = vsel %vm2854, %v3134, 0.0
      %v3637 = vrot.slane %v3636, 4
      %v3638 = vadd.f32 %v3636, %v3637
      %v3639 = vrot.slane %v3638, 2
      %v3640 = vadd.f32 %v3638, %v3639
      %v3641 = vrot.slane %v3640, 1
      %v3642 = vadd.f32 %v3640, %v3641
      %v3643 = vsel %vm2854, %v3136, 0.0
      %v3644 = vrot.slane %v3643, 4
      %v3645 = vadd.f32 %v3643, %v3644
      %v3646 = vrot.slane %v3645, 2
      %v3647 = vadd.f32 %v3645, %v3646
      %v3648 = vrot.slane %v3647, 1
      %v3649 = vadd.f32 %v3647, %v3648
      %v3650 = vsel %vm2854, %v3138, 0.0
      %v3651 = vrot.slane %v3650, 4
      %v3652 = vadd.f32 %v3650, %v3651
      %v3653 = vrot.slane %v3652, 2
      %v3654 = vadd.f32 %v3652, %v3653
      %v3655 = vrot.slane %v3654, 1
      %v3656 = vadd.f32 %v3654, %v3655
      %v3657 = vsel %vm2854, %v3140, 0.0
      %v3658 = vrot.slane %v3657, 4
      %v3659 = vadd.f32 %v3657, %v3658
      %v3660 = vrot.slane %v3659, 2
      %v3661 = vadd.f32 %v3659, %v3660
      %v3662 = vrot.slane %v3661, 1
      %v3663 = vadd.f32 %v3661, %v3662
      %v3664 = vsel %vm2854, %v3142, 0.0
      %v3665 = vrot.slane %v3664, 4
      %v3666 = vadd.f32 %v3664, %v3665
      %v3667 = vrot.slane %v3666, 2
      %v3668 = vadd.f32 %v3666, %v3667
      %v3669 = vrot.slane %v3668, 1
      %v3670 = vadd.f32 %v3668, %v3669
      %v3671 = vsel %vm2854, %v3144, 0.0
      %v3672 = vrot.slane %v3671, 4
      %v3673 = vadd.f32 %v3671, %v3672
      %v3674 = vrot.slane %v3673, 2
      %v3675 = vadd.f32 %v3673, %v3674
      %v3676 = vrot.slane %v3675, 1
      %v3677 = vadd.f32 %v3675, %v3676
      %v3678 = vsel %vm2854, %v3146, 0.0
      %v3679 = vrot.slane %v3678, 4
      %v3680 = vadd.f32 %v3678, %v3679
      %v3681 = vrot.slane %v3680, 2
      %v3682 = vadd.f32 %v3680, %v3681
      %v3683 = vrot.slane %v3682, 1
      %v3684 = vadd.f32 %v3682, %v3683
      %v3685 = vsel %vm2854, %v3148, 0.0
      %v3686 = vrot.slane %v3685, 4
      %v3687 = vadd.f32 %v3685, %v3686
      %v3688 = vrot.slane %v3687, 2
      %v3689 = vadd.f32 %v3687, %v3688
      %v3690 = vrot.slane %v3689, 1
      %v3691 = vadd.f32 %v3689, %v3690
      %v3692 = vsel %vm2854, %v3150, 0.0
      %v3693 = vrot.slane %v3692, 4
      %v3694 = vadd.f32 %v3692, %v3693
      %v3695 = vrot.slane %v3694, 2
      %v3696 = vadd.f32 %v3694, %v3695
      %v3697 = vrot.slane %v3696, 1
      %v3698 = vadd.f32 %v3696, %v3697
      %v3699 = vsel %vm2854, %v3152, 0.0
      %v3700 = vrot.slane %v3699, 4
      %v3701 = vadd.f32 %v3699, %v3700
      %v3702 = vrot.slane %v3701, 2
      %v3703 = vadd.f32 %v3701, %v3702
      %v3704 = vrot.slane %v3703, 1
      %v3705 = vadd.f32 %v3703, %v3704
      %v3706 = vsel %vm2854, %v3154, 0.0
      %v3707 = vrot.slane %v3706, 4
      %v3708 = vadd.f32 %v3706, %v3707
      %v3709 = vrot.slane %v3708, 2
      %v3710 = vadd.f32 %v3708, %v3709
      %v3711 = vrot.slane %v3710, 1
      %v3712 = vadd.f32 %v3710, %v3711
      %v3713 = vsel %vm2854, %v3156, 0.0
      %v3714 = vrot.slane %v3713, 4
      %v3715 = vadd.f32 %v3713, %v3714
      %v3716 = vrot.slane %v3715, 2
      %v3717 = vadd.f32 %v3715, %v3716
      %v3718 = vrot.slane %v3717, 1
      %v3719 = vadd.f32 %v3717, %v3718
      %v3720 = vsel %vm2854, %v3158, 0.0
      %v3721 = vrot.slane %v3720, 4
      %v3722 = vadd.f32 %v3720, %v3721
      %v3723 = vrot.slane %v3722, 2
      %v3724 = vadd.f32 %v3722, %v3723
      %v3725 = vrot.slane %v3724, 1
      %v3726 = vadd.f32 %v3724, %v3725
      %v3727 = vsel %vm2854, %v3160, 0.0
      %v3728 = vrot.slane %v3727, 4
      %v3729 = vadd.f32 %v3727, %v3728
      %v3730 = vrot.slane %v3729, 2
      %v3731 = vadd.f32 %v3729, %v3730
      %v3732 = vrot.slane %v3731, 1
      %v3733 = vadd.f32 %v3731, %v3732
      %v3734 = vsel %vm2854, %v3162, 0.0
      %v3735 = vrot.slane %v3734, 4
      %v3736 = vadd.f32 %v3734, %v3735
      %v3737 = vrot.slane %v3736, 2
      %v3738 = vadd.f32 %v3736, %v3737
      %v3739 = vrot.slane %v3738, 1
      %v3740 = vadd.f32 %v3738, %v3739
      %v3741 = vsel %vm2854, %v3164, 0.0
      %v3742 = vrot.slane %v3741, 4
      %v3743 = vadd.f32 %v3741, %v3742
      %v3744 = vrot.slane %v3743, 2
      %v3745 = vadd.f32 %v3743, %v3744
      %v3746 = vrot.slane %v3745, 1
      %v3747 = vadd.f32 %v3745, %v3746
      %v3748 = vsel %vm2854, %v3166, 0.0
      %v3749 = vrot.slane %v3748, 4
      %v3750 = vadd.f32 %v3748, %v3749
      %v3751 = vrot.slane %v3750, 2
      %v3752 = vadd.f32 %v3750, %v3751
      %v3753 = vrot.slane %v3752, 1
      %v3754 = vadd.f32 %v3752, %v3753
      %v3755 = vsel %vm2854, %v3168, 0.0
      %v3756 = vrot.slane %v3755, 4
      %v3757 = vadd.f32 %v3755, %v3756
      %v3758 = vrot.slane %v3757, 2
      %v3759 = vadd.f32 %v3757, %v3758
      %v3760 = vrot.slane %v3759, 1
      %v3761 = vadd.f32 %v3759, %v3760
      %v3762 = vsel %vm2854, %v3170, 0.0
      %v3763 = vrot.slane %v3762, 4
      %v3764 = vadd.f32 %v3762, %v3763
      %v3765 = vrot.slane %v3764, 2
      %v3766 = vadd.f32 %v3764, %v3765
      %v3767 = vrot.slane %v3766, 1
      %v3768 = vadd.f32 %v3766, %v3767
      %v3769 = vsel %vm2854, %v3172, 0.0
      %v3770 = vrot.slane %v3769, 4
      %v3771 = vadd.f32 %v3769, %v3770
      %v3772 = vrot.slane %v3771, 2
      %v3773 = vadd.f32 %v3771, %v3772
      %v3774 = vrot.slane %v3773, 1
      %v3775 = vadd.f32 %v3773, %v3774
      %v3776 = vsel %vm2854, %v3174, 0.0
      %v3777 = vrot.slane %v3776, 4
      %v3778 = vadd.f32 %v3776, %v3777
      %v3779 = vrot.slane %v3778, 2
      %v3780 = vadd.f32 %v3778, %v3779
      %v3781 = vrot.slane %v3780, 1
      %v3782 = vadd.f32 %v3780, %v3781
      %v3783 = vrcp.pop %v3565
      %v3784 = vrcp.pop %v3572
      %v3785 = vrcp.pop %v3579
      %v3786 = vrcp.pop %v3586
      %v3787 = vrcp.pop %v3593
      %v3788 = vrcp.pop %v3600
      %v3789 = vrcp.pop %v3607
      %v3790 = vrcp.pop %v3614
      %v3791 = vrcp.pop %v3621
      %v3792 = vrcp.pop %v3628
      %v3793 = vrcp.pop %v3635
      %v3794 = vrcp.pop %v3642
      %v3795 = vrcp.pop %v3649
      %v3796 = vrcp.pop %v3656
      %v3797 = vrcp.pop %v3663
      %v3798 = vrcp.pop %v3670
      %v3799 = vrcp.pop %v3677
      %v3800 = vrcp.pop %v3684
      %v3801 = vrcp.pop %v3691
      %v3802 = vrcp.pop %v3698
      %v3803 = vrcp.pop %v3705
      %v3804 = vrcp.pop %v3712
      %v3805 = vrcp.pop %v3719
      %v3806 = vrcp.pop %v3726
      %v3807 = vrcp.pop %v3733
      %v3808 = vrcp.pop %v3740
      %v3809 = vrcp.pop %v3747
      %v3810 = vrcp.pop %v3754
      %v3811 = vrcp.pop %v3761
      %v3812 = vrcp.pop %v3768
      %v3813 = vrcp.pop %v3775
      %v3814 = vrcp.pop %v3782
      %v3815 = vmul.f32 %v3341, %v3783
      %v3816 = vmul.f32 %v3348, %v3784
      %v3817 = vmul.f32 %v3355, %v3785
      %v3818 = vmul.f32 %v3362, %v3786
      %v3819 = vmul.f32 %v3369, %v3787
      %v3820 = vmul.f32 %v3376, %v3788
      %v3821 = vmul.f32 %v3383, %v3789
      %v3822 = vmul.f32 %v3390, %v3790
      %v3823 = vmul.f32 %v3397, %v3791
      %v3824 = vmul.f32 %v3404, %v3792
      %v3825 = vmul.f32 %v3411, %v3793
      %v3826 = vmul.f32 %v3418, %v3794
      %v3827 = vmul.f32 %v3425, %v3795
      %v3828 = vmul.f32 %v3432, %v3796
      %v3829 = vmul.f32 %v3439, %v3797
      %v3830 = vmul.f32 %v3446, %v3798
      %v3831 = vmul.f32 %v3453, %v3799
      %v3832 = vmul.f32 %v3460, %v3800
      %v3833 = vmul.f32 %v3467, %v3801
      %v3834 = vmul.f32 %v3474, %v3802
      %v3835 = vmul.f32 %v3481, %v3803
      %v3836 = vmul.f32 %v3488, %v3804
      %v3837 = vmul.f32 %v3495, %v3805
      %v3838 = vmul.f32 %v3502, %v3806
      %v3839 = vmul.f32 %v3509, %v3807
      %v3840 = vmul.f32 %v3516, %v3808
      %v3841 = vmul.f32 %v3523, %v3809
      %v3842 = vmul.f32 %v3530, %v3810
      %v3843 = vmul.f32 %v3537, %v3811
      %v3844 = vmul.f32 %v3544, %v3812
      %v3845 = vmul.f32 %v3551, %v3813
      %v3846 = vmul.f32 %v3558, %v3814
      %vm3879 = vcmask 1041409
      %v3880 = vsel %vm3879, %v3816, %v3815
      %vm3881 = vcmask 1042434
      %v3882 = vsel %vm3881, %v3817, %v3880
      %vm3883 = vcmask 1043459
      %v3884 = vsel %vm3883, %v3818, %v3882
      %vm3885 = vcmask 1044484
      %v3886 = vsel %vm3885, %v3819, %v3884
      %vm3887 = vcmask 1045509
      %v3888 = vsel %vm3887, %v3820, %v3886
      %vm3889 = vcmask 1046534
      %v3890 = vsel %vm3889, %v3821, %v3888
      %vm3891 = vcmask 1047559
      %v3892 = vsel %vm3891, %v3822, %v3890
      %v3893 = vsel %vm3879, %v3824, %v3823
      %v3894 = vsel %vm3881, %v3825, %v3893
      %v3895 = vsel %vm3883, %v3826, %v3894
      %v3896 = vsel %vm3885, %v3827, %v3895
      %v3897 = vsel %vm3887, %v3828, %v3896
      %v3898 = vsel %vm3889, %v3829, %v3897
      %v3899 = vsel %vm3891, %v3830, %v3898
      %v3900 = vsel %vm3879, %v3832, %v3831
      %v3901 = vsel %vm3881, %v3833, %v3900
      %v3902 = vsel %vm3883, %v3834, %v3901
      %v3903 = vsel %vm3885, %v3835, %v3902
      %v3904 = vsel %vm3887, %v3836, %v3903
      %v3905 = vsel %vm3889, %v3837, %v3904
      %v3906 = vsel %vm3891, %v3838, %v3905
      %v3907 = vsel %vm3879, %v3840, %v3839
      %v3908 = vsel %vm3881, %v3841, %v3907
      %v3909 = vsel %vm3883, %v3842, %v3908
      %v3910 = vsel %vm3885, %v3843, %v3909
      %v3911 = vsel %vm3887, %v3844, %v3910
      %v3912 = vsel %vm3889, %v3845, %v3911
      %v3913 = vsel %vm3891, %v3846, %v3912
      %3918 = vst.msk [vmem:[%s405] sm:$0xff] %vm2854, %v3892
      %3919 = vst.msk [vmem:[%s405 + $0x8] sm:$0xff] %vm2854, %v3899
      %3920 = vst.msk [vmem:[%s405 + $0x10] sm:$0xff] %vm2854, %v3906
      %3921 = vst.msk [vmem:[%s405 + $0x18] sm:$0xff] %vm2854, %v3913
      %s3922 = smul.u32 4, %s21
      %p3923 = scmp.lt.s32.totalorder %s3922, 7
      %s3924 = scalar_select %p3923, %s3922, 7
      %s3925 = smul.addr %s3924, 8
      %s3926 = scalar_lea.vmem %s10, %s3925
      // Predicated region
      $region61: #{tpu_custom_call.1} parent=59 // pred_check
        %p3927 = pneg %p264
      $region62: #{tpu_custom_call.1} parent=59 // pred_check_branch
        %3929 = sbr.rel (%p3927) target = $region64
      $region63: #{tpu_custom_call.1} parent=59 // pred_region
        %s3930 = smul.u32 4, %s21
      $region64: #{tpu_custom_call.1} parent=59 // pred_fallthru
        _
    $region60: #{tpu_custom_call.1} parent=5 // pred_fallthru
      _
    %p3931 = scmp.le.s32.totalorder 2, %s16
    // Predicated region
    $region65: #{tpu_custom_call.1} parent=5 // pred_check
      %p3932 = pneg %p3931
    $region66: #{tpu_custom_call.1} parent=5 // pred_check_branch
      %3934 = sbr.rel (%p3932) target = $region68
    $region67: #{tpu_custom_call.1} parent=5 // pred_region
      %s3935 = ssub.s32 %s16, 2
      // Predicated region
      $region69: #{tpu_custom_call.1} parent=67 // pred_check
        %p3936 = pneg %p270
      $region70: #{tpu_custom_call.1} parent=67 // pred_check_branch
        %3938 = sbr.rel (%p3936) target = $region72
      $region71: #{tpu_custom_call.1} parent=67 // pred_region
        %s3939 = smul.u32 4, %s22
        %p3940 = scmp.lt.s32.totalorder %s3939, 7
        %s3941 = scalar_select %p3940, %s3939, 7
        %s3942 = smul.addr %s3941, 8
        %s3943 = scalar_lea.vmem %s10, %s3942
      $region72: #{tpu_custom_call.1} parent=67 // pred_fallthru
        _
    $region68: #{tpu_custom_call.1} parent=5 // pred_fallthru
      _
  $region6: #{tpu_custom_call.1} parent=0 // loop_footer
    %s20 = sadd.s32 1, %s16
  $region7: #{tpu_custom_call.1} parent=0 // loop_footer_branch
    %15 = sbr.rel target = $region3
  $region8: #{tpu_custom_call.1} parent=0 // loop_exit
    _

</llo_original>
